<compile_context>
chip_gen: v7x
topology: tpu7x:2x2x1
jax: 0.10.0
libtpu: 0.0.40
codegen_flags: <defaults>
</compile_context>

<pallas_src>
import jax
import jax.numpy as jnp
from jax.experimental import pallas as pl
from jax.experimental.pallas import tpu as pltpu


# ----------------------------------------------------------------------------
# Fused kernel: graph interaction + classifier head, one batch element / step
# ----------------------------------------------------------------------------
def interaction_head_kernel(o_ref, x_ref, ra_ref, rs_ref, rr_ref, rrt_ref,
                            wr1_ref, wr2_ref, wr3_ref, br_ref,
                            wo1_ref, wo2_ref, wo3_ref, bo_ref,
                            w1_ref, b1_ref, w2_ref, b2_ref,
                            out_ref):
    f32 = jnp.float32
    O = o_ref[0]                          # (D_S, N_o)
    X = x_ref[0]                          # (D_X, N_o)
    Ra = ra_ref[0]                        # (D_R, N_R)
    Rs = rs_ref[0].astype(f32)            # (N_o, N_R)  bf16 storage, exact 0/1
    Rr = rr_ref[0].astype(f32)            # (N_o, N_R)
    RrT = rrt_ref[0].astype(f32)          # (N_R, N_o)

    # m_of_G: M1 = O @ R_s, M2 = O @ R_r                       -> (D_S, N_R)
    M1 = jnp.dot(O, Rs, preferred_element_type=f32)
    M2 = jnp.dot(O, Rr, preferred_element_type=f32)

    # phi_r with the torch cat folded into split weights; lane-dense E^T.
    E_T = (jnp.dot(wr1_ref[...], M1, preferred_element_type=f32)
           + jnp.dot(wr2_ref[...], M2, preferred_element_type=f32)
           + jnp.dot(wr3_ref[...], Ra, preferred_element_type=f32)
           + br_ref[...])                 # (D_E, N_R)
    E_T = jnp.maximum(E_T, 0.0)

    # get_e_hat: E_hat = E^T @ R_r^T                           -> (D_E, N_o)
    Ehat = jnp.dot(E_T, RrT, preferred_element_type=f32)

    # phi_o with the torch cat folded into split weights; lane-dense P^T.
    P_T = (jnp.dot(wo1_ref[...], O, preferred_element_type=f32)
           + jnp.dot(wo2_ref[...], X, preferred_element_type=f32)
           + jnp.dot(wo3_ref[...], Ehat, preferred_element_type=f32)
           + bo_ref[...])                 # (D_P, N_o)
    P_T = jnp.maximum(P_T, 0.0)

    # fc1 on torch's P.flatten(1): W1 was pre-permuted to (D_P, N_o, H) so that
    # h[j] = b1[j] + sum_{d,n} P^T[d, n] * W1b[d, n, j].  Decomposed into D_P
    # lane-dense (1, N_o) @ (N_o, H) matmuls (static unroll; avoids an
    # in-kernel cross-lane flatten of P^T).
    h = b1_ref[...]                       # (1, H)
    for d in range(P_T.shape[0]):
        h = h + jnp.dot(P_T[d:d + 1, :], w1_ref[d], preferred_element_type=f32)
    h = jnp.maximum(h, 0.0)

    # fc2 -> log_softmax(dim=1)
    logits = jnp.dot(h, w2_ref[...], preferred_element_type=f32) + b2_ref[...]
    m = jnp.max(logits, axis=-1, keepdims=True)
    z = logits - m
    lse = jnp.log(jnp.sum(jnp.exp(z), axis=-1, keepdims=True))
    out_ref[0] = z - lse                  # (1, NUM_CLASSES)


# ----------------------------------------------------------------------------
# One-time parameter prep (hoisted out of the forward path)
# ----------------------------------------------------------------------------
def prepare_params(params, *, D_S, D_X):
    Wr, br = params["Wr"], params["br"]     # (D_E, 2*D_S + D_R), (D_E,)
    Wo, bo = params["Wo"], params["bo"]     # (D_P, D_S + D_X + D_E), (D_P,)
    W1, b1 = params["W1"], params["b1"]     # (H, N_o*D_P), (H,)
    W2, b2 = params["W2"], params["b2"]     # (NUM_CLASSES, H), (NUM_CLASSES,)
    D_E = Wr.shape[0]
    D_P = Wo.shape[0]
    H = W1.shape[0]
    N_o = W1.shape[1] // D_P
    num_classes = W2.shape[0]
    return {
        # phi_r / phi_o weights sliced directly in (out_feat, in_feat) layout.
        "wr1": Wr[:, :D_S], "wr2": Wr[:, D_S:2 * D_S], "wr3": Wr[:, 2 * D_S:],
        "br": br.reshape(D_E, 1),
        "wo1": Wo[:, :D_S], "wo2": Wo[:, D_S:D_S + D_X], "wo3": Wo[:, D_S + D_X:],
        "bo": bo.reshape(D_P, 1),
        # fc1 weight permuted once: W1b[d, n, j] = W1[j, n*D_P + d]
        "w1b": jnp.transpose(W1.reshape(H, N_o, D_P), (2, 1, 0)),
        "b1": b1.reshape(1, H),
        "w2t": W2.T,
        "b2": b2.reshape(1, num_classes),
    }


# ----------------------------------------------------------------------------
# Forward wrapper
# ----------------------------------------------------------------------------
@jax.jit
def interaction_network_forward(O, Rs, Rr, Ra, X, prepped):
    B, D_S, N_o = O.shape
    N_R = Rs.shape[-1]
    D_R = Ra.shape[1]
    D_X = X.shape[1]
    D_E = prepped["wr1"].shape[0]
    D_P = prepped["wo1"].shape[0]
    H = prepped["b1"].shape[-1]
    num_classes = prepped["b2"].shape[-1]

    # One-hot incidence matrices are exact in bf16 -> halve their DMA traffic.
    Rs_b = Rs.astype(jnp.bfloat16)
    Rr_b = Rr.astype(jnp.bfloat16)
    RrT_b = jnp.swapaxes(Rr, 1, 2).astype(jnp.bfloat16)   # (B, N_R, N_o)

    def batch_spec(shape):
        return pl.BlockSpec((1,) + shape, lambda b: (b, 0, 0))

    def const_spec(shape):
        zeros = (0,) * len(shape)
        return pl.BlockSpec(shape, lambda b, _z=zeros: _z)

    out = pl.pallas_call(
        interaction_head_kernel,
        out_shape=jax.ShapeDtypeStruct((B, 1, num_classes), jnp.float32),
        grid=(B,),
        in_specs=[
            batch_spec((D_S, N_o)),     # O
            batch_spec((D_X, N_o)),     # X
            batch_spec((D_R, N_R)),     # Ra
            batch_spec((N_o, N_R)),     # Rs (bf16)
            batch_spec((N_o, N_R)),     # Rr (bf16)
            batch_spec((N_R, N_o)),     # Rr^T (bf16)
            const_spec((D_E, D_S)), const_spec((D_E, D_S)),
            const_spec((D_E, D_R)), const_spec((D_E, 1)),
            const_spec((D_P, D_S)), const_spec((D_P, D_X)),
            const_spec((D_P, D_E)), const_spec((D_P, 1)),
            const_spec((D_P, N_o, H)), const_spec((1, H)),
            const_spec((H, num_classes)), const_spec((1, num_classes)),
        ],
        out_specs=pl.BlockSpec((1, 1, num_classes), lambda b: (b, 0, 0)),
        compiler_params=pltpu.CompilerParams(
            dimension_semantics=("parallel",)),
    )(O, X, Ra, Rs_b, Rr_b, RrT_b,
      prepped["wr1"], prepped["wr2"], prepped["wr3"], prepped["br"],
      prepped["wo1"], prepped["wo2"], prepped["wo3"], prepped["bo"],
      prepped["w1b"], prepped["b1"], prepped["w2t"], prepped["b2"])
    return out.reshape(B, num_classes)


# ----------------------------------------------------------------------------
# Pure-JAX reference mirroring the torch forward (for correctness checking)
# ----------------------------------------------------------------------------
def reference_forward(O, Rs, Rr, Ra, X, params):
    M1 = jnp.einsum("bdn,bnr->bdr", O, Rs)
    M2 = jnp.einsum("bdn,bnr->bdr", O, Rr)
    Bm = jnp.transpose(jnp.concatenate([M1, M2, Ra], axis=1), (0, 2, 1))
    E = jax.nn.relu(Bm @ params["Wr"].T + params["br"])
    Ehat = jnp.einsum("bre,bnr->ben", E, Rr)          # (B, D_E, N_o)
    C = jnp.transpose(jnp.concatenate([O, X, Ehat], axis=1), (0, 2, 1))
    P = jax.nn.relu(C @ params["Wo"].T + params["bo"])
    Pf = P.reshape(P.shape[0], -1)
    h = jax.nn.relu(Pf @ params["W1"].T + params["b1"])
    s = h @ params["W2"].T + params["b2"]
    return jax.nn.log_softmax(s, axis=1)


# ----------------------------------------------------------------------------
if __name__ == "__main__":
    # Small config consistent with the module structure.
    B, D_S, D_R, D_E, D_X, D_P = 2, 8, 8, 16, 8, 16
    N_o, N_R, HID, NUM_CLASSES = 128, 128, 128, 10

    key = jax.random.PRNGKey(0)
    ks = jax.random.split(key, 14)

    # Synthetic graph tensors (see TODO(synk) above).
    O = jax.random.normal(ks[0], (B, D_S, N_o), jnp.float32)
    X = jax.random.normal(ks[1], (B, D_X, N_o), jnp.float32)
    Ra = jax.random.normal(ks[2], (B, D_R, N_R), jnp.float32)
    senders = jax.random.randint(ks[3], (B, N_R), 0, N_o)
    receivers = jax.random.randint(ks[4], (B, N_R), 0, N_o)
    Rs = jnp.transpose(jax.nn.one_hot(senders, N_o, dtype=jnp.float32), (0, 2, 1))
    Rr = jnp.transpose(jax.nn.one_hot(receivers, N_o, dtype=jnp.float32), (0, 2, 1))

    # Deterministic parameter init (shapes from the module __init__).
    params = {
        "Wr": 0.1 * jax.random.normal(ks[5], (D_E, 2 * D_S + D_R), jnp.float32),
        "br": 0.1 * jax.random.normal(ks[6], (D_E,), jnp.float32),
        "Wo": 0.1 * jax.random.normal(ks[7], (D_P, D_S + D_X + D_E), jnp.float32),
        "bo": 0.1 * jax.random.normal(ks[8], (D_P,), jnp.float32),
        "W1": 0.05 * jax.random.normal(ks[9], (HID, N_o * D_P), jnp.float32),
        "b1": 0.05 * jax.random.normal(ks[10], (HID,), jnp.float32),
        "W2": 0.1 * jax.random.normal(ks[11], (NUM_CLASSES, HID), jnp.float32),
        "b2": 0.1 * jax.random.normal(ks[12], (NUM_CLASSES,), jnp.float32),
    }

    prepped = prepare_params(params, D_S=D_S, D_X=D_X)   # one-time weight prep

    out = interaction_network_forward(O, Rs, Rr, Ra, X, prepped)
    out = jax.block_until_ready(out)

    ref = reference_forward(O, Rs, Rr, Ra, X, params)
    assert out.shape == (B, NUM_CLASSES)
    assert jnp.allclose(out, ref, rtol=2e-3, atol=2e-3), (
        f"max abs diff = {jnp.max(jnp.abs(out - ref))}")

    print("KERNEL_OK")
</pallas_src>

<mosaic_0001>
module attributes {stable_mosaic.version = 11 : i64} {
  func.func @interaction_head_kernel(%arg0: i32, %arg1: memref<1x8x128xf32, #tpu.memory_space<vmem>>, %arg2: memref<1x8x128xf32, #tpu.memory_space<vmem>>, %arg3: memref<1x8x128xf32, #tpu.memory_space<vmem>>, %arg4: memref<1x128x128xbf16, #tpu.memory_space<vmem>>, %arg5: memref<1x128x128xbf16, #tpu.memory_space<vmem>>, %arg6: memref<1x128x128xbf16, #tpu.memory_space<vmem>>, %arg7: memref<16x8xf32, #tpu.memory_space<vmem>>, %arg8: memref<16x8xf32, #tpu.memory_space<vmem>>, %arg9: memref<16x8xf32, #tpu.memory_space<vmem>>, %arg10: memref<16x1xf32, #tpu.memory_space<vmem>>, %arg11: memref<16x8xf32, #tpu.memory_space<vmem>>, %arg12: memref<16x8xf32, #tpu.memory_space<vmem>>, %arg13: memref<16x16xf32, #tpu.memory_space<vmem>>, %arg14: memref<16x1xf32, #tpu.memory_space<vmem>>, %arg15: memref<16x128x128xf32, #tpu.memory_space<vmem>>, %arg16: memref<1x128xf32, #tpu.memory_space<vmem>>, %arg17: memref<128x10xf32, #tpu.memory_space<vmem>>, %arg18: memref<1x10xf32, #tpu.memory_space<vmem>>, %arg19: memref<1x1x10xf32, #tpu.memory_space<vmem>>) attributes {dimension_semantics = [#tpu.dimension_semantics<parallel>], iteration_bounds = array<i64: 2>, scalar_prefetch = 0 : i64, scratch_operands = 0 : i64, tpu.core_type = #tpu.core_type<tc>, window_params = [{transform_indices = @transform_0, window_bounds = array<i64: 1, 8, 128>}, {transform_indices = @transform_1, window_bounds = array<i64: 1, 8, 128>}, {transform_indices = @transform_2, window_bounds = array<i64: 1, 8, 128>}, {transform_indices = @transform_3, window_bounds = array<i64: 1, 128, 128>}, {transform_indices = @transform_4, window_bounds = array<i64: 1, 128, 128>}, {transform_indices = @transform_5, window_bounds = array<i64: 1, 128, 128>}, {pipeline_mode = #tpu.pipeline_mode<synchronous>, transform_indices = @transform_6, window_bounds = array<i64: 16, 8>}, {pipeline_mode = #tpu.pipeline_mode<synchronous>, transform_indices = @transform_7, window_bounds = array<i64: 16, 8>}, {pipeline_mode = #tpu.pipeline_mode<synchronous>, transform_indices = @transform_8, window_bounds = array<i64: 16, 8>}, {pipeline_mode = #tpu.pipeline_mode<synchronous>, transform_indices = @transform_9, window_bounds = array<i64: 16, 1>}, {pipeline_mode = #tpu.pipeline_mode<synchronous>, transform_indices = @transform_10, window_bounds = array<i64: 16, 8>}, {pipeline_mode = #tpu.pipeline_mode<synchronous>, transform_indices = @transform_11, window_bounds = array<i64: 16, 8>}, {pipeline_mode = #tpu.pipeline_mode<synchronous>, transform_indices = @transform_12, window_bounds = array<i64: 16, 16>}, {pipeline_mode = #tpu.pipeline_mode<synchronous>, transform_indices = @transform_13, window_bounds = array<i64: 16, 1>}, {pipeline_mode = #tpu.pipeline_mode<synchronous>, transform_indices = @transform_14, window_bounds = array<i64: 16, 128, 128>}, {pipeline_mode = #tpu.pipeline_mode<synchronous>, transform_indices = @transform_15, window_bounds = array<i64: 1, 128>}, {pipeline_mode = #tpu.pipeline_mode<synchronous>, transform_indices = @transform_16, window_bounds = array<i64: 128, 10>}, {pipeline_mode = #tpu.pipeline_mode<synchronous>, transform_indices = @transform_17, window_bounds = array<i64: 1, 10>}, {transform_indices = @transform_18, window_bounds = array<i64: 1, 1, 10>}]} {
    %c0 = arith.constant 0 : index
    %c0_0 = arith.constant 0 : index
    %c0_1 = arith.constant 0 : index
    %0 = vector.load %arg1[%c0, %c0_0, %c0_1] : memref<1x8x128xf32, #tpu.memory_space<vmem>>, vector<1x8x128xf32>
    %1 = vector.shape_cast %0 : vector<1x8x128xf32> to vector<8x128xf32>
    %c0_2 = arith.constant 0 : index
    %c0_3 = arith.constant 0 : index
    %c0_4 = arith.constant 0 : index
    %2 = vector.load %arg2[%c0_2, %c0_3, %c0_4] : memref<1x8x128xf32, #tpu.memory_space<vmem>>, vector<1x8x128xf32>
    %3 = vector.shape_cast %2 : vector<1x8x128xf32> to vector<8x128xf32>
    %c0_5 = arith.constant 0 : index
    %c0_6 = arith.constant 0 : index
    %c0_7 = arith.constant 0 : index
    %4 = vector.load %arg3[%c0_5, %c0_6, %c0_7] : memref<1x8x128xf32, #tpu.memory_space<vmem>>, vector<1x8x128xf32>
    %5 = vector.shape_cast %4 : vector<1x8x128xf32> to vector<8x128xf32>
    %c0_8 = arith.constant 0 : index
    %c0_9 = arith.constant 0 : index
    %c0_10 = arith.constant 0 : index
    %6 = vector.load %arg4[%c0_8, %c0_9, %c0_10] : memref<1x128x128xbf16, #tpu.memory_space<vmem>>, vector<1x128x128xbf16>
    %7 = vector.shape_cast %6 : vector<1x128x128xbf16> to vector<128x128xbf16>
    %8 = arith.extf %7 : vector<128x128xbf16> to vector<128x128xf32>
    %c0_11 = arith.constant 0 : index
    %c0_12 = arith.constant 0 : index
    %c0_13 = arith.constant 0 : index
    %9 = vector.load %arg5[%c0_11, %c0_12, %c0_13] : memref<1x128x128xbf16, #tpu.memory_space<vmem>>, vector<1x128x128xbf16>
    %10 = vector.shape_cast %9 : vector<1x128x128xbf16> to vector<128x128xbf16>
    %11 = arith.extf %10 : vector<128x128xbf16> to vector<128x128xf32>
    %c0_14 = arith.constant 0 : index
    %c0_15 = arith.constant 0 : index
    %c0_16 = arith.constant 0 : index
    %12 = vector.load %arg6[%c0_14, %c0_15, %c0_16] : memref<1x128x128xbf16, #tpu.memory_space<vmem>>, vector<1x128x128xbf16>
    %13 = vector.shape_cast %12 : vector<1x128x128xbf16> to vector<128x128xbf16>
    %14 = arith.extf %13 : vector<128x128xbf16> to vector<128x128xf32>
    %cst = arith.constant dense<0.000000e+00> : vector<8x128xf32>
    %15 = tpu.matmul %1, %8, %cst {dimension_numbers = #tpu.dot_dimension_numbers<[1], [0], [0], [1], [0, 0, 1, 1], [], []>} : vector<8x128xf32>, vector<128x128xf32>, vector<8x128xf32> -> vector<8x128xf32>
    %cst_17 = arith.constant dense<0.000000e+00> : vector<8x128xf32>
    %16 = tpu.matmul %1, %11, %cst_17 {dimension_numbers = #tpu.dot_dimension_numbers<[1], [0], [0], [1], [0, 0, 1, 1], [], []>} : vector<8x128xf32>, vector<128x128xf32>, vector<8x128xf32> -> vector<8x128xf32>
    %c0_18 = arith.constant 0 : index
    %c0_19 = arith.constant 0 : index
    %17 = vector.load %arg7[%c0_18, %c0_19] : memref<16x8xf32, #tpu.memory_space<vmem>>, vector<16x8xf32>
    %cst_20 = arith.constant dense<0.000000e+00> : vector<16x128xf32>
    %18 = tpu.matmul %17, %15, %cst_20 {dimension_numbers = #tpu.dot_dimension_numbers<[1], [0], [0], [1], [0, 0, 1, 1], [], []>} : vector<16x8xf32>, vector<8x128xf32>, vector<16x128xf32> -> vector<16x128xf32>
    %c0_21 = arith.constant 0 : index
    %c0_22 = arith.constant 0 : index
    %19 = vector.load %arg8[%c0_21, %c0_22] : memref<16x8xf32, #tpu.memory_space<vmem>>, vector<16x8xf32>
    %cst_23 = arith.constant dense<0.000000e+00> : vector<16x128xf32>
    %20 = tpu.matmul %19, %16, %cst_23 {dimension_numbers = #tpu.dot_dimension_numbers<[1], [0], [0], [1], [0, 0, 1, 1], [], []>} : vector<16x8xf32>, vector<8x128xf32>, vector<16x128xf32> -> vector<16x128xf32>
    %21 = arith.addf %18, %20 : vector<16x128xf32>
    %c0_24 = arith.constant 0 : index
    %c0_25 = arith.constant 0 : index
    %22 = vector.load %arg9[%c0_24, %c0_25] : memref<16x8xf32, #tpu.memory_space<vmem>>, vector<16x8xf32>
    %cst_26 = arith.constant dense<0.000000e+00> : vector<16x128xf32>
    %23 = tpu.matmul %22, %5, %cst_26 {dimension_numbers = #tpu.dot_dimension_numbers<[1], [0], [0], [1], [0, 0, 1, 1], [], []>} : vector<16x8xf32>, vector<8x128xf32>, vector<16x128xf32> -> vector<16x128xf32>
    %24 = arith.addf %21, %23 : vector<16x128xf32>
    %c0_27 = arith.constant 0 : index
    %c0_28 = arith.constant 0 : index
    %25 = vector.load %arg10[%c0_27, %c0_28] : memref<16x1xf32, #tpu.memory_space<vmem>>, vector<16x1xf32>
    %26 = vector.broadcast %25 : vector<16x1xf32> to vector<16x128xf32>
    %27 = arith.addf %24, %26 : vector<16x128xf32>
    %cst_29 = arith.constant 0.000000e+00 : f32
    %28 = vector.broadcast %cst_29 : f32 to vector<16x128xf32>
    %29 = arith.maximumf %27, %28 : vector<16x128xf32>
    %cst_30 = arith.constant dense<0.000000e+00> : vector<16x128xf32>
    %30 = tpu.matmul %29, %14, %cst_30 {dimension_numbers = #tpu.dot_dimension_numbers<[1], [0], [0], [1], [0, 0, 1, 1], [], []>} : vector<16x128xf32>, vector<128x128xf32>, vector<16x128xf32> -> vector<16x128xf32>
    %c0_31 = arith.constant 0 : index
    %c0_32 = arith.constant 0 : index
    %31 = vector.load %arg11[%c0_31, %c0_32] : memref<16x8xf32, #tpu.memory_space<vmem>>, vector<16x8xf32>
    %cst_33 = arith.constant dense<0.000000e+00> : vector<16x128xf32>
    %32 = tpu.matmul %31, %1, %cst_33 {dimension_numbers = #tpu.dot_dimension_numbers<[1], [0], [0], [1], [0, 0, 1, 1], [], []>} : vector<16x8xf32>, vector<8x128xf32>, vector<16x128xf32> -> vector<16x128xf32>
    %c0_34 = arith.constant 0 : index
    %c0_35 = arith.constant 0 : index
    %33 = vector.load %arg12[%c0_34, %c0_35] : memref<16x8xf32, #tpu.memory_space<vmem>>, vector<16x8xf32>
    %cst_36 = arith.constant dense<0.000000e+00> : vector<16x128xf32>
    %34 = tpu.matmul %33, %3, %cst_36 {dimension_numbers = #tpu.dot_dimension_numbers<[1], [0], [0], [1], [0, 0, 1, 1], [], []>} : vector<16x8xf32>, vector<8x128xf32>, vector<16x128xf32> -> vector<16x128xf32>
    %35 = arith.addf %32, %34 : vector<16x128xf32>
    %c0_37 = arith.constant 0 : index
    %c0_38 = arith.constant 0 : index
    %36 = vector.load %arg13[%c0_37, %c0_38] : memref<16x16xf32, #tpu.memory_space<vmem>>, vector<16x16xf32>
    %cst_39 = arith.constant dense<0.000000e+00> : vector<16x128xf32>
    %37 = tpu.matmul %36, %30, %cst_39 {dimension_numbers = #tpu.dot_dimension_numbers<[1], [0], [0], [1], [0, 0, 1, 1], [], []>} : vector<16x16xf32>, vector<16x128xf32>, vector<16x128xf32> -> vector<16x128xf32>
    %38 = arith.addf %35, %37 : vector<16x128xf32>
    %c0_40 = arith.constant 0 : index
    %c0_41 = arith.constant 0 : index
    %39 = vector.load %arg14[%c0_40, %c0_41] : memref<16x1xf32, #tpu.memory_space<vmem>>, vector<16x1xf32>
    %40 = vector.broadcast %39 : vector<16x1xf32> to vector<16x128xf32>
    %41 = arith.addf %38, %40 : vector<16x128xf32>
    %cst_42 = arith.constant 0.000000e+00 : f32
    %42 = vector.broadcast %cst_42 : f32 to vector<16x128xf32>
    %43 = arith.maximumf %41, %42 : vector<16x128xf32>
    %c0_43 = arith.constant 0 : index
    %c0_44 = arith.constant 0 : index
    %44 = vector.load %arg16[%c0_43, %c0_44] : memref<1x128xf32, #tpu.memory_space<vmem>>, vector<1x128xf32>
    %45 = vector.extract_strided_slice %43 {offsets = [0, 0], sizes = [1, 128], strides = [1, 1]} : vector<16x128xf32> to vector<1x128xf32>
    %c0_45 = arith.constant 0 : index
    %c0_46 = arith.constant 0 : index
    %c0_47 = arith.constant 0 : index
    %46 = vector.load %arg15[%c0_45, %c0_46, %c0_47] : memref<16x128x128xf32, #tpu.memory_space<vmem>>, vector<1x128x128xf32>
    %47 = vector.shape_cast %46 : vector<1x128x128xf32> to vector<128x128xf32>
    %cst_48 = arith.constant dense<0.000000e+00> : vector<1x128xf32>
    %48 = tpu.matmul %45, %47, %cst_48 {dimension_numbers = #tpu.dot_dimension_numbers<[1], [0], [0], [1], [0, 0, 1, 1], [], []>} : vector<1x128xf32>, vector<128x128xf32>, vector<1x128xf32> -> vector<1x128xf32>
    %49 = arith.addf %44, %48 : vector<1x128xf32>
    %50 = vector.extract_strided_slice %43 {offsets = [1, 0], sizes = [1, 128], strides = [1, 1]} : vector<16x128xf32> to vector<1x128xf32>
    %c1 = arith.constant 1 : index
    %c0_49 = arith.constant 0 : index
    %c0_50 = arith.constant 0 : index
    %51 = vector.load %arg15[%c1, %c0_49, %c0_50] : memref<16x128x128xf32, #tpu.memory_space<vmem>>, vector<1x128x128xf32>
    %52 = vector.shape_cast %51 : vector<1x128x128xf32> to vector<128x128xf32>
    %cst_51 = arith.constant dense<0.000000e+00> : vector<1x128xf32>
    %53 = tpu.matmul %50, %52, %cst_51 {dimension_numbers = #tpu.dot_dimension_numbers<[1], [0], [0], [1], [0, 0, 1, 1], [], []>} : vector<1x128xf32>, vector<128x128xf32>, vector<1x128xf32> -> vector<1x128xf32>
    %54 = arith.addf %49, %53 : vector<1x128xf32>
    %55 = vector.extract_strided_slice %43 {offsets = [2, 0], sizes = [1, 128], strides = [1, 1]} : vector<16x128xf32> to vector<1x128xf32>
    %c2 = arith.constant 2 : index
    %c0_52 = arith.constant 0 : index
    %c0_53 = arith.constant 0 : index
    %56 = vector.load %arg15[%c2, %c0_52, %c0_53] : memref<16x128x128xf32, #tpu.memory_space<vmem>>, vector<1x128x128xf32>
    %57 = vector.shape_cast %56 : vector<1x128x128xf32> to vector<128x128xf32>
    %cst_54 = arith.constant dense<0.000000e+00> : vector<1x128xf32>
    %58 = tpu.matmul %55, %57, %cst_54 {dimension_numbers = #tpu.dot_dimension_numbers<[1], [0], [0], [1], [0, 0, 1, 1], [], []>} : vector<1x128xf32>, vector<128x128xf32>, vector<1x128xf32> -> vector<1x128xf32>
    %59 = arith.addf %54, %58 : vector<1x128xf32>
    %60 = vector.extract_strided_slice %43 {offsets = [3, 0], sizes = [1, 128], strides = [1, 1]} : vector<16x128xf32> to vector<1x128xf32>
    %c3 = arith.constant 3 : index
    %c0_55 = arith.constant 0 : index
    %c0_56 = arith.constant 0 : index
    %61 = vector.load %arg15[%c3, %c0_55, %c0_56] : memref<16x128x128xf32, #tpu.memory_space<vmem>>, vector<1x128x128xf32>
    %62 = vector.shape_cast %61 : vector<1x128x128xf32> to vector<128x128xf32>
    %cst_57 = arith.constant dense<0.000000e+00> : vector<1x128xf32>
    %63 = tpu.matmul %60, %62, %cst_57 {dimension_numbers = #tpu.dot_dimension_numbers<[1], [0], [0], [1], [0, 0, 1, 1], [], []>} : vector<1x128xf32>, vector<128x128xf32>, vector<1x128xf32> -> vector<1x128xf32>
    %64 = arith.addf %59, %63 : vector<1x128xf32>
    %65 = vector.extract_strided_slice %43 {offsets = [4, 0], sizes = [1, 128], strides = [1, 1]} : vector<16x128xf32> to vector<1x128xf32>
    %c4 = arith.constant 4 : index
    %c0_58 = arith.constant 0 : index
    %c0_59 = arith.constant 0 : index
    %66 = vector.load %arg15[%c4, %c0_58, %c0_59] : memref<16x128x128xf32, #tpu.memory_space<vmem>>, vector<1x128x128xf32>
    %67 = vector.shape_cast %66 : vector<1x128x128xf32> to vector<128x128xf32>
    %cst_60 = arith.constant dense<0.000000e+00> : vector<1x128xf32>
    %68 = tpu.matmul %65, %67, %cst_60 {dimension_numbers = #tpu.dot_dimension_numbers<[1], [0], [0], [1], [0, 0, 1, 1], [], []>} : vector<1x128xf32>, vector<128x128xf32>, vector<1x128xf32> -> vector<1x128xf32>
    %69 = arith.addf %64, %68 : vector<1x128xf32>
    %70 = vector.extract_strided_slice %43 {offsets = [5, 0], sizes = [1, 128], strides = [1, 1]} : vector<16x128xf32> to vector<1x128xf32>
    %c5 = arith.constant 5 : index
    %c0_61 = arith.constant 0 : index
    %c0_62 = arith.constant 0 : index
    %71 = vector.load %arg15[%c5, %c0_61, %c0_62] : memref<16x128x128xf32, #tpu.memory_space<vmem>>, vector<1x128x128xf32>
    %72 = vector.shape_cast %71 : vector<1x128x128xf32> to vector<128x128xf32>
    %cst_63 = arith.constant dense<0.000000e+00> : vector<1x128xf32>
    %73 = tpu.matmul %70, %72, %cst_63 {dimension_numbers = #tpu.dot_dimension_numbers<[1], [0], [0], [1], [0, 0, 1, 1], [], []>} : vector<1x128xf32>, vector<128x128xf32>, vector<1x128xf32> -> vector<1x128xf32>
    %74 = arith.addf %69, %73 : vector<1x128xf32>
    %75 = vector.extract_strided_slice %43 {offsets = [6, 0], sizes = [1, 128], strides = [1, 1]} : vector<16x128xf32> to vector<1x128xf32>
    %c6 = arith.constant 6 : index
    %c0_64 = arith.constant 0 : index
    %c0_65 = arith.constant 0 : index
    %76 = vector.load %arg15[%c6, %c0_64, %c0_65] : memref<16x128x128xf32, #tpu.memory_space<vmem>>, vector<1x128x128xf32>
    %77 = vector.shape_cast %76 : vector<1x128x128xf32> to vector<128x128xf32>
    %cst_66 = arith.constant dense<0.000000e+00> : vector<1x128xf32>
    %78 = tpu.matmul %75, %77, %cst_66 {dimension_numbers = #tpu.dot_dimension_numbers<[1], [0], [0], [1], [0, 0, 1, 1], [], []>} : vector<1x128xf32>, vector<128x128xf32>, vector<1x128xf32> -> vector<1x128xf32>
    %79 = arith.addf %74, %78 : vector<1x128xf32>
    %80 = vector.extract_strided_slice %43 {offsets = [7, 0], sizes = [1, 128], strides = [1, 1]} : vector<16x128xf32> to vector<1x128xf32>
    %c7 = arith.constant 7 : index
    %c0_67 = arith.constant 0 : index
    %c0_68 = arith.constant 0 : index
    %81 = vector.load %arg15[%c7, %c0_67, %c0_68] : memref<16x128x128xf32, #tpu.memory_space<vmem>>, vector<1x128x128xf32>
    %82 = vector.shape_cast %81 : vector<1x128x128xf32> to vector<128x128xf32>
    %cst_69 = arith.constant dense<0.000000e+00> : vector<1x128xf32>
    %83 = tpu.matmul %80, %82, %cst_69 {dimension_numbers = #tpu.dot_dimension_numbers<[1], [0], [0], [1], [0, 0, 1, 1], [], []>} : vector<1x128xf32>, vector<128x128xf32>, vector<1x128xf32> -> vector<1x128xf32>
    %84 = arith.addf %79, %83 : vector<1x128xf32>
    %85 = vector.extract_strided_slice %43 {offsets = [8, 0], sizes = [1, 128], strides = [1, 1]} : vector<16x128xf32> to vector<1x128xf32>
    %c8 = arith.constant 8 : index
    %c0_70 = arith.constant 0 : index
    %c0_71 = arith.constant 0 : index
    %86 = vector.load %arg15[%c8, %c0_70, %c0_71] : memref<16x128x128xf32, #tpu.memory_space<vmem>>, vector<1x128x128xf32>
    %87 = vector.shape_cast %86 : vector<1x128x128xf32> to vector<128x128xf32>
    %cst_72 = arith.constant dense<0.000000e+00> : vector<1x128xf32>
    %88 = tpu.matmul %85, %87, %cst_72 {dimension_numbers = #tpu.dot_dimension_numbers<[1], [0], [0], [1], [0, 0, 1, 1], [], []>} : vector<1x128xf32>, vector<128x128xf32>, vector<1x128xf32> -> vector<1x128xf32>
    %89 = arith.addf %84, %88 : vector<1x128xf32>
    %90 = vector.extract_strided_slice %43 {offsets = [9, 0], sizes = [1, 128], strides = [1, 1]} : vector<16x128xf32> to vector<1x128xf32>
    %c9 = arith.constant 9 : index
    %c0_73 = arith.constant 0 : index
    %c0_74 = arith.constant 0 : index
    %91 = vector.load %arg15[%c9, %c0_73, %c0_74] : memref<16x128x128xf32, #tpu.memory_space<vmem>>, vector<1x128x128xf32>
    %92 = vector.shape_cast %91 : vector<1x128x128xf32> to vector<128x128xf32>
    %cst_75 = arith.constant dense<0.000000e+00> : vector<1x128xf32>
    %93 = tpu.matmul %90, %92, %cst_75 {dimension_numbers = #tpu.dot_dimension_numbers<[1], [0], [0], [1], [0, 0, 1, 1], [], []>} : vector<1x128xf32>, vector<128x128xf32>, vector<1x128xf32> -> vector<1x128xf32>
    %94 = arith.addf %89, %93 : vector<1x128xf32>
    %95 = vector.extract_strided_slice %43 {offsets = [10, 0], sizes = [1, 128], strides = [1, 1]} : vector<16x128xf32> to vector<1x128xf32>
    %c10 = arith.constant 10 : index
    %c0_76 = arith.constant 0 : index
    %c0_77 = arith.constant 0 : index
    %96 = vector.load %arg15[%c10, %c0_76, %c0_77] : memref<16x128x128xf32, #tpu.memory_space<vmem>>, vector<1x128x128xf32>
    %97 = vector.shape_cast %96 : vector<1x128x128xf32> to vector<128x128xf32>
    %cst_78 = arith.constant dense<0.000000e+00> : vector<1x128xf32>
    %98 = tpu.matmul %95, %97, %cst_78 {dimension_numbers = #tpu.dot_dimension_numbers<[1], [0], [0], [1], [0, 0, 1, 1], [], []>} : vector<1x128xf32>, vector<128x128xf32>, vector<1x128xf32> -> vector<1x128xf32>
    %99 = arith.addf %94, %98 : vector<1x128xf32>
    %100 = vector.extract_strided_slice %43 {offsets = [11, 0], sizes = [1, 128], strides = [1, 1]} : vector<16x128xf32> to vector<1x128xf32>
    %c11 = arith.constant 11 : index
    %c0_79 = arith.constant 0 : index
    %c0_80 = arith.constant 0 : index
    %101 = vector.load %arg15[%c11, %c0_79, %c0_80] : memref<16x128x128xf32, #tpu.memory_space<vmem>>, vector<1x128x128xf32>
    %102 = vector.shape_cast %101 : vector<1x128x128xf32> to vector<128x128xf32>
    %cst_81 = arith.constant dense<0.000000e+00> : vector<1x128xf32>
    %103 = tpu.matmul %100, %102, %cst_81 {dimension_numbers = #tpu.dot_dimension_numbers<[1], [0], [0], [1], [0, 0, 1, 1], [], []>} : vector<1x128xf32>, vector<128x128xf32>, vector<1x128xf32> -> vector<1x128xf32>
    %104 = arith.addf %99, %103 : vector<1x128xf32>
    %105 = vector.extract_strided_slice %43 {offsets = [12, 0], sizes = [1, 128], strides = [1, 1]} : vector<16x128xf32> to vector<1x128xf32>
    %c12 = arith.constant 12 : index
    %c0_82 = arith.constant 0 : index
    %c0_83 = arith.constant 0 : index
    %106 = vector.load %arg15[%c12, %c0_82, %c0_83] : memref<16x128x128xf32, #tpu.memory_space<vmem>>, vector<1x128x128xf32>
    %107 = vector.shape_cast %106 : vector<1x128x128xf32> to vector<128x128xf32>
    %cst_84 = arith.constant dense<0.000000e+00> : vector<1x128xf32>
    %108 = tpu.matmul %105, %107, %cst_84 {dimension_numbers = #tpu.dot_dimension_numbers<[1], [0], [0], [1], [0, 0, 1, 1], [], []>} : vector<1x128xf32>, vector<128x128xf32>, vector<1x128xf32> -> vector<1x128xf32>
    %109 = arith.addf %104, %108 : vector<1x128xf32>
    %110 = vector.extract_strided_slice %43 {offsets = [13, 0], sizes = [1, 128], strides = [1, 1]} : vector<16x128xf32> to vector<1x128xf32>
    %c13 = arith.constant 13 : index
    %c0_85 = arith.constant 0 : index
    %c0_86 = arith.constant 0 : index
    %111 = vector.load %arg15[%c13, %c0_85, %c0_86] : memref<16x128x128xf32, #tpu.memory_space<vmem>>, vector<1x128x128xf32>
    %112 = vector.shape_cast %111 : vector<1x128x128xf32> to vector<128x128xf32>
    %cst_87 = arith.constant dense<0.000000e+00> : vector<1x128xf32>
    %113 = tpu.matmul %110, %112, %cst_87 {dimension_numbers = #tpu.dot_dimension_numbers<[1], [0], [0], [1], [0, 0, 1, 1], [], []>} : vector<1x128xf32>, vector<128x128xf32>, vector<1x128xf32> -> vector<1x128xf32>
    %114 = arith.addf %109, %113 : vector<1x128xf32>
    %115 = vector.extract_strided_slice %43 {offsets = [14, 0], sizes = [1, 128], strides = [1, 1]} : vector<16x128xf32> to vector<1x128xf32>
    %c14 = arith.constant 14 : index
    %c0_88 = arith.constant 0 : index
    %c0_89 = arith.constant 0 : index
    %116 = vector.load %arg15[%c14, %c0_88, %c0_89] : memref<16x128x128xf32, #tpu.memory_space<vmem>>, vector<1x128x128xf32>
    %117 = vector.shape_cast %116 : vector<1x128x128xf32> to vector<128x128xf32>
    %cst_90 = arith.constant dense<0.000000e+00> : vector<1x128xf32>
    %118 = tpu.matmul %115, %117, %cst_90 {dimension_numbers = #tpu.dot_dimension_numbers<[1], [0], [0], [1], [0, 0, 1, 1], [], []>} : vector<1x128xf32>, vector<128x128xf32>, vector<1x128xf32> -> vector<1x128xf32>
    %119 = arith.addf %114, %118 : vector<1x128xf32>
    %120 = vector.extract_strided_slice %43 {offsets = [15, 0], sizes = [1, 128], strides = [1, 1]} : vector<16x128xf32> to vector<1x128xf32>
    %c15 = arith.constant 15 : index
    %c0_91 = arith.constant 0 : index
    %c0_92 = arith.constant 0 : index
    %121 = vector.load %arg15[%c15, %c0_91, %c0_92] : memref<16x128x128xf32, #tpu.memory_space<vmem>>, vector<1x128x128xf32>
    %122 = vector.shape_cast %121 : vector<1x128x128xf32> to vector<128x128xf32>
    %cst_93 = arith.constant dense<0.000000e+00> : vector<1x128xf32>
    %123 = tpu.matmul %120, %122, %cst_93 {dimension_numbers = #tpu.dot_dimension_numbers<[1], [0], [0], [1], [0, 0, 1, 1], [], []>} : vector<1x128xf32>, vector<128x128xf32>, vector<1x128xf32> -> vector<1x128xf32>
    %124 = arith.addf %119, %123 : vector<1x128xf32>
    %cst_94 = arith.constant 0.000000e+00 : f32
    %125 = vector.broadcast %cst_94 : f32 to vector<1x128xf32>
    %126 = arith.maximumf %124, %125 : vector<1x128xf32>
    %c0_95 = arith.constant 0 : index
    %c0_96 = arith.constant 0 : index
    %127 = vector.load %arg17[%c0_95, %c0_96] : memref<128x10xf32, #tpu.memory_space<vmem>>, vector<128x10xf32>
    %cst_97 = arith.constant dense<0.000000e+00> : vector<1x10xf32>
    %128 = tpu.matmul %126, %127, %cst_97 {dimension_numbers = #tpu.dot_dimension_numbers<[1], [0], [0], [1], [0, 0, 1, 1], [], []>} : vector<1x128xf32>, vector<128x10xf32>, vector<1x10xf32> -> vector<1x10xf32>
    %c0_98 = arith.constant 0 : index
    %c0_99 = arith.constant 0 : index
    %129 = vector.load %arg18[%c0_98, %c0_99] : memref<1x10xf32, #tpu.memory_space<vmem>>, vector<1x10xf32>
    %130 = arith.addf %128, %129 : vector<1x10xf32>
    %cst_100 = arith.constant dense<0xFF800000> : vector<1xf32>
    %131 = vector.multi_reduction <maximumf>, %130, %cst_100 [1] : vector<1x10xf32> to vector<1xf32>
    %132 = vector.shape_cast %131 : vector<1xf32> to vector<1x1xf32>
    %133 = vector.broadcast %132 : vector<1x1xf32> to vector<1x10xf32>
    %134 = arith.subf %130, %133 : vector<1x10xf32>
    %135 = math.exp %134 : vector<1x10xf32>
    %cst_101 = arith.constant dense<0.000000e+00> : vector<1xf32>
    %136 = vector.multi_reduction <add>, %135, %cst_101 [1] : vector<1x10xf32> to vector<1xf32>
    %137 = vector.shape_cast %136 : vector<1xf32> to vector<1x1xf32>
    %138 = math.log %137 : vector<1x1xf32>
    %139 = vector.broadcast %138 : vector<1x1xf32> to vector<1x10xf32>
    %140 = arith.subf %134, %139 : vector<1x10xf32>
    %c0_102 = arith.constant 0 : index
    %c0_103 = arith.constant 0 : index
    %c0_104 = arith.constant 0 : index
    %141 = vector.load %arg19[%c0_102, %c0_103, %c0_104] : memref<1x1x10xf32, #tpu.memory_space<vmem>>, vector<1x1x10xf32>
    %142 = vector.shape_cast %141 : vector<1x1x10xf32> to vector<1x10xf32>
    %143 = vector.shape_cast %140 : vector<1x10xf32> to vector<1x1x10xf32>
    tpu.vector_store %arg19[%c0_102, %c0_103, %c0_104], %143 {strides = array<i32>} : memref<1x1x10xf32, #tpu.memory_space<vmem>>, vector<1x1x10xf32>,
    return
  }
  func.func @transform_0(%arg0: i32) -> (i32, i32, i32) {
    %c0_i32 = arith.constant 0 : i32
    %c0_i32_0 = arith.constant 0 : i32
    %c0_i32_1 = arith.constant 0 : i32
    return %arg0, %c0_i32, %c0_i32_0 : i32, i32, i32
  }
  func.func @transform_1(%arg0: i32) -> (i32, i32, i32) {
    %c0_i32 = arith.constant 0 : i32
    %c0_i32_0 = arith.constant 0 : i32
    %c0_i32_1 = arith.constant 0 : i32
    return %arg0, %c0_i32, %c0_i32_0 : i32, i32, i32
  }
  func.func @transform_2(%arg0: i32) -> (i32, i32, i32) {
    %c0_i32 = arith.constant 0 : i32
    %c0_i32_0 = arith.constant 0 : i32
    %c0_i32_1 = arith.constant 0 : i32
    return %arg0, %c0_i32, %c0_i32_0 : i32, i32, i32
  }
  func.func @transform_3(%arg0: i32) -> (i32, i32, i32) {
    %c0_i32 = arith.constant 0 : i32
    %c0_i32_0 = arith.constant 0 : i32
    %c0_i32_1 = arith.constant 0 : i32
    return %arg0, %c0_i32, %c0_i32_0 : i32, i32, i32
  }
  func.func @transform_4(%arg0: i32) -> (i32, i32, i32) {
    %c0_i32 = arith.constant 0 : i32
    %c0_i32_0 = arith.constant 0 : i32
    %c0_i32_1 = arith.constant 0 : i32
    return %arg0, %c0_i32, %c0_i32_0 : i32, i32, i32
  }
  func.func @transform_5(%arg0: i32) -> (i32, i32, i32) {
    %c0_i32 = arith.constant 0 : i32
    %c0_i32_0 = arith.constant 0 : i32
    %c0_i32_1 = arith.constant 0 : i32
    return %arg0, %c0_i32, %c0_i32_0 : i32, i32, i32
  }
  func.func @transform_6(%arg0: i32) -> (i32, i32) {
    %c0_i32 = arith.constant 0 : i32
    %c0_i32_0 = arith.constant 0 : i32
    %c0_i32_1 = arith.constant 0 : i32
    return %c0_i32, %c0_i32_0 : i32, i32
  }
  func.func @transform_7(%arg0: i32) -> (i32, i32) {
    %c0_i32 = arith.constant 0 : i32
    %c0_i32_0 = arith.constant 0 : i32
    %c0_i32_1 = arith.constant 0 : i32
    return %c0_i32, %c0_i32_0 : i32, i32
  }
  func.func @transform_8(%arg0: i32) -> (i32, i32) {
    %c0_i32 = arith.constant 0 : i32
    %c0_i32_0 = arith.constant 0 : i32
    %c0_i32_1 = arith.constant 0 : i32
    return %c0_i32, %c0_i32_0 : i32, i32
  }
  func.func @transform_9(%arg0: i32) -> (i32, i32) {
    %c0_i32 = arith.constant 0 : i32
    %c0_i32_0 = arith.constant 0 : i32
    %c0_i32_1 = arith.constant 0 : i32
    return %c0_i32, %c0_i32_0 : i32, i32
  }
  func.func @transform_10(%arg0: i32) -> (i32, i32) {
    %c0_i32 = arith.constant 0 : i32
    %c0_i32_0 = arith.constant 0 : i32
    %c0_i32_1 = arith.constant 0 : i32
    return %c0_i32, %c0_i32_0 : i32, i32
  }
  func.func @transform_11(%arg0: i32) -> (i32, i32) {
    %c0_i32 = arith.constant 0 : i32
    %c0_i32_0 = arith.constant 0 : i32
    %c0_i32_1 = arith.constant 0 : i32
    return %c0_i32, %c0_i32_0 : i32, i32
  }
  func.func @transform_12(%arg0: i32) -> (i32, i32) {
    %c0_i32 = arith.constant 0 : i32
    %c0_i32_0 = arith.constant 0 : i32
    %c0_i32_1 = arith.constant 0 : i32
    return %c0_i32, %c0_i32_0 : i32, i32
  }
  func.func @transform_13(%arg0: i32) -> (i32, i32) {
    %c0_i32 = arith.constant 0 : i32
    %c0_i32_0 = arith.constant 0 : i32
    %c0_i32_1 = arith.constant 0 : i32
    return %c0_i32, %c0_i32_0 : i32, i32
  }
  func.func @transform_14(%arg0: i32) -> (i32, i32, i32) {
    %c0_i32 = arith.constant 0 : i32
    %c0_i32_0 = arith.constant 0 : i32
    %c0_i32_1 = arith.constant 0 : i32
    %c0_i32_2 = arith.constant 0 : i32
    return %c0_i32, %c0_i32_0, %c0_i32_1 : i32, i32, i32
  }
  func.func @transform_15(%arg0: i32) -> (i32, i32) {
    %c0_i32 = arith.constant 0 : i32
    %c0_i32_0 = arith.constant 0 : i32
    %c0_i32_1 = arith.constant 0 : i32
    return %c0_i32, %c0_i32_0 : i32, i32
  }
  func.func @transform_16(%arg0: i32) -> (i32, i32) {
    %c0_i32 = arith.constant 0 : i32
    %c0_i32_0 = arith.constant 0 : i32
    %c0_i32_1 = arith.constant 0 : i32
    return %c0_i32, %c0_i32_0 : i32, i32
  }
  func.func @transform_17(%arg0: i32) -> (i32, i32) {
    %c0_i32 = arith.constant 0 : i32
    %c0_i32_0 = arith.constant 0 : i32
    %c0_i32_1 = arith.constant 0 : i32
    return %c0_i32, %c0_i32_0 : i32, i32
  }
  func.func @transform_18(%arg0: i32) -> (i32, i32, i32) {
    %c0_i32 = arith.constant 0 : i32
    %c0_i32_0 = arith.constant 0 : i32
    %c0_i32_1 = arith.constant 0 : i32
    return %arg0, %c0_i32, %c0_i32_0 : i32, i32, i32
  }
}

</mosaic_0001>

<llo_original>
// kernel: interaction_network_forward.1
$region0: #{interaction_network_forward.1}
  #allocation0 [shape = 'u32[]', space=smem, size = 0x4, offset = 0x4, fixed_abs, tag = 'smem constant byte address 0x4 - core index']
  #allocation1 [shape = 'u32[144,128]{1,0:T(1,128)}', space=vmem, size = 0x12000, scoped, tag = 'internal scratch']
  %s0 = inlined_call_operand.vmem [shape: f32[2,8,128], index: 0, kind: input, shape index: {}]
  %s1 = inlined_call_operand.vmem [shape: f32[2,8,128], index: 1, kind: input, shape index: {}]
  %s2 = inlined_call_operand.vmem [shape: f32[2,8,128], index: 2, kind: input, shape index: {}]
  %s3 = inlined_call_operand.vmem [shape: bf16[2,128,128], index: 3, kind: input, shape index: {}]
  %s4 = inlined_call_operand.vmem [shape: bf16[2,128,128], index: 4, kind: input, shape index: {}]
  %s5 = inlined_call_operand.vmem [shape: bf16[2,128,128], index: 5, kind: input, shape index: {}]
  %s6 = inlined_call_operand.vmem [shape: f32[16,8], index: 6, kind: input, shape index: {}]
  %s7 = inlined_call_operand.vmem [shape: f32[16,8], index: 7, kind: input, shape index: {}]
  %s8 = inlined_call_operand.vmem [shape: f32[16,8], index: 8, kind: input, shape index: {}]
  %s9 = inlined_call_operand.vmem [shape: f32[16,1], index: 9, kind: input, shape index: {}]
  %s10 = inlined_call_operand.vmem [shape: f32[16,8], index: 10, kind: input, shape index: {}]
  %s11 = inlined_call_operand.vmem [shape: f32[16,8], index: 11, kind: input, shape index: {}]
  %s12 = inlined_call_operand.vmem [shape: f32[16,16], index: 12, kind: input, shape index: {}]
  %s13 = inlined_call_operand.vmem [shape: f32[16,1], index: 13, kind: input, shape index: {}]
  %s14 = inlined_call_operand.hbm [shape: f32[16,128,128], index: 14, kind: input, shape index: {}]
  %s15 = inlined_call_operand.vmem [shape: f32[1,128], index: 15, kind: input, shape index: {}]
  %s16 = inlined_call_operand.vmem [shape: f32[128,10], index: 16, kind: input, shape index: {}]
  %s17 = inlined_call_operand.vmem [shape: f32[1,10], index: 17, kind: input, shape index: {}]
  %s18 = inlined_call_operand.hbm [shape: f32[2,1,10], index: 18, kind: output, shape index: {}]
  %s19 = sld [smem:[#allocation0]]
  $region109: #{interaction_network_forward.1} parent=0
    _
  %s21 = ssub.s32 1, %s19
  %s22 = scalar_select 0, %s21, %s19
  $region1: #{interaction_network_forward.1} parent=0
    #allocation2 [shape = 'u8[1048576]{0}', space=vmem, size = 0x100000, scoped, tag = 'input window, operand 14, single buffered']
    #allocation3 [shape = 's32[2]{0}', space=sflag, size = 0x8, scoped, tag = 'scoped memory for interaction_network_forward.1']
    #allocation4 [shape = 's32[2]{0}', space=sflag, size = 0x8, scoped, tag = 'scoped memory for interaction_network_forward.1']
    #allocation5 [shape = 'u8[1024]{0}', space=vmem, size = 0x400, scoped, tag = 'output window, operand 0']
    %23 = vsyncpa [#allocation3], 0
    %24 = vsyncpa [#allocation4], 0
    %s25 = scalar_lea.sflag [#allocation4], 1
    %26 = vsyncpa %s25, 0
    loop: start=0, step=1, limit=4
    $region2: #{interaction_network_forward.1} parent=1 // loop_pre_header
      _
    $region3: #{interaction_network_forward.1} parent=1 // loop_header
      %s28 = sphi 0, %s32
      %p29 = scmp.ge.s32.totalorder %s28, 4
      %s38 = sphi 0, %s40
      %s41 = sphi 0, %s38
      %s42 = sphi 0, %s41
      %s58 = sphi 0, %s42
      %s64 = sphi 0, %s66
      %s67 = sphi 0, %s64
      %s68 = sphi 0, %s67
      %s84 = sphi 0, %s68
      %s90 = sphi 0, %s92
      %s93 = sphi 0, %s90
      %s94 = sphi 0, %s93
      %s110 = sphi 0, %s94
      %s116 = sphi 0, %s118
      %s119 = sphi 0, %s116
      %s120 = sphi 0, %s119
      %s136 = sphi 0, %s120
      %s142 = sphi 0, %s144
      %s145 = sphi 0, %s142
      %s146 = sphi 0, %s145
      %s162 = sphi 0, %s146
      %s168 = sphi 0, %s170
      %s171 = sphi 0, %s168
      %s172 = sphi 0, %s171
      %s188 = sphi 0, %s172
      %s192 = sphi 0, %s192
      %s194 = sphi 0, %s192
      %s195 = sphi 0, %s194
      %s209 = sphi 0, %s195
      %s213 = sphi 0, %s213
      %s215 = sphi 0, %s213
      %s216 = sphi 0, %s215
      %s230 = sphi 0, %s216
      %s234 = sphi 0, %s234
      %s236 = sphi 0, %s234
      %s237 = sphi 0, %s236
      %s251 = sphi 0, %s237
      %s255 = sphi 0, %s255
      %s257 = sphi 0, %s255
      %s258 = sphi 0, %s257
      %s272 = sphi 0, %s258
      %s276 = sphi 0, %s276
      %s278 = sphi 0, %s276
      %s279 = sphi 0, %s278
      %s293 = sphi 0, %s279
      %s297 = sphi 0, %s297
      %s299 = sphi 0, %s297
      %s300 = sphi 0, %s299
      %s314 = sphi 0, %s300
      %s318 = sphi 0, %s318
      %s320 = sphi 0, %s318
      %s321 = sphi 0, %s320
      %s335 = sphi 0, %s321
      %s339 = sphi 0, %s339
      %s341 = sphi 0, %s339
      %s342 = sphi 0, %s341
      %s356 = sphi 0, %s342
      %s360 = sphi 0, %s360
      %s362 = sphi 0, %s360
      %s363 = sphi 0, %s362
      %s377 = sphi 0, %s363
      %s381 = sphi 0, %s381
      %s383 = sphi 0, %s381
      %s384 = sphi 0, %s383
      %s398 = sphi 0, %s384
      %s402 = sphi 0, %s402
      %s404 = sphi 0, %s402
      %s405 = sphi 0, %s404
      %s419 = sphi 0, %s405
      %s423 = sphi 0, %s423
      %s425 = sphi 0, %s423
      %s426 = sphi 0, %s425
      %s440 = sphi 0, %s426
      %s446 = sphi 0, %s448
      %s449 = sphi 0, %s446
      %s450 = sphi 0, %s449
      %s466 = sphi 0, %s450
    $region4: #{interaction_network_forward.1} parent=1 // loop_header_branch
      %31 = sbr.rel (%p29) target = $region8
    $region5: #{interaction_network_forward.1} parent=1 // loop_body
      %s33 = ssub.s32 %s28, 1
      %s34 = ssub.s32 %s28, 2
      %s35 = sadd.s32 %s28, 1
      %s36 = ssub.s32 %s28, %s35
      %p37 = scmp.eq.s32.totalorder %s36, 0
      %s39 = sadd.s32 %s38, 1
      %s40 = scalar_select %p37, %s38, %s39
      %p43 = pneg %p37
      %p44 = scmp.eq.s32.totalorder %s28, 1
      %p45 = por %p43, %p44
      %p46 = scmp.ne.s32.totalorder %s38, %s41
      %p47 = scmp.eq.s32.totalorder %s28, 0
      %p48 = por %p46, %p47
      %p49 = scmp.ne.s32.totalorder %s38, %s41
      %p50 = scmp.eq.s32.totalorder %s33, 1
      %p51 = por %p49, %p50
      %p52 = scmp.ne.s32.totalorder %s41, %s42
      %p53 = scmp.eq.s32.totalorder %s33, 0
      %p54 = por %p52, %p53
      %p55 = scmp.ne.s32.totalorder %s41, %s42
      %p56 = scmp.eq.s32.totalorder %s34, 1
      %p57 = por %p55, %p56
      %p59 = scmp.ne.s32.totalorder %s42, %s58
      %p60 = scmp.eq.s32.totalorder %s34, 0
      %p61 = por %p59, %p60
      %s62 = ssub.s32 %s28, %s35
      %p63 = scmp.eq.s32.totalorder %s62, 0
      %s65 = sadd.s32 %s64, 1
      %s66 = scalar_select %p63, %s64, %s65
      %p69 = pneg %p63
      %p70 = scmp.eq.s32.totalorder %s28, 1
      %p71 = por %p69, %p70
      %p72 = scmp.ne.s32.totalorder %s64, %s67
      %p73 = scmp.eq.s32.totalorder %s28, 0
      %p74 = por %p72, %p73
      %p75 = scmp.ne.s32.totalorder %s64, %s67
      %p76 = scmp.eq.s32.totalorder %s33, 1
      %p77 = por %p75, %p76
      %p78 = scmp.ne.s32.totalorder %s67, %s68
      %p79 = scmp.eq.s32.totalorder %s33, 0
      %p80 = por %p78, %p79
      %p81 = scmp.ne.s32.totalorder %s67, %s68
      %p82 = scmp.eq.s32.totalorder %s34, 1
      %p83 = por %p81, %p82
      %p85 = scmp.ne.s32.totalorder %s68, %s84
      %p86 = scmp.eq.s32.totalorder %s34, 0
      %p87 = por %p85, %p86
      %s88 = ssub.s32 %s28, %s35
      %p89 = scmp.eq.s32.totalorder %s88, 0
      %s91 = sadd.s32 %s90, 1
      %s92 = scalar_select %p89, %s90, %s91
      %p95 = pneg %p89
      %p96 = scmp.eq.s32.totalorder %s28, 1
      %p97 = por %p95, %p96
      %p98 = scmp.ne.s32.totalorder %s90, %s93
      %p99 = scmp.eq.s32.totalorder %s28, 0
      %p100 = por %p98, %p99
      %p101 = scmp.ne.s32.totalorder %s90, %s93
      %p102 = scmp.eq.s32.totalorder %s33, 1
      %p103 = por %p101, %p102
      %p104 = scmp.ne.s32.totalorder %s93, %s94
      %p105 = scmp.eq.s32.totalorder %s33, 0
      %p106 = por %p104, %p105
      %p107 = scmp.ne.s32.totalorder %s93, %s94
      %p108 = scmp.eq.s32.totalorder %s34, 1
      %p109 = por %p107, %p108
      %p111 = scmp.ne.s32.totalorder %s94, %s110
      %p112 = scmp.eq.s32.totalorder %s34, 0
      %p113 = por %p111, %p112
      %s114 = ssub.s32 %s28, %s35
      %p115 = scmp.eq.s32.totalorder %s114, 0
      %s117 = sadd.s32 %s116, 1
      %s118 = scalar_select %p115, %s116, %s117
      %p121 = pneg %p115
      %p122 = scmp.eq.s32.totalorder %s28, 1
      %p123 = por %p121, %p122
      %p124 = scmp.ne.s32.totalorder %s116, %s119
      %p125 = scmp.eq.s32.totalorder %s28, 0
      %p126 = por %p124, %p125
      %p127 = scmp.ne.s32.totalorder %s116, %s119
      %p128 = scmp.eq.s32.totalorder %s33, 1
      %p129 = por %p127, %p128
      %p130 = scmp.ne.s32.totalorder %s119, %s120
      %p131 = scmp.eq.s32.totalorder %s33, 0
      %p132 = por %p130, %p131
      %p133 = scmp.ne.s32.totalorder %s119, %s120
      %p134 = scmp.eq.s32.totalorder %s34, 1
      %p135 = por %p133, %p134
      %p137 = scmp.ne.s32.totalorder %s120, %s136
      %p138 = scmp.eq.s32.totalorder %s34, 0
      %p139 = por %p137, %p138
      %s140 = ssub.s32 %s28, %s35
      %p141 = scmp.eq.s32.totalorder %s140, 0
      %s143 = sadd.s32 %s142, 1
      %s144 = scalar_select %p141, %s142, %s143
      %p147 = pneg %p141
      %p148 = scmp.eq.s32.totalorder %s28, 1
      %p149 = por %p147, %p148
      %p150 = scmp.ne.s32.totalorder %s142, %s145
      %p151 = scmp.eq.s32.totalorder %s28, 0
      %p152 = por %p150, %p151
      %p153 = scmp.ne.s32.totalorder %s142, %s145
      %p154 = scmp.eq.s32.totalorder %s33, 1
      %p155 = por %p153, %p154
      %p156 = scmp.ne.s32.totalorder %s145, %s146
      %p157 = scmp.eq.s32.totalorder %s33, 0
      %p158 = por %p156, %p157
      %p159 = scmp.ne.s32.totalorder %s145, %s146
      %p160 = scmp.eq.s32.totalorder %s34, 1
      %p161 = por %p159, %p160
      %p163 = scmp.ne.s32.totalorder %s146, %s162
      %p164 = scmp.eq.s32.totalorder %s34, 0
      %p165 = por %p163, %p164
      %s166 = ssub.s32 %s28, %s35
      %p167 = scmp.eq.s32.totalorder %s166, 0
      %s169 = sadd.s32 %s168, 1
      %s170 = scalar_select %p167, %s168, %s169
      %p173 = pneg %p167
      %p174 = scmp.eq.s32.totalorder %s28, 1
      %p175 = por %p173, %p174
      %p176 = scmp.ne.s32.totalorder %s168, %s171
      %p177 = scmp.eq.s32.totalorder %s28, 0
      %p178 = por %p176, %p177
      %p179 = scmp.ne.s32.totalorder %s168, %s171
      %p180 = scmp.eq.s32.totalorder %s33, 1
      %p181 = por %p179, %p180
      %p182 = scmp.ne.s32.totalorder %s171, %s172
      %p183 = scmp.eq.s32.totalorder %s33, 0
      %p184 = por %p182, %p183
      %p185 = scmp.ne.s32.totalorder %s171, %s172
      %p186 = scmp.eq.s32.totalorder %s34, 1
      %p187 = por %p185, %p186
      %p189 = scmp.ne.s32.totalorder %s172, %s188
      %p190 = scmp.eq.s32.totalorder %s34, 0
      %p191 = por %p189, %p190
      %s193 = sadd.s32 %s192, 1
      %p196 = scmp.eq.s32.totalorder %s28, 1
      %p197 = scmp.ne.s32.totalorder %s192, %s194
      %p198 = scmp.eq.s32.totalorder %s28, 0
      %p199 = por %p197, %p198
      %p200 = scmp.ne.s32.totalorder %s192, %s194
      %p201 = scmp.eq.s32.totalorder %s33, 1
      %p202 = por %p200, %p201
      %p203 = scmp.ne.s32.totalorder %s194, %s195
      %p204 = scmp.eq.s32.totalorder %s33, 0
      %p205 = por %p203, %p204
      %p206 = scmp.ne.s32.totalorder %s194, %s195
      %p207 = scmp.eq.s32.totalorder %s34, 1
      %p208 = por %p206, %p207
      %p210 = scmp.ne.s32.totalorder %s195, %s209
      %p211 = scmp.eq.s32.totalorder %s34, 0
      %p212 = por %p210, %p211
      %s214 = sadd.s32 %s213, 1
      %p217 = scmp.eq.s32.totalorder %s28, 1
      %p218 = scmp.ne.s32.totalorder %s213, %s215
      %p219 = scmp.eq.s32.totalorder %s28, 0
      %p220 = por %p218, %p219
      %p221 = scmp.ne.s32.totalorder %s213, %s215
      %p222 = scmp.eq.s32.totalorder %s33, 1
      %p223 = por %p221, %p222
      %p224 = scmp.ne.s32.totalorder %s215, %s216
      %p225 = scmp.eq.s32.totalorder %s33, 0
      %p226 = por %p224, %p225
      %p227 = scmp.ne.s32.totalorder %s215, %s216
      %p228 = scmp.eq.s32.totalorder %s34, 1
      %p229 = por %p227, %p228
      %p231 = scmp.ne.s32.totalorder %s216, %s230
      %p232 = scmp.eq.s32.totalorder %s34, 0
      %p233 = por %p231, %p232
      %s235 = sadd.s32 %s234, 1
      %p238 = scmp.eq.s32.totalorder %s28, 1
      %p239 = scmp.ne.s32.totalorder %s234, %s236
      %p240 = scmp.eq.s32.totalorder %s28, 0
      %p241 = por %p239, %p240
      %p242 = scmp.ne.s32.totalorder %s234, %s236
      %p243 = scmp.eq.s32.totalorder %s33, 1
      %p244 = por %p242, %p243
      %p245 = scmp.ne.s32.totalorder %s236, %s237
      %p246 = scmp.eq.s32.totalorder %s33, 0
      %p247 = por %p245, %p246
      %p248 = scmp.ne.s32.totalorder %s236, %s237
      %p249 = scmp.eq.s32.totalorder %s34, 1
      %p250 = por %p248, %p249
      %p252 = scmp.ne.s32.totalorder %s237, %s251
      %p253 = scmp.eq.s32.totalorder %s34, 0
      %p254 = por %p252, %p253
      %s256 = sadd.s32 %s255, 1
      %p259 = scmp.eq.s32.totalorder %s28, 1
      %p260 = scmp.ne.s32.totalorder %s255, %s257
      %p261 = scmp.eq.s32.totalorder %s28, 0
      %p262 = por %p260, %p261
      %p263 = scmp.ne.s32.totalorder %s255, %s257
      %p264 = scmp.eq.s32.totalorder %s33, 1
      %p265 = por %p263, %p264
      %p266 = scmp.ne.s32.totalorder %s257, %s258
      %p267 = scmp.eq.s32.totalorder %s33, 0
      %p268 = por %p266, %p267
      %p269 = scmp.ne.s32.totalorder %s257, %s258
      %p270 = scmp.eq.s32.totalorder %s34, 1
      %p271 = por %p269, %p270
      %p273 = scmp.ne.s32.totalorder %s258, %s272
      %p274 = scmp.eq.s32.totalorder %s34, 0
      %p275 = por %p273, %p274
      %s277 = sadd.s32 %s276, 1
      %p280 = scmp.eq.s32.totalorder %s28, 1
      %p281 = scmp.ne.s32.totalorder %s276, %s278
      %p282 = scmp.eq.s32.totalorder %s28, 0
      %p283 = por %p281, %p282
      %p284 = scmp.ne.s32.totalorder %s276, %s278
      %p285 = scmp.eq.s32.totalorder %s33, 1
      %p286 = por %p284, %p285
      %p287 = scmp.ne.s32.totalorder %s278, %s279
      %p288 = scmp.eq.s32.totalorder %s33, 0
      %p289 = por %p287, %p288
      %p290 = scmp.ne.s32.totalorder %s278, %s279
      %p291 = scmp.eq.s32.totalorder %s34, 1
      %p292 = por %p290, %p291
      %p294 = scmp.ne.s32.totalorder %s279, %s293
      %p295 = scmp.eq.s32.totalorder %s34, 0
      %p296 = por %p294, %p295
      %s298 = sadd.s32 %s297, 1
      %p301 = scmp.eq.s32.totalorder %s28, 1
      %p302 = scmp.ne.s32.totalorder %s297, %s299
      %p303 = scmp.eq.s32.totalorder %s28, 0
      %p304 = por %p302, %p303
      %p305 = scmp.ne.s32.totalorder %s297, %s299
      %p306 = scmp.eq.s32.totalorder %s33, 1
      %p307 = por %p305, %p306
      %p308 = scmp.ne.s32.totalorder %s299, %s300
      %p309 = scmp.eq.s32.totalorder %s33, 0
      %p310 = por %p308, %p309
      %p311 = scmp.ne.s32.totalorder %s299, %s300
      %p312 = scmp.eq.s32.totalorder %s34, 1
      %p313 = por %p311, %p312
      %p315 = scmp.ne.s32.totalorder %s300, %s314
      %p316 = scmp.eq.s32.totalorder %s34, 0
      %p317 = por %p315, %p316
      %s319 = sadd.s32 %s318, 1
      %p322 = scmp.eq.s32.totalorder %s28, 1
      %p323 = scmp.ne.s32.totalorder %s318, %s320
      %p324 = scmp.eq.s32.totalorder %s28, 0
      %p325 = por %p323, %p324
      %p326 = scmp.ne.s32.totalorder %s318, %s320
      %p327 = scmp.eq.s32.totalorder %s33, 1
      %p328 = por %p326, %p327
      %p329 = scmp.ne.s32.totalorder %s320, %s321
      %p330 = scmp.eq.s32.totalorder %s33, 0
      %p331 = por %p329, %p330
      %p332 = scmp.ne.s32.totalorder %s320, %s321
      %p333 = scmp.eq.s32.totalorder %s34, 1
      %p334 = por %p332, %p333
      %p336 = scmp.ne.s32.totalorder %s321, %s335
      %p337 = scmp.eq.s32.totalorder %s34, 0
      %p338 = por %p336, %p337
      %s340 = sadd.s32 %s339, 1
      %p343 = scmp.eq.s32.totalorder %s28, 1
      %p344 = scmp.ne.s32.totalorder %s339, %s341
      %p345 = scmp.eq.s32.totalorder %s28, 0
      %p346 = por %p344, %p345
      %p347 = scmp.ne.s32.totalorder %s339, %s341
      %p348 = scmp.eq.s32.totalorder %s33, 1
      %p349 = por %p347, %p348
      %p350 = scmp.ne.s32.totalorder %s341, %s342
      %p351 = scmp.eq.s32.totalorder %s33, 0
      %p352 = por %p350, %p351
      %p353 = scmp.ne.s32.totalorder %s341, %s342
      %p354 = scmp.eq.s32.totalorder %s34, 1
      %p355 = por %p353, %p354
      %p357 = scmp.ne.s32.totalorder %s342, %s356
      %p358 = scmp.eq.s32.totalorder %s34, 0
      %p359 = por %p357, %p358
      %s361 = sadd.s32 %s360, 1
      %p364 = scmp.eq.s32.totalorder %s28, 1
      %p365 = scmp.ne.s32.totalorder %s360, %s362
      %p366 = scmp.eq.s32.totalorder %s28, 0
      %p367 = por %p365, %p366
      %p368 = scmp.ne.s32.totalorder %s360, %s362
      %p369 = scmp.eq.s32.totalorder %s33, 1
      %p370 = por %p368, %p369
      %p371 = scmp.ne.s32.totalorder %s362, %s363
      %p372 = scmp.eq.s32.totalorder %s33, 0
      %p373 = por %p371, %p372
      %p374 = scmp.ne.s32.totalorder %s362, %s363
      %p375 = scmp.eq.s32.totalorder %s34, 1
      %p376 = por %p374, %p375
      %p378 = scmp.ne.s32.totalorder %s363, %s377
      %p379 = scmp.eq.s32.totalorder %s34, 0
      %p380 = por %p378, %p379
      %s382 = sadd.s32 %s381, 1
      %p385 = scmp.eq.s32.totalorder %s28, 1
      %p386 = scmp.ne.s32.totalorder %s381, %s383
      %p387 = scmp.eq.s32.totalorder %s28, 0
      %p388 = por %p386, %p387
      %p389 = scmp.ne.s32.totalorder %s381, %s383
      %p390 = scmp.eq.s32.totalorder %s33, 1
      %p391 = por %p389, %p390
      %p392 = scmp.ne.s32.totalorder %s383, %s384
      %p393 = scmp.eq.s32.totalorder %s33, 0
      %p394 = por %p392, %p393
      %p395 = scmp.ne.s32.totalorder %s383, %s384
      %p396 = scmp.eq.s32.totalorder %s34, 1
      %p397 = por %p395, %p396
      %p399 = scmp.ne.s32.totalorder %s384, %s398
      %p400 = scmp.eq.s32.totalorder %s34, 0
      %p401 = por %p399, %p400
      %s403 = sadd.s32 %s402, 1
      %p406 = scmp.eq.s32.totalorder %s28, 1
      %p407 = scmp.ne.s32.totalorder %s402, %s404
      %p408 = scmp.eq.s32.totalorder %s28, 0
      %p409 = por %p407, %p408
      %p410 = scmp.ne.s32.totalorder %s402, %s404
      %p411 = scmp.eq.s32.totalorder %s33, 1
      %p412 = por %p410, %p411
      %p413 = scmp.ne.s32.totalorder %s404, %s405
      %p414 = scmp.eq.s32.totalorder %s33, 0
      %p415 = por %p413, %p414
      %p416 = scmp.ne.s32.totalorder %s404, %s405
      %p417 = scmp.eq.s32.totalorder %s34, 1
      %p418 = por %p416, %p417
      %p420 = scmp.ne.s32.totalorder %s405, %s419
      %p421 = scmp.eq.s32.totalorder %s34, 0
      %p422 = por %p420, %p421
      %s424 = sadd.s32 %s423, 1
      %p427 = scmp.eq.s32.totalorder %s28, 1
      %p428 = scmp.ne.s32.totalorder %s423, %s425
      %p429 = scmp.eq.s32.totalorder %s28, 0
      %p430 = por %p428, %p429
      %p431 = scmp.ne.s32.totalorder %s423, %s425
      %p432 = scmp.eq.s32.totalorder %s33, 1
      %p433 = por %p431, %p432
      %p434 = scmp.ne.s32.totalorder %s425, %s426
      %p435 = scmp.eq.s32.totalorder %s33, 0
      %p436 = por %p434, %p435
      %p437 = scmp.ne.s32.totalorder %s425, %s426
      %p438 = scmp.eq.s32.totalorder %s34, 1
      %p439 = por %p437, %p438
      %p441 = scmp.ne.s32.totalorder %s426, %s440
      %p442 = scmp.eq.s32.totalorder %s34, 0
      %p443 = por %p441, %p442
      %s444 = ssub.s32 %s28, %s35
      %p445 = scmp.eq.s32.totalorder %s444, 0
      %s447 = sadd.s32 %s446, 1
      %s448 = scalar_select %p445, %s446, %s447
      %p451 = pneg %p445
      %p452 = scmp.eq.s32.totalorder %s28, 1
      %p453 = por %p451, %p452
      %p454 = scmp.ne.s32.totalorder %s446, %s449
      %p455 = scmp.eq.s32.totalorder %s28, 0
      %p456 = por %p454, %p455
      %p457 = scmp.ne.s32.totalorder %s446, %s449
      %p458 = scmp.eq.s32.totalorder %s33, 1
      %p459 = por %p457, %p458
      %p460 = scmp.ne.s32.totalorder %s449, %s450
      %p461 = scmp.eq.s32.totalorder %s33, 0
      %p462 = por %p460, %p461
      %p463 = scmp.ne.s32.totalorder %s449, %s450
      %p464 = scmp.eq.s32.totalorder %s34, 1
      %p465 = por %p463, %p464
      %p467 = scmp.ne.s32.totalorder %s450, %s466
      %p468 = scmp.eq.s32.totalorder %s34, 0
      %p469 = por %p467, %p468
      %p470 = scmp.le.s32.totalorder 1, %s28
      %p471 = scmp.lt.s32.totalorder %s28, 3
      %p472 = pnand %p470, %p471
      %p473 = pneg %p472
      // Predicated region
      $region9: #{interaction_network_forward.1} parent=5 // pred_check
        _
      $region10: #{interaction_network_forward.1} parent=5 // pred_check_branch
        %475 = sbr.rel (%p472) target = $region12
      $region11: #{interaction_network_forward.1} parent=5 // pred_region
        %s476 = ssub.s32 %s28, 1
        // Predicated region
        $region13: #{interaction_network_forward.1} parent=11 // pred_check
          %p477 = pneg %p205
        $region14: #{interaction_network_forward.1} parent=11 // pred_check_branch
          %479 = sbr.rel (%p477) target = $region16
        $region15: #{interaction_network_forward.1} parent=11 // pred_region
          _
        $region16: #{interaction_network_forward.1} parent=11 // pred_fallthru
          _
        // Predicated region
        $region17: #{interaction_network_forward.1} parent=11 // pred_check
          %p480 = pneg %p226
        $region18: #{interaction_network_forward.1} parent=11 // pred_check_branch
          %482 = sbr.rel (%p480) target = $region20
        $region19: #{interaction_network_forward.1} parent=11 // pred_region
          _
        $region20: #{interaction_network_forward.1} parent=11 // pred_fallthru
          _
        // Predicated region
        $region21: #{interaction_network_forward.1} parent=11 // pred_check
          %p483 = pneg %p247
        $region22: #{interaction_network_forward.1} parent=11 // pred_check_branch
          %485 = sbr.rel (%p483) target = $region24
        $region23: #{interaction_network_forward.1} parent=11 // pred_region
          _
        $region24: #{interaction_network_forward.1} parent=11 // pred_fallthru
          _
        // Predicated region
        $region25: #{interaction_network_forward.1} parent=11 // pred_check
          %p486 = pneg %p268
        $region26: #{interaction_network_forward.1} parent=11 // pred_check_branch
          %488 = sbr.rel (%p486) target = $region28
        $region27: #{interaction_network_forward.1} parent=11 // pred_region
          _
        $region28: #{interaction_network_forward.1} parent=11 // pred_fallthru
          _
        // Predicated region
        $region29: #{interaction_network_forward.1} parent=11 // pred_check
          %p489 = pneg %p289
        $region30: #{interaction_network_forward.1} parent=11 // pred_check_branch
          %491 = sbr.rel (%p489) target = $region32
        $region31: #{interaction_network_forward.1} parent=11 // pred_region
          _
        $region32: #{interaction_network_forward.1} parent=11 // pred_fallthru
          _
        // Predicated region
        $region33: #{interaction_network_forward.1} parent=11 // pred_check
          %p492 = pneg %p310
        $region34: #{interaction_network_forward.1} parent=11 // pred_check_branch
          %494 = sbr.rel (%p492) target = $region36
        $region35: #{interaction_network_forward.1} parent=11 // pred_region
          _
        $region36: #{interaction_network_forward.1} parent=11 // pred_fallthru
          _
        // Predicated region
        $region37: #{interaction_network_forward.1} parent=11 // pred_check
          %p495 = pneg %p331
        $region38: #{interaction_network_forward.1} parent=11 // pred_check_branch
          %497 = sbr.rel (%p495) target = $region40
        $region39: #{interaction_network_forward.1} parent=11 // pred_region
          _
        $region40: #{interaction_network_forward.1} parent=11 // pred_fallthru
          _
        // Predicated region
        $region41: #{interaction_network_forward.1} parent=11 // pred_check
          %p498 = pneg %p352
        $region42: #{interaction_network_forward.1} parent=11 // pred_check_branch
          %500 = sbr.rel (%p498) target = $region44
        $region43: #{interaction_network_forward.1} parent=11 // pred_region
          _
        $region44: #{interaction_network_forward.1} parent=11 // pred_fallthru
          _
        // Predicated region
        $region45: #{interaction_network_forward.1} parent=11 // pred_check
          %p501 = pneg %p373
        $region46: #{interaction_network_forward.1} parent=11 // pred_check_branch
          %503 = sbr.rel (%p501) target = $region48
        $region47: #{interaction_network_forward.1} parent=11 // pred_region
          %s505 = ssub.s32 32768, 32768
          %506 = vsyncadd [#allocation3], %s505
          %s507 = sshll.u32 [#allocation2], 4
          %s508 = int_to_ptr.vmem [resolvable:$true] %s507
          %513 = dma.hbm_to_vmem [thread:$0]  %s14, 32768, %s508, [#allocation3], 128, 128, 8
        $region48: #{interaction_network_forward.1} parent=11 // pred_fallthru
          _
        // Predicated region
        $region49: #{interaction_network_forward.1} parent=11 // pred_check
          %p514 = pneg %p394
        $region50: #{interaction_network_forward.1} parent=11 // pred_check_branch
          %516 = sbr.rel (%p514) target = $region52
        $region51: #{interaction_network_forward.1} parent=11 // pred_region
          _
        $region52: #{interaction_network_forward.1} parent=11 // pred_fallthru
          _
        // Predicated region
        $region53: #{interaction_network_forward.1} parent=11 // pred_check
          %p517 = pneg %p415
        $region54: #{interaction_network_forward.1} parent=11 // pred_check_branch
          %519 = sbr.rel (%p517) target = $region56
        $region55: #{interaction_network_forward.1} parent=11 // pred_region
          _
        $region56: #{interaction_network_forward.1} parent=11 // pred_fallthru
          _
        // Predicated region
        $region57: #{interaction_network_forward.1} parent=11 // pred_check
          %p520 = pneg %p436
        $region58: #{interaction_network_forward.1} parent=11 // pred_check_branch
          %522 = sbr.rel (%p520) target = $region60
        $region59: #{interaction_network_forward.1} parent=11 // pred_region
          _
        $region60: #{interaction_network_forward.1} parent=11 // pred_fallthru
          _
      $region12: #{interaction_network_forward.1} parent=5 // pred_fallthru
        _
      %p523 = scmp.lt.s32.totalorder %s28, 2
      // Predicated region
      $region61: #{interaction_network_forward.1} parent=5 // pred_check
        %p524 = pneg %p523
      $region62: #{interaction_network_forward.1} parent=5 // pred_check_branch
        %526 = sbr.rel (%p524) target = $region64
      $region63: #{interaction_network_forward.1} parent=5 // pred_region
        // Predicated region
        $region65: #{interaction_network_forward.1} parent=63 // pred_check
          %p527 = pneg %p48
        $region66: #{interaction_network_forward.1} parent=63 // pred_check_branch
          %529 = sbr.rel (%p527) target = $region68
        $region67: #{interaction_network_forward.1} parent=63 // pred_region
          %p530 = scmp.lt.s32.totalorder %s28, 1
          %s531 = scalar_select %p530, %s28, 1
          %s532 = smul.addr %s531, 8
          %s533 = scalar_lea.vmem %s0, %s532
        $region68: #{interaction_network_forward.1} parent=63 // pred_fallthru
          _
        // Predicated region
        $region69: #{interaction_network_forward.1} parent=63 // pred_check
          %p534 = pneg %p74
        $region70: #{interaction_network_forward.1} parent=63 // pred_check_branch
          %536 = sbr.rel (%p534) target = $region72
        $region71: #{interaction_network_forward.1} parent=63 // pred_region
          %p537 = scmp.lt.s32.totalorder %s28, 1
          %s538 = scalar_select %p537, %s28, 1
          %s539 = smul.addr %s538, 8
          %s540 = scalar_lea.vmem %s1, %s539
        $region72: #{interaction_network_forward.1} parent=63 // pred_fallthru
          _
        // Predicated region
        $region73: #{interaction_network_forward.1} parent=63 // pred_check
          %p541 = pneg %p100
        $region74: #{interaction_network_forward.1} parent=63 // pred_check_branch
          %543 = sbr.rel (%p541) target = $region76
        $region75: #{interaction_network_forward.1} parent=63 // pred_region
          %p544 = scmp.lt.s32.totalorder %s28, 1
          %s545 = scalar_select %p544, %s28, 1
          %s546 = smul.addr %s545, 8
          %s547 = scalar_lea.vmem %s2, %s546
        $region76: #{interaction_network_forward.1} parent=63 // pred_fallthru
          _
        // Predicated region
        $region77: #{interaction_network_forward.1} parent=63 // pred_check
          %p548 = pneg %p126
        $region78: #{interaction_network_forward.1} parent=63 // pred_check_branch
          %550 = sbr.rel (%p548) target = $region80
        $region79: #{interaction_network_forward.1} parent=63 // pred_region
          %p551 = scmp.lt.s32.totalorder %s28, 1
          %s552 = scalar_select %p551, %s28, 1
          %s553 = smul.addr %s552, 16
          %s554 = smul.addr %s553, 4
          %s555 = scalar_lea.vmem %s3, %s554
        $region80: #{interaction_network_forward.1} parent=63 // pred_fallthru
          _
        // Predicated region
        $region81: #{interaction_network_forward.1} parent=63 // pred_check
          %p556 = pneg %p152
        $region82: #{interaction_network_forward.1} parent=63 // pred_check_branch
          %558 = sbr.rel (%p556) target = $region84
        $region83: #{interaction_network_forward.1} parent=63 // pred_region
          %p559 = scmp.lt.s32.totalorder %s28, 1
          %s560 = scalar_select %p559, %s28, 1
          %s561 = smul.addr %s560, 16
          %s562 = smul.addr %s561, 4
          %s563 = scalar_lea.vmem %s4, %s562
        $region84: #{interaction_network_forward.1} parent=63 // pred_fallthru
          _
        // Predicated region
        $region85: #{interaction_network_forward.1} parent=63 // pred_check
          %p564 = pneg %p178
        $region86: #{interaction_network_forward.1} parent=63 // pred_check_branch
          %566 = sbr.rel (%p564) target = $region88
        $region87: #{interaction_network_forward.1} parent=63 // pred_region
          %p567 = scmp.lt.s32.totalorder %s28, 1
          %s568 = scalar_select %p567, %s28, 1
          %s569 = smul.addr %s568, 16
          %s570 = smul.addr %s569, 4
          %s571 = scalar_lea.vmem %s5, %s570
        $region88: #{interaction_network_forward.1} parent=63 // pred_fallthru
          _
      $region64: #{interaction_network_forward.1} parent=5 // pred_fallthru
        _
      %p572 = scmp.le.s32.totalorder 1, %s28
      %p573 = scmp.lt.s32.totalorder %s28, 3
      %p574 = pnand %p572, %p573
      %p575 = pneg %p574
      // Predicated region
      $region89: #{interaction_network_forward.1} parent=5 // pred_check
        _
      $region90: #{interaction_network_forward.1} parent=5 // pred_check_branch
        %577 = sbr.rel (%p574) target = $region92
      $region91: #{interaction_network_forward.1} parent=5 // pred_region
        %s578 = ssub.s32 %s28, 1
        // Predicated region
        $region93: #{interaction_network_forward.1} parent=91 // pred_check
          %p579 = pneg %p373
        $region94: #{interaction_network_forward.1} parent=91 // pred_check_branch
          %581 = sbr.rel (%p579) target = $region96
        $region95: #{interaction_network_forward.1} parent=91 // pred_region
          %582 = dma.done [#allocation3], 32768
        $region96: #{interaction_network_forward.1} parent=91 // pred_fallthru
          _
        %p583 = scmp.lt.s32.totalorder %s33, 1
        %s584 = scalar_select %p583, %s33, 1
        %s585 = smul.addr %s584, 8
        %s586 = scalar_lea.vmem %s0, %s585
        %p587 = pneg %p54
        %p588 = pneg %p51
        %p589 = scmp.lt.s32.totalorder %s33, 1
        %s590 = scalar_select %p589, %s33, 1
        %s591 = smul.addr %s590, 8
        %s592 = scalar_lea.vmem %s1, %s591
        %p593 = pneg %p80
        %p594 = pneg %p77
        %p595 = scmp.lt.s32.totalorder %s33, 1
        %s596 = scalar_select %p595, %s33, 1
        %s597 = smul.addr %s596, 8
        %s598 = scalar_lea.vmem %s2, %s597
        %p599 = pneg %p106
        %p600 = pneg %p103
        %p601 = scmp.lt.s32.totalorder %s33, 1
        %s602 = scalar_select %p601, %s33, 1
        %s603 = smul.addr %s602, 16
        %s604 = smul.addr %s603, 4
        %s605 = scalar_lea.vmem %s3, %s604
        %p606 = pneg %p132
        %p607 = pneg %p129
        %p608 = scmp.lt.s32.totalorder %s33, 1
        %s609 = scalar_select %p608, %s33, 1
        %s610 = smul.addr %s609, 16
        %s611 = smul.addr %s610, 4
        %s612 = scalar_lea.vmem %s4, %s611
        %p613 = pneg %p158
        %p614 = pneg %p155
        %p615 = scmp.lt.s32.totalorder %s33, 1
        %s616 = scalar_select %p615, %s33, 1
        %s617 = smul.addr %s616, 16
        %s618 = smul.addr %s617, 4
        %s619 = scalar_lea.vmem %s5, %s618
        %p620 = pneg %p184
        %p621 = pneg %p181
        %p622 = pneg %p205
        %p623 = pneg %p202
        %p624 = pneg %p226
        %p625 = pneg %p223
        %p626 = pneg %p247
        %p627 = pneg %p244
        %p628 = pneg %p268
        %p629 = pneg %p265
        %p630 = pneg %p289
        %p631 = pneg %p286
        %p632 = pneg %p310
        %p633 = pneg %p307
        %p634 = pneg %p331
        %p635 = pneg %p328
        %p636 = pneg %p352
        %p637 = pneg %p349
        %p638 = pneg %p373
        %p639 = pneg %p370
        %p640 = pneg %p394
        %p641 = pneg %p391
        %p642 = pneg %p415
        %p643 = pneg %p412
        %p644 = pneg %p436
        %p645 = pneg %p433
        %p646 = pneg %p462
        %p647 = pneg %p459
        %s648 = sand.u32 %s449, 1
        %s649 = scalar_lea.sflag [#allocation4], %s648
        %s650 = sand.u32 %s449, 1
        %s651 = scalar_lea.vmem [#allocation5], %s650
        %p652 = scmp.lt.s32.totalorder %s33, 1
        %s653 = scalar_select %p652, %s33, 1
        %s654 = smul.addr %s653, 8
        %s655 = scalar_lea.vmem %s0, %s654
        %p656 = scmp.lt.s32.totalorder %s33, 1
        %s657 = scalar_select %p656, %s33, 1
        %s658 = smul.addr %s657, 8
        %s659 = scalar_lea.vmem %s1, %s658
        %p660 = scmp.lt.s32.totalorder %s33, 1
        %s661 = scalar_select %p660, %s33, 1
        %s662 = smul.addr %s661, 8
        %s663 = scalar_lea.vmem %s2, %s662
        %p664 = scmp.lt.s32.totalorder %s33, 1
        %s665 = scalar_select %p664, %s33, 1
        %s666 = smul.addr %s665, 16
        %s667 = smul.addr %s666, 4
        %s668 = scalar_lea.vmem %s3, %s667
        %p669 = scmp.lt.s32.totalorder %s33, 1
        %s670 = scalar_select %p669, %s33, 1
        %s671 = smul.addr %s670, 16
        %s672 = smul.addr %s671, 4
        %s673 = scalar_lea.vmem %s4, %s672
        %p674 = scmp.lt.s32.totalorder %s33, 1
        %s675 = scalar_select %p674, %s33, 1
        %s676 = smul.addr %s675, 16
        %s677 = smul.addr %s676, 4
        %s678 = scalar_lea.vmem %s5, %s677
        %v679 = vld [vmem:[%s655] sm:$0xff]
        %v680 = vld [vmem:[%s659] sm:$0xff]
        %v681 = vld [vmem:[%s663] sm:$0xff]
        %v682 = vld [vmem:[%s668] sm:$0xf]
        %v683 = vld [vmem:[%s668 + $0x4] sm:$0xf]
        %v684 = vld [vmem:[%s668 + $0x8] sm:$0xf]
        %v685 = vld [vmem:[%s668 + $0xc] sm:$0xf]
        %v686 = vld [vmem:[%s668 + $0x10] sm:$0xf]
        %v687 = vld [vmem:[%s668 + $0x14] sm:$0xf]
        %v688 = vld [vmem:[%s668 + $0x18] sm:$0xf]
        %v689 = vld [vmem:[%s668 + $0x1c] sm:$0xf]
        %v690 = vld [vmem:[%s668 + $0x20] sm:$0xf]
        %v691 = vld [vmem:[%s668 + $0x24] sm:$0xf]
        %v692 = vld [vmem:[%s668 + $0x28] sm:$0xf]
        %v693 = vld [vmem:[%s668 + $0x2c] sm:$0xf]
        %v694 = vld [vmem:[%s668 + $0x30] sm:$0xf]
        %v695 = vld [vmem:[%s668 + $0x34] sm:$0xf]
        %v696 = vld [vmem:[%s668 + $0x38] sm:$0xf]
        %v697 = vld [vmem:[%s668 + $0x3c] sm:$0xf]
        %v698 = vunpack.c.l.bf16 %v682
        %v699 = vunpack.c.l.bf16 %v683
        %v700 = vunpack.c.l.bf16 %v684
        %v701 = vunpack.c.l.bf16 %v685
        %v702 = vunpack.c.l.bf16 %v686
        %v703 = vunpack.c.l.bf16 %v687
        %v704 = vunpack.c.l.bf16 %v688
        %v705 = vunpack.c.l.bf16 %v689
        %v706 = vunpack.c.l.bf16 %v690
        %v707 = vunpack.c.l.bf16 %v691
        %v708 = vunpack.c.l.bf16 %v692
        %v709 = vunpack.c.l.bf16 %v693
        %v710 = vunpack.c.l.bf16 %v694
        %v711 = vunpack.c.l.bf16 %v695
        %v712 = vunpack.c.l.bf16 %v696
        %v713 = vunpack.c.l.bf16 %v697
        %v714 = vld [vmem:[%s673] sm:$0xf]
        %v715 = vld [vmem:[%s673 + $0x4] sm:$0xf]
        %v716 = vld [vmem:[%s673 + $0x8] sm:$0xf]
        %v717 = vld [vmem:[%s673 + $0xc] sm:$0xf]
        %v718 = vld [vmem:[%s673 + $0x10] sm:$0xf]
        %v719 = vld [vmem:[%s673 + $0x14] sm:$0xf]
        %v720 = vld [vmem:[%s673 + $0x18] sm:$0xf]
        %v721 = vld [vmem:[%s673 + $0x1c] sm:$0xf]
        %v722 = vld [vmem:[%s673 + $0x20] sm:$0xf]
        %v723 = vld [vmem:[%s673 + $0x24] sm:$0xf]
        %v724 = vld [vmem:[%s673 + $0x28] sm:$0xf]
        %v725 = vld [vmem:[%s673 + $0x2c] sm:$0xf]
        %v726 = vld [vmem:[%s673 + $0x30] sm:$0xf]
        %v727 = vld [vmem:[%s673 + $0x34] sm:$0xf]
        %v728 = vld [vmem:[%s673 + $0x38] sm:$0xf]
        %v729 = vld [vmem:[%s673 + $0x3c] sm:$0xf]
        %v730 = vunpack.c.l.bf16 %v714
        %v731 = vunpack.c.l.bf16 %v715
        %v732 = vunpack.c.l.bf16 %v716
        %v733 = vunpack.c.l.bf16 %v717
        %v734 = vunpack.c.l.bf16 %v718
        %v735 = vunpack.c.l.bf16 %v719
        %v736 = vunpack.c.l.bf16 %v720
        %v737 = vunpack.c.l.bf16 %v721
        %v738 = vunpack.c.l.bf16 %v722
        %v739 = vunpack.c.l.bf16 %v723
        %v740 = vunpack.c.l.bf16 %v724
        %v741 = vunpack.c.l.bf16 %v725
        %v742 = vunpack.c.l.bf16 %v726
        %v743 = vunpack.c.l.bf16 %v727
        %v744 = vunpack.c.l.bf16 %v728
        %v745 = vunpack.c.l.bf16 %v729
        %v746 = vld [vmem:[%s678] sm:$0xf]
        %v747 = vld [vmem:[%s678 + $0x4] sm:$0xf]
        %v748 = vld [vmem:[%s678 + $0x8] sm:$0xf]
        %v749 = vld [vmem:[%s678 + $0xc] sm:$0xf]
        %v750 = vld [vmem:[%s678 + $0x10] sm:$0xf]
        %v751 = vld [vmem:[%s678 + $0x14] sm:$0xf]
        %v752 = vld [vmem:[%s678 + $0x18] sm:$0xf]
        %v753 = vld [vmem:[%s678 + $0x1c] sm:$0xf]
        %v754 = vld [vmem:[%s678 + $0x20] sm:$0xf]
        %v755 = vld [vmem:[%s678 + $0x24] sm:$0xf]
        %v756 = vld [vmem:[%s678 + $0x28] sm:$0xf]
        %v757 = vld [vmem:[%s678 + $0x2c] sm:$0xf]
        %v758 = vld [vmem:[%s678 + $0x30] sm:$0xf]
        %v759 = vld [vmem:[%s678 + $0x34] sm:$0xf]
        %v760 = vld [vmem:[%s678 + $0x38] sm:$0xf]
        %v761 = vld [vmem:[%s678 + $0x3c] sm:$0xf]
        %v762 = vunpack.c.l.bf16 %v746
        %v763 = vunpack.c.l.bf16 %v747
        %v764 = vunpack.c.l.bf16 %v748
        %v765 = vunpack.c.l.bf16 %v749
        %v766 = vunpack.c.l.bf16 %v750
        %v767 = vunpack.c.l.bf16 %v751
        %v768 = vunpack.c.l.bf16 %v752
        %v769 = vunpack.c.l.bf16 %v753
        %v770 = vunpack.c.l.bf16 %v754
        %v771 = vunpack.c.l.bf16 %v755
        %v772 = vunpack.c.l.bf16 %v756
        %v773 = vunpack.c.l.bf16 %v757
        %v774 = vunpack.c.l.bf16 %v758
        %v775 = vunpack.c.l.bf16 %v759
        %v776 = vunpack.c.l.bf16 %v760
        %v777 = vunpack.c.l.bf16 %v761
        %778 = vmatprep.subr.mxu0 0.0
        %779 = vmatpush1.msra.mxu0 %v698
        %780 = vmatprep.subr.mxu0 0.0
        %781 = vmatpush1.msra.mxu0 %v699
        %782 = vmatprep.subr.mxu0 0.0
        %783 = vmatpush1.msra.mxu0 %v700
        %784 = vmatprep.subr.mxu0 0.0
        %785 = vmatpush1.msra.mxu0 %v701
        %786 = vmatprep.subr.mxu0 0.0
        %787 = vmatpush1.msra.mxu0 %v702
        %788 = vmatprep.subr.mxu0 0.0
        %789 = vmatpush1.msra.mxu0 %v703
        %790 = vmatprep.subr.mxu0 0.0
        %791 = vmatpush1.msra.mxu0 %v704
        %792 = vmatprep.subr.mxu0 0.0
        %793 = vmatpush1.msra.mxu0 %v705
        %794 = vmatprep.subr.mxu0 0.0
        %795 = vmatpush1.msra.mxu0 %v706
        %796 = vmatprep.subr.mxu0 0.0
        %797 = vmatpush1.msra.mxu0 %v707
        %798 = vmatprep.subr.mxu0 0.0
        %799 = vmatpush1.msra.mxu0 %v708
        %800 = vmatprep.subr.mxu0 0.0
        %801 = vmatpush1.msra.mxu0 %v709
        %802 = vmatprep.subr.mxu0 0.0
        %803 = vmatpush1.msra.mxu0 %v710
        %804 = vmatprep.subr.mxu0 0.0
        %805 = vmatpush1.msra.mxu0 %v711
        %806 = vmatprep.subr.mxu0 0.0
        %807 = vmatpush1.msra.mxu0 %v712
        %808 = vmatprep.subr.mxu0 0.0
        %809 = vmatpush1.msra.mxu0 %v713
        %810 = vmatprep.subr.mxu0 0.0
        %811 = vmatpush1.msra.mxu0 0.0
        %812 = vmatprep.subr.mxu0 0.0
        %813 = vmatpush1.msra.mxu0 0.0
        %814 = vmatprep.subr.mxu0 0.0
        %815 = vmatpush1.msra.mxu0 0.0
        %816 = vmatprep.subr.mxu0 0.0
        %817 = vmatpush1.msra.mxu0 0.0
        %818 = vmatprep.subr.mxu0 0.0
        %819 = vmatpush1.msra.mxu0 0.0
        %820 = vmatprep.subr.mxu0 0.0
        %821 = vmatpush1.msra.mxu0 0.0
        %822 = vmatprep.subr.mxu0 0.0
        %823 = vmatpush1.msra.mxu0 0.0
        %824 = vmatprep.subr.mxu0 0.0
        %825 = vmatpush1.msra.mxu0 0.0
        %826 = vmatprep.subr.mxu0 0.0
        %827 = vmatpush1.msra.mxu0 0.0
        %828 = vmatprep.subr.mxu0 0.0
        %829 = vmatpush1.msra.mxu0 0.0
        %830 = vmatprep.subr.mxu0 0.0
        %831 = vmatpush1.msra.mxu0 0.0
        %832 = vmatprep.subr.mxu0 0.0
        %833 = vmatpush1.msra.mxu0 0.0
        %834 = vmatprep.subr.mxu0 0.0
        %835 = vmatpush1.msra.mxu0 0.0
        %836 = vmatprep.subr.mxu0 0.0
        %837 = vmatpush1.msra.mxu0 0.0
        %838 = vmatprep.subr.mxu0 0.0
        %839 = vmatpush1.msra.mxu0 0.0
        %840 = vmatprep.subr.mxu0 0.0
        %841 = vmatpush1.msra.mxu0 0.0
        %842 = vmatprep.mubr.f32.mxu0 0.0
        %843 = vmatmul.mubr.f32.gmra.mrb[0].mxu0 %v679
        %v844 = vpop.f32.mrb[0].mxu0
        %v845 = vadd.f32 0.0, %v844
        %v846 = vpop.f32.mrb[0].mxu0
        %847 = vdwg.mxu0
        %848 = vmatprep.subr.mxu0 0.0
        %849 = vmatpush1.msra.mxu0 %v730
        %850 = vmatprep.subr.mxu0 0.0
        %851 = vmatpush1.msra.mxu0 %v731
        %852 = vmatprep.subr.mxu0 0.0
        %853 = vmatpush1.msra.mxu0 %v732
        %854 = vmatprep.subr.mxu0 0.0
        %855 = vmatpush1.msra.mxu0 %v733
        %856 = vmatprep.subr.mxu0 0.0
        %857 = vmatpush1.msra.mxu0 %v734
        %858 = vmatprep.subr.mxu0 0.0
        %859 = vmatpush1.msra.mxu0 %v735
        %860 = vmatprep.subr.mxu0 0.0
        %861 = vmatpush1.msra.mxu0 %v736
        %862 = vmatprep.subr.mxu0 0.0
        %863 = vmatpush1.msra.mxu0 %v737
        %864 = vmatprep.subr.mxu0 0.0
        %865 = vmatpush1.msra.mxu0 %v738
        %866 = vmatprep.subr.mxu0 0.0
        %867 = vmatpush1.msra.mxu0 %v739
        %868 = vmatprep.subr.mxu0 0.0
        %869 = vmatpush1.msra.mxu0 %v740
        %870 = vmatprep.subr.mxu0 0.0
        %871 = vmatpush1.msra.mxu0 %v741
        %872 = vmatprep.subr.mxu0 0.0
        %873 = vmatpush1.msra.mxu0 %v742
        %874 = vmatprep.subr.mxu0 0.0
        %875 = vmatpush1.msra.mxu0 %v743
        %876 = vmatprep.subr.mxu0 0.0
        %877 = vmatpush1.msra.mxu0 %v744
        %878 = vmatprep.subr.mxu0 0.0
        %879 = vmatpush1.msra.mxu0 %v745
        %880 = vmatprep.subr.mxu0 0.0
        %881 = vmatpush1.msra.mxu0 0.0
        %882 = vmatprep.subr.mxu0 0.0
        %883 = vmatpush1.msra.mxu0 0.0
        %884 = vmatprep.subr.mxu0 0.0
        %885 = vmatpush1.msra.mxu0 0.0
        %886 = vmatprep.subr.mxu0 0.0
        %887 = vmatpush1.msra.mxu0 0.0
        %888 = vmatprep.subr.mxu0 0.0
        %889 = vmatpush1.msra.mxu0 0.0
        %890 = vmatprep.subr.mxu0 0.0
        %891 = vmatpush1.msra.mxu0 0.0
        %892 = vmatprep.subr.mxu0 0.0
        %893 = vmatpush1.msra.mxu0 0.0
        %894 = vmatprep.subr.mxu0 0.0
        %895 = vmatpush1.msra.mxu0 0.0
        %896 = vmatprep.subr.mxu0 0.0
        %897 = vmatpush1.msra.mxu0 0.0
        %898 = vmatprep.subr.mxu0 0.0
        %899 = vmatpush1.msra.mxu0 0.0
        %900 = vmatprep.subr.mxu0 0.0
        %901 = vmatpush1.msra.mxu0 0.0
        %902 = vmatprep.subr.mxu0 0.0
        %903 = vmatpush1.msra.mxu0 0.0
        %904 = vmatprep.subr.mxu0 0.0
        %905 = vmatpush1.msra.mxu0 0.0
        %906 = vmatprep.subr.mxu0 0.0
        %907 = vmatpush1.msra.mxu0 0.0
        %908 = vmatprep.subr.mxu0 0.0
        %909 = vmatpush1.msra.mxu0 0.0
        %910 = vmatprep.subr.mxu0 0.0
        %911 = vmatpush1.msra.mxu0 0.0
        %912 = vmatprep.mubr.f32.mxu0 0.0
        %913 = vmatmul.mubr.f32.gmra.mrb[0].mxu0 %v679
        %v914 = vpop.f32.mrb[0].mxu0
        %v915 = vadd.f32 0.0, %v914
        %v916 = vpop.f32.mrb[0].mxu0
        %917 = vdwg.mxu0
        %v918 = vld [vmem:[%s6] sm:$0xff]
        %v919 = vld [vmem:[%s6 + $0x8] sm:$0xff]
        %v920 = vld [vmem:[%s7] sm:$0xff]
        %v921 = vld [vmem:[%s7 + $0x8] sm:$0xff]
        %vm922 = vcmask 64512
        %v924 = vsel %vm922, %v920, 0
        %v927 = vsel %vm922, %v921, 0
        %929 = vmatprep.subr.mxu0 0.0
        %930 = vmatpush1.msra.mxu0 %v915
        %931 = vmatprep.subr.mxu0 0.0
        %932 = vmatpush1.msra.mxu0 0.0
        %933 = vmatprep.subr.mxu0 0.0
        %934 = vmatpush1.msra.mxu0 0.0
        %935 = vmatprep.subr.mxu0 0.0
        %936 = vmatpush1.msra.mxu0 0.0
        %937 = vmatprep.subr.mxu0 0.0
        %938 = vmatpush1.msra.mxu0 0.0
        %939 = vmatprep.subr.mxu0 0.0
        %940 = vmatpush1.msra.mxu0 0.0
        %941 = vmatprep.subr.mxu0 0.0
        %942 = vmatpush1.msra.mxu0 0.0
        %943 = vmatprep.subr.mxu0 0.0
        %944 = vmatpush1.msra.mxu0 0.0
        %945 = vmatprep.subr.mxu0 0.0
        %946 = vmatpush1.msra.mxu0 0.0
        %947 = vmatprep.subr.mxu0 0.0
        %948 = vmatpush1.msra.mxu0 0.0
        %949 = vmatprep.subr.mxu0 0.0
        %950 = vmatpush1.msra.mxu0 0.0
        %951 = vmatprep.subr.mxu0 0.0
        %952 = vmatpush1.msra.mxu0 0.0
        %953 = vmatprep.subr.mxu0 0.0
        %954 = vmatpush1.msra.mxu0 0.0
        %955 = vmatprep.subr.mxu0 0.0
        %956 = vmatpush1.msra.mxu0 0.0
        %957 = vmatprep.subr.mxu0 0.0
        %958 = vmatpush1.msra.mxu0 0.0
        %959 = vmatprep.subr.mxu0 0.0
        %960 = vmatpush1.msra.mxu0 0.0
        %961 = vmatprep.subr.mxu0 0.0
        %962 = vmatpush1.msra.mxu0 0.0
        %963 = vmatprep.subr.mxu0 0.0
        %964 = vmatpush1.msra.mxu0 0.0
        %965 = vmatprep.subr.mxu0 0.0
        %966 = vmatpush1.msra.mxu0 0.0
        %967 = vmatprep.subr.mxu0 0.0
        %968 = vmatpush1.msra.mxu0 0.0
        %969 = vmatprep.subr.mxu0 0.0
        %970 = vmatpush1.msra.mxu0 0.0
        %971 = vmatprep.subr.mxu0 0.0
        %972 = vmatpush1.msra.mxu0 0.0
        %973 = vmatprep.subr.mxu0 0.0
        %974 = vmatpush1.msra.mxu0 0.0
        %975 = vmatprep.subr.mxu0 0.0
        %976 = vmatpush1.msra.mxu0 0.0
        %977 = vmatprep.subr.mxu0 0.0
        %978 = vmatpush1.msra.mxu0 0.0
        %979 = vmatprep.subr.mxu0 0.0
        %980 = vmatpush1.msra.mxu0 0.0
        %981 = vmatprep.subr.mxu0 0.0
        %982 = vmatpush1.msra.mxu0 0.0
        %983 = vmatprep.subr.mxu0 0.0
        %984 = vmatpush1.msra.mxu0 0.0
        %985 = vmatprep.subr.mxu0 0.0
        %986 = vmatpush1.msra.mxu0 0.0
        %987 = vmatprep.subr.mxu0 0.0
        %988 = vmatpush1.msra.mxu0 0.0
        %989 = vmatprep.subr.mxu0 0.0
        %990 = vmatpush1.msra.mxu0 0.0
        %991 = vmatprep.subr.mxu0 0.0
        %992 = vmatpush1.msra.mxu0 0.0
        %993 = vmatprep.mubr.f32.mxu0 0.0
        %994 = vmatmul.mubr.f32.gmra.mrb[0].mxu0 %v924
        %v995 = vpop.f32.mrb[0].mxu0
        %v996 = vadd.f32 0.0, %v995
        %v997 = vpop.f32.mrb[0].mxu0
        %998 = vmatprep.mubr.f32.mxu0 0.0
        %999 = vmatmul.mubr.f32.gmra.mrb[0].mxu0 %v927
        %v1000 = vpop.f32.mrb[0].mxu0
        %v1001 = vadd.f32 0.0, %v1000
        %v1002 = vpop.f32.mrb[0].mxu0
        %1003 = vdwg.mxu0
        %v1005 = vsel %vm922, %v918, 0
        %v1008 = vsel %vm922, %v919, 0
        %1010 = vmatprep.subr.mxu0 0.0
        %1011 = vmatpush1.msra.mxu0 %v845
        %1012 = vmatprep.subr.mxu0 0.0
        %1013 = vmatpush1.msra.mxu0 0.0
        %1014 = vmatprep.subr.mxu0 0.0
        %1015 = vmatpush1.msra.mxu0 0.0
        %1016 = vmatprep.subr.mxu0 0.0
        %1017 = vmatpush1.msra.mxu0 0.0
        %1018 = vmatprep.subr.mxu0 0.0
        %1019 = vmatpush1.msra.mxu0 0.0
        %1020 = vmatprep.subr.mxu0 0.0
        %1021 = vmatpush1.msra.mxu0 0.0
        %1022 = vmatprep.subr.mxu0 0.0
        %1023 = vmatpush1.msra.mxu0 0.0
        %1024 = vmatprep.subr.mxu0 0.0
        %1025 = vmatpush1.msra.mxu0 0.0
        %1026 = vmatprep.subr.mxu0 0.0
        %1027 = vmatpush1.msra.mxu0 0.0
        %1028 = vmatprep.subr.mxu0 0.0
        %1029 = vmatpush1.msra.mxu0 0.0
        %1030 = vmatprep.subr.mxu0 0.0
        %1031 = vmatpush1.msra.mxu0 0.0
        %1032 = vmatprep.subr.mxu0 0.0
        %1033 = vmatpush1.msra.mxu0 0.0
        %1034 = vmatprep.subr.mxu0 0.0
        %1035 = vmatpush1.msra.mxu0 0.0
        %1036 = vmatprep.subr.mxu0 0.0
        %1037 = vmatpush1.msra.mxu0 0.0
        %1038 = vmatprep.subr.mxu0 0.0
        %1039 = vmatpush1.msra.mxu0 0.0
        %1040 = vmatprep.subr.mxu0 0.0
        %1041 = vmatpush1.msra.mxu0 0.0
        %1042 = vmatprep.subr.mxu0 0.0
        %1043 = vmatpush1.msra.mxu0 0.0
        %1044 = vmatprep.subr.mxu0 0.0
        %1045 = vmatpush1.msra.mxu0 0.0
        %1046 = vmatprep.subr.mxu0 0.0
        %1047 = vmatpush1.msra.mxu0 0.0
        %1048 = vmatprep.subr.mxu0 0.0
        %1049 = vmatpush1.msra.mxu0 0.0
        %1050 = vmatprep.subr.mxu0 0.0
        %1051 = vmatpush1.msra.mxu0 0.0
        %1052 = vmatprep.subr.mxu0 0.0
        %1053 = vmatpush1.msra.mxu0 0.0
        %1054 = vmatprep.subr.mxu0 0.0
        %1055 = vmatpush1.msra.mxu0 0.0
        %1056 = vmatprep.subr.mxu0 0.0
        %1057 = vmatpush1.msra.mxu0 0.0
        %1058 = vmatprep.subr.mxu0 0.0
        %1059 = vmatpush1.msra.mxu0 0.0
        %1060 = vmatprep.subr.mxu0 0.0
        %1061 = vmatpush1.msra.mxu0 0.0
        %1062 = vmatprep.subr.mxu0 0.0
        %1063 = vmatpush1.msra.mxu0 0.0
        %1064 = vmatprep.subr.mxu0 0.0
        %1065 = vmatpush1.msra.mxu0 0.0
        %1066 = vmatprep.subr.mxu0 0.0
        %1067 = vmatpush1.msra.mxu0 0.0
        %1068 = vmatprep.subr.mxu0 0.0
        %1069 = vmatpush1.msra.mxu0 0.0
        %1070 = vmatprep.subr.mxu0 0.0
        %1071 = vmatpush1.msra.mxu0 0.0
        %1072 = vmatprep.subr.mxu0 0.0
        %1073 = vmatpush1.msra.mxu0 0.0
        %1074 = vmatprep.mubr.f32.mxu0 0.0
        %1075 = vmatmul.mubr.f32.gmra.mrb[0].mxu0 %v1005
        %v1076 = vpop.f32.mrb[0].mxu0
        %v1077 = vadd.f32 %v996, %v1076
        %v1078 = vpop.f32.mrb[0].mxu0
        %1079 = vmatprep.mubr.f32.mxu0 0.0
        %1080 = vmatmul.mubr.f32.gmra.mrb[0].mxu0 %v1008
        %v1081 = vpop.f32.mrb[0].mxu0
        %v1082 = vadd.f32 %v1001, %v1081
        %v1083 = vpop.f32.mrb[0].mxu0
        %1084 = vdwg.mxu0
        %v1085 = vld [vmem:[%s8] sm:$0xff]
        %v1086 = vld [vmem:[%s8 + $0x8] sm:$0xff]
        %v1088 = vsel %vm922, %v1085, 0
        %v1091 = vsel %vm922, %v1086, 0
        %1093 = vmatprep.subr.mxu0 0.0
        %1094 = vmatpush1.msra.mxu0 %v681
        %1095 = vmatprep.subr.mxu0 0.0
        %1096 = vmatpush1.msra.mxu0 0.0
        %1097 = vmatprep.subr.mxu0 0.0
        %1098 = vmatpush1.msra.mxu0 0.0
        %1099 = vmatprep.subr.mxu0 0.0
        %1100 = vmatpush1.msra.mxu0 0.0
        %1101 = vmatprep.subr.mxu0 0.0
        %1102 = vmatpush1.msra.mxu0 0.0
        %1103 = vmatprep.subr.mxu0 0.0
        %1104 = vmatpush1.msra.mxu0 0.0
        %1105 = vmatprep.subr.mxu0 0.0
        %1106 = vmatpush1.msra.mxu0 0.0
        %1107 = vmatprep.subr.mxu0 0.0
        %1108 = vmatpush1.msra.mxu0 0.0
        %1109 = vmatprep.subr.mxu0 0.0
        %1110 = vmatpush1.msra.mxu0 0.0
        %1111 = vmatprep.subr.mxu0 0.0
        %1112 = vmatpush1.msra.mxu0 0.0
        %1113 = vmatprep.subr.mxu0 0.0
        %1114 = vmatpush1.msra.mxu0 0.0
        %1115 = vmatprep.subr.mxu0 0.0
        %1116 = vmatpush1.msra.mxu0 0.0
        %1117 = vmatprep.subr.mxu0 0.0
        %1118 = vmatpush1.msra.mxu0 0.0
        %1119 = vmatprep.subr.mxu0 0.0
        %1120 = vmatpush1.msra.mxu0 0.0
        %1121 = vmatprep.subr.mxu0 0.0
        %1122 = vmatpush1.msra.mxu0 0.0
        %1123 = vmatprep.subr.mxu0 0.0
        %1124 = vmatpush1.msra.mxu0 0.0
        %1125 = vmatprep.subr.mxu0 0.0
        %1126 = vmatpush1.msra.mxu0 0.0
        %1127 = vmatprep.subr.mxu0 0.0
        %1128 = vmatpush1.msra.mxu0 0.0
        %1129 = vmatprep.subr.mxu0 0.0
        %1130 = vmatpush1.msra.mxu0 0.0
        %1131 = vmatprep.subr.mxu0 0.0
        %1132 = vmatpush1.msra.mxu0 0.0
        %1133 = vmatprep.subr.mxu0 0.0
        %1134 = vmatpush1.msra.mxu0 0.0
        %1135 = vmatprep.subr.mxu0 0.0
        %1136 = vmatpush1.msra.mxu0 0.0
        %1137 = vmatprep.subr.mxu0 0.0
        %1138 = vmatpush1.msra.mxu0 0.0
        %1139 = vmatprep.subr.mxu0 0.0
        %1140 = vmatpush1.msra.mxu0 0.0
        %1141 = vmatprep.subr.mxu0 0.0
        %1142 = vmatpush1.msra.mxu0 0.0
        %1143 = vmatprep.subr.mxu0 0.0
        %1144 = vmatpush1.msra.mxu0 0.0
        %1145 = vmatprep.subr.mxu0 0.0
        %1146 = vmatpush1.msra.mxu0 0.0
        %1147 = vmatprep.subr.mxu0 0.0
        %1148 = vmatpush1.msra.mxu0 0.0
        %1149 = vmatprep.subr.mxu0 0.0
        %1150 = vmatpush1.msra.mxu0 0.0
        %1151 = vmatprep.subr.mxu0 0.0
        %1152 = vmatpush1.msra.mxu0 0.0
        %1153 = vmatprep.subr.mxu0 0.0
        %1154 = vmatpush1.msra.mxu0 0.0
        %1155 = vmatprep.subr.mxu0 0.0
        %1156 = vmatpush1.msra.mxu0 0.0
        %1157 = vmatprep.mubr.f32.mxu0 0.0
        %1158 = vmatmul.mubr.f32.gmra.mrb[0].mxu0 %v1088
        %v1159 = vpop.f32.mrb[0].mxu0
        %v1160 = vadd.f32 0.0, %v1159
        %v1161 = vpop.f32.mrb[0].mxu0
        %1162 = vmatprep.mubr.f32.mxu0 0.0
        %1163 = vmatmul.mubr.f32.gmra.mrb[0].mxu0 %v1091
        %v1164 = vpop.f32.mrb[0].mxu0
        %v1165 = vadd.f32 0.0, %v1164
        %v1166 = vpop.f32.mrb[0].mxu0
        %1167 = vdwg.mxu0
        %v1168 = vadd.f32 %v1077, %v1160
        %v1169 = vadd.f32 %v1082, %v1165
        %v1170 = vld [vmem:[%s9] sm:$0xff]
        %v1171 = vld [vmem:[%s9 + $0x8] sm:$0xff]
        %1173 = vset.pattern.permute.xlu0 0
        %1174 = vperm.xlu0 %1173, %v1170
        %v1175 = vpop.permute.xlu0 %1174
        %1178 = vset.pattern.permute.xlu0 0
        %1179 = vperm.xlu0 %1178, %v1171
        %v1180 = vpop.permute.xlu0 %1179
        %v1182 = vadd.f32 %v1168, %v1175
        %v1183 = vadd.f32 %v1169, %v1180
        %v1184 = vmax.f32 %v1182, 0.0
        %v1185 = vmax.f32 %v1183, 0.0
        %1186 = vmatprep.subr.mxu0 0.0
        %1187 = vmatpush1.msra.mxu0 %v762
        %1188 = vmatprep.subr.mxu0 0.0
        %1189 = vmatpush1.msra.mxu0 %v763
        %1190 = vmatprep.subr.mxu0 0.0
        %1191 = vmatpush1.msra.mxu0 %v764
        %1192 = vmatprep.subr.mxu0 0.0
        %1193 = vmatpush1.msra.mxu0 %v765
        %1194 = vmatprep.subr.mxu0 0.0
        %1195 = vmatpush1.msra.mxu0 %v766
        %1196 = vmatprep.subr.mxu0 0.0
        %1197 = vmatpush1.msra.mxu0 %v767
        %1198 = vmatprep.subr.mxu0 0.0
        %1199 = vmatpush1.msra.mxu0 %v768
        %1200 = vmatprep.subr.mxu0 0.0
        %1201 = vmatpush1.msra.mxu0 %v769
        %1202 = vmatprep.subr.mxu0 0.0
        %1203 = vmatpush1.msra.mxu0 %v770
        %1204 = vmatprep.subr.mxu0 0.0
        %1205 = vmatpush1.msra.mxu0 %v771
        %1206 = vmatprep.subr.mxu0 0.0
        %1207 = vmatpush1.msra.mxu0 %v772
        %1208 = vmatprep.subr.mxu0 0.0
        %1209 = vmatpush1.msra.mxu0 %v773
        %1210 = vmatprep.subr.mxu0 0.0
        %1211 = vmatpush1.msra.mxu0 %v774
        %1212 = vmatprep.subr.mxu0 0.0
        %1213 = vmatpush1.msra.mxu0 %v775
        %1214 = vmatprep.subr.mxu0 0.0
        %1215 = vmatpush1.msra.mxu0 %v776
        %1216 = vmatprep.subr.mxu0 0.0
        %1217 = vmatpush1.msra.mxu0 %v777
        %1218 = vmatprep.subr.mxu0 0.0
        %1219 = vmatpush1.msra.mxu0 0.0
        %1220 = vmatprep.subr.mxu0 0.0
        %1221 = vmatpush1.msra.mxu0 0.0
        %1222 = vmatprep.subr.mxu0 0.0
        %1223 = vmatpush1.msra.mxu0 0.0
        %1224 = vmatprep.subr.mxu0 0.0
        %1225 = vmatpush1.msra.mxu0 0.0
        %1226 = vmatprep.subr.mxu0 0.0
        %1227 = vmatpush1.msra.mxu0 0.0
        %1228 = vmatprep.subr.mxu0 0.0
        %1229 = vmatpush1.msra.mxu0 0.0
        %1230 = vmatprep.subr.mxu0 0.0
        %1231 = vmatpush1.msra.mxu0 0.0
        %1232 = vmatprep.subr.mxu0 0.0
        %1233 = vmatpush1.msra.mxu0 0.0
        %1234 = vmatprep.subr.mxu0 0.0
        %1235 = vmatpush1.msra.mxu0 0.0
        %1236 = vmatprep.subr.mxu0 0.0
        %1237 = vmatpush1.msra.mxu0 0.0
        %1238 = vmatprep.subr.mxu0 0.0
        %1239 = vmatpush1.msra.mxu0 0.0
        %1240 = vmatprep.subr.mxu0 0.0
        %1241 = vmatpush1.msra.mxu0 0.0
        %1242 = vmatprep.subr.mxu0 0.0
        %1243 = vmatpush1.msra.mxu0 0.0
        %1244 = vmatprep.subr.mxu0 0.0
        %1245 = vmatpush1.msra.mxu0 0.0
        %1246 = vmatprep.subr.mxu0 0.0
        %1247 = vmatpush1.msra.mxu0 0.0
        %1248 = vmatprep.subr.mxu0 0.0
        %1249 = vmatpush1.msra.mxu0 0.0
        %1250 = vmatprep.mubr.f32.mxu0 0.0
        %1251 = vmatmul.mubr.f32.gmra.mrb[0].mxu0 %v1184
        %v1252 = vpop.f32.mrb[0].mxu0
        %v1253 = vadd.f32 0.0, %v1252
        %v1254 = vpop.f32.mrb[0].mxu0
        %1255 = vmatprep.mubr.f32.mxu0 0.0
        %1256 = vmatmul.mubr.f32.gmra.mrb[0].mxu0 %v1185
        %v1257 = vpop.f32.mrb[0].mxu0
        %v1258 = vadd.f32 0.0, %v1257
        %v1259 = vpop.f32.mrb[0].mxu0
        %1260 = vdwg.mxu0
        %v1261 = vld [vmem:[%s10] sm:$0xff]
        %v1262 = vld [vmem:[%s10 + $0x8] sm:$0xff]
        %v1263 = vld [vmem:[%s11] sm:$0xff]
        %v1264 = vld [vmem:[%s11 + $0x8] sm:$0xff]
        %v1266 = vsel %vm922, %v1263, 0
        %v1269 = vsel %vm922, %v1264, 0
        %1271 = vmatprep.subr.mxu0 0.0
        %1272 = vmatpush1.msra.mxu0 %v680
        %1273 = vmatprep.subr.mxu0 0.0
        %1274 = vmatpush1.msra.mxu0 0.0
        %1275 = vmatprep.subr.mxu0 0.0
        %1276 = vmatpush1.msra.mxu0 0.0
        %1277 = vmatprep.subr.mxu0 0.0
        %1278 = vmatpush1.msra.mxu0 0.0
        %1279 = vmatprep.subr.mxu0 0.0
        %1280 = vmatpush1.msra.mxu0 0.0
        %1281 = vmatprep.subr.mxu0 0.0
        %1282 = vmatpush1.msra.mxu0 0.0
        %1283 = vmatprep.subr.mxu0 0.0
        %1284 = vmatpush1.msra.mxu0 0.0
        %1285 = vmatprep.subr.mxu0 0.0
        %1286 = vmatpush1.msra.mxu0 0.0
        %1287 = vmatprep.subr.mxu0 0.0
        %1288 = vmatpush1.msra.mxu0 0.0
        %1289 = vmatprep.subr.mxu0 0.0
        %1290 = vmatpush1.msra.mxu0 0.0
        %1291 = vmatprep.subr.mxu0 0.0
        %1292 = vmatpush1.msra.mxu0 0.0
        %1293 = vmatprep.subr.mxu0 0.0
        %1294 = vmatpush1.msra.mxu0 0.0
        %1295 = vmatprep.subr.mxu0 0.0
        %1296 = vmatpush1.msra.mxu0 0.0
        %1297 = vmatprep.subr.mxu0 0.0
        %1298 = vmatpush1.msra.mxu0 0.0
        %1299 = vmatprep.subr.mxu0 0.0
        %1300 = vmatpush1.msra.mxu0 0.0
        %1301 = vmatprep.subr.mxu0 0.0
        %1302 = vmatpush1.msra.mxu0 0.0
        %1303 = vmatprep.subr.mxu0 0.0
        %1304 = vmatpush1.msra.mxu0 0.0
        %1305 = vmatprep.subr.mxu0 0.0
        %1306 = vmatpush1.msra.mxu0 0.0
        %1307 = vmatprep.subr.mxu0 0.0
        %1308 = vmatpush1.msra.mxu0 0.0
        %1309 = vmatprep.subr.mxu0 0.0
        %1310 = vmatpush1.msra.mxu0 0.0
        %1311 = vmatprep.subr.mxu0 0.0
        %1312 = vmatpush1.msra.mxu0 0.0
        %1313 = vmatprep.subr.mxu0 0.0
        %1314 = vmatpush1.msra.mxu0 0.0
        %1315 = vmatprep.subr.mxu0 0.0
        %1316 = vmatpush1.msra.mxu0 0.0
        %1317 = vmatprep.subr.mxu0 0.0
        %1318 = vmatpush1.msra.mxu0 0.0
        %1319 = vmatprep.subr.mxu0 0.0
        %1320 = vmatpush1.msra.mxu0 0.0
        %1321 = vmatprep.subr.mxu0 0.0
        %1322 = vmatpush1.msra.mxu0 0.0
        %1323 = vmatprep.subr.mxu0 0.0
        %1324 = vmatpush1.msra.mxu0 0.0
        %1325 = vmatprep.subr.mxu0 0.0
        %1326 = vmatpush1.msra.mxu0 0.0
        %1327 = vmatprep.subr.mxu0 0.0
        %1328 = vmatpush1.msra.mxu0 0.0
        %1329 = vmatprep.subr.mxu0 0.0
        %1330 = vmatpush1.msra.mxu0 0.0
        %1331 = vmatprep.subr.mxu0 0.0
        %1332 = vmatpush1.msra.mxu0 0.0
        %1333 = vmatprep.subr.mxu0 0.0
        %1334 = vmatpush1.msra.mxu0 0.0
        %1335 = vmatprep.mubr.f32.mxu0 0.0
        %1336 = vmatmul.mubr.f32.gmra.mrb[0].mxu0 %v1266
        %v1337 = vpop.f32.mrb[0].mxu0
        %v1338 = vadd.f32 0.0, %v1337
        %v1339 = vpop.f32.mrb[0].mxu0
        %1340 = vmatprep.mubr.f32.mxu0 0.0
        %1341 = vmatmul.mubr.f32.gmra.mrb[0].mxu0 %v1269
        %v1342 = vpop.f32.mrb[0].mxu0
        %v1343 = vadd.f32 0.0, %v1342
        %v1344 = vpop.f32.mrb[0].mxu0
        %1345 = vdwg.mxu0
        %v1347 = vsel %vm922, %v1261, 0
        %v1350 = vsel %vm922, %v1262, 0
        %1352 = vmatprep.subr.mxu0 0.0
        %1353 = vmatpush1.msra.mxu0 %v679
        %1354 = vmatprep.subr.mxu0 0.0
        %1355 = vmatpush1.msra.mxu0 0.0
        %1356 = vmatprep.subr.mxu0 0.0
        %1357 = vmatpush1.msra.mxu0 0.0
        %1358 = vmatprep.subr.mxu0 0.0
        %1359 = vmatpush1.msra.mxu0 0.0
        %1360 = vmatprep.subr.mxu0 0.0
        %1361 = vmatpush1.msra.mxu0 0.0
        %1362 = vmatprep.subr.mxu0 0.0
        %1363 = vmatpush1.msra.mxu0 0.0
        %1364 = vmatprep.subr.mxu0 0.0
        %1365 = vmatpush1.msra.mxu0 0.0
        %1366 = vmatprep.subr.mxu0 0.0
        %1367 = vmatpush1.msra.mxu0 0.0
        %1368 = vmatprep.subr.mxu0 0.0
        %1369 = vmatpush1.msra.mxu0 0.0
        %1370 = vmatprep.subr.mxu0 0.0
        %1371 = vmatpush1.msra.mxu0 0.0
        %1372 = vmatprep.subr.mxu0 0.0
        %1373 = vmatpush1.msra.mxu0 0.0
        %1374 = vmatprep.subr.mxu0 0.0
        %1375 = vmatpush1.msra.mxu0 0.0
        %1376 = vmatprep.subr.mxu0 0.0
        %1377 = vmatpush1.msra.mxu0 0.0
        %1378 = vmatprep.subr.mxu0 0.0
        %1379 = vmatpush1.msra.mxu0 0.0
        %1380 = vmatprep.subr.mxu0 0.0
        %1381 = vmatpush1.msra.mxu0 0.0
        %1382 = vmatprep.subr.mxu0 0.0
        %1383 = vmatpush1.msra.mxu0 0.0
        %1384 = vmatprep.subr.mxu0 0.0
        %1385 = vmatpush1.msra.mxu0 0.0
        %1386 = vmatprep.subr.mxu0 0.0
        %1387 = vmatpush1.msra.mxu0 0.0
        %1388 = vmatprep.subr.mxu0 0.0
        %1389 = vmatpush1.msra.mxu0 0.0
        %1390 = vmatprep.subr.mxu0 0.0
        %1391 = vmatpush1.msra.mxu0 0.0
        %1392 = vmatprep.subr.mxu0 0.0
        %1393 = vmatpush1.msra.mxu0 0.0
        %1394 = vmatprep.subr.mxu0 0.0
        %1395 = vmatpush1.msra.mxu0 0.0
        %1396 = vmatprep.subr.mxu0 0.0
        %1397 = vmatpush1.msra.mxu0 0.0
        %1398 = vmatprep.subr.mxu0 0.0
        %1399 = vmatpush1.msra.mxu0 0.0
        %1400 = vmatprep.subr.mxu0 0.0
        %1401 = vmatpush1.msra.mxu0 0.0
        %1402 = vmatprep.subr.mxu0 0.0
        %1403 = vmatpush1.msra.mxu0 0.0
        %1404 = vmatprep.subr.mxu0 0.0
        %1405 = vmatpush1.msra.mxu0 0.0
        %1406 = vmatprep.subr.mxu0 0.0
        %1407 = vmatpush1.msra.mxu0 0.0
        %1408 = vmatprep.subr.mxu0 0.0
        %1409 = vmatpush1.msra.mxu0 0.0
        %1410 = vmatprep.subr.mxu0 0.0
        %1411 = vmatpush1.msra.mxu0 0.0
        %1412 = vmatprep.subr.mxu0 0.0
        %1413 = vmatpush1.msra.mxu0 0.0
        %1414 = vmatprep.subr.mxu0 0.0
        %1415 = vmatpush1.msra.mxu0 0.0
        %1416 = vmatprep.mubr.f32.mxu0 0.0
        %1417 = vmatmul.mubr.f32.gmra.mrb[0].mxu0 %v1347
        %v1418 = vpop.f32.mrb[0].mxu0
        %v1419 = vadd.f32 %v1338, %v1418
        %v1420 = vpop.f32.mrb[0].mxu0
        %1421 = vmatprep.mubr.f32.mxu0 0.0
        %1422 = vmatmul.mubr.f32.gmra.mrb[0].mxu0 %v1350
        %v1423 = vpop.f32.mrb[0].mxu0
        %v1424 = vadd.f32 %v1343, %v1423
        %v1425 = vpop.f32.mrb[0].mxu0
        %1426 = vdwg.mxu0
        %v1427 = vld [vmem:[%s12] sm:$0xff]
        %v1428 = vld [vmem:[%s12 + $0x8] sm:$0xff]
        %vm1429 = vcmask 130048
        %v1431 = vsel %vm1429, %v1427, 0
        %v1434 = vsel %vm1429, %v1428, 0
        %1436 = vmatprep.subr.mxu0 0.0
        %1437 = vmatpush1.msra.mxu0 %v1253
        %1438 = vmatprep.subr.mxu0 0.0
        %1439 = vmatpush1.msra.mxu0 %v1258
        %1440 = vmatprep.subr.mxu0 0.0
        %1441 = vmatpush1.msra.mxu0 0.0
        %1442 = vmatprep.subr.mxu0 0.0
        %1443 = vmatpush1.msra.mxu0 0.0
        %1444 = vmatprep.subr.mxu0 0.0
        %1445 = vmatpush1.msra.mxu0 0.0
        %1446 = vmatprep.subr.mxu0 0.0
        %1447 = vmatpush1.msra.mxu0 0.0
        %1448 = vmatprep.subr.mxu0 0.0
        %1449 = vmatpush1.msra.mxu0 0.0
        %1450 = vmatprep.subr.mxu0 0.0
        %1451 = vmatpush1.msra.mxu0 0.0
        %1452 = vmatprep.subr.mxu0 0.0
        %1453 = vmatpush1.msra.mxu0 0.0
        %1454 = vmatprep.subr.mxu0 0.0
        %1455 = vmatpush1.msra.mxu0 0.0
        %1456 = vmatprep.subr.mxu0 0.0
        %1457 = vmatpush1.msra.mxu0 0.0
        %1458 = vmatprep.subr.mxu0 0.0
        %1459 = vmatpush1.msra.mxu0 0.0
        %1460 = vmatprep.subr.mxu0 0.0
        %1461 = vmatpush1.msra.mxu0 0.0
        %1462 = vmatprep.subr.mxu0 0.0
        %1463 = vmatpush1.msra.mxu0 0.0
        %1464 = vmatprep.subr.mxu0 0.0
        %1465 = vmatpush1.msra.mxu0 0.0
        %1466 = vmatprep.subr.mxu0 0.0
        %1467 = vmatpush1.msra.mxu0 0.0
        %1468 = vmatprep.subr.mxu0 0.0
        %1469 = vmatpush1.msra.mxu0 0.0
        %1470 = vmatprep.subr.mxu0 0.0
        %1471 = vmatpush1.msra.mxu0 0.0
        %1472 = vmatprep.subr.mxu0 0.0
        %1473 = vmatpush1.msra.mxu0 0.0
        %1474 = vmatprep.subr.mxu0 0.0
        %1475 = vmatpush1.msra.mxu0 0.0
        %1476 = vmatprep.subr.mxu0 0.0
        %1477 = vmatpush1.msra.mxu0 0.0
        %1478 = vmatprep.subr.mxu0 0.0
        %1479 = vmatpush1.msra.mxu0 0.0
        %1480 = vmatprep.subr.mxu0 0.0
        %1481 = vmatpush1.msra.mxu0 0.0
        %1482 = vmatprep.subr.mxu0 0.0
        %1483 = vmatpush1.msra.mxu0 0.0
        %1484 = vmatprep.subr.mxu0 0.0
        %1485 = vmatpush1.msra.mxu0 0.0
        %1486 = vmatprep.subr.mxu0 0.0
        %1487 = vmatpush1.msra.mxu0 0.0
        %1488 = vmatprep.subr.mxu0 0.0
        %1489 = vmatpush1.msra.mxu0 0.0
        %1490 = vmatprep.subr.mxu0 0.0
        %1491 = vmatpush1.msra.mxu0 0.0
        %1492 = vmatprep.subr.mxu0 0.0
        %1493 = vmatpush1.msra.mxu0 0.0
        %1494 = vmatprep.subr.mxu0 0.0
        %1495 = vmatpush1.msra.mxu0 0.0
        %1496 = vmatprep.subr.mxu0 0.0
        %1497 = vmatpush1.msra.mxu0 0.0
        %1498 = vmatprep.subr.mxu0 0.0
        %1499 = vmatpush1.msra.mxu0 0.0
        %1500 = vmatprep.mubr.f32.mxu0 0.0
        %1501 = vmatmul.mubr.f32.gmra.mrb[0].mxu0 %v1431
        %v1502 = vpop.f32.mrb[0].mxu0
        %v1503 = vadd.f32 0.0, %v1502
        %v1504 = vpop.f32.mrb[0].mxu0
        %1505 = vmatprep.mubr.f32.mxu0 0.0
        %1506 = vmatmul.mubr.f32.gmra.mrb[0].mxu0 %v1434
        %v1507 = vpop.f32.mrb[0].mxu0
        %v1508 = vadd.f32 0.0, %v1507
        %v1509 = vpop.f32.mrb[0].mxu0
        %1510 = vdwg.mxu0
        %v1511 = vadd.f32 %v1419, %v1503
        %v1512 = vadd.f32 %v1424, %v1508
        %v1513 = vld [vmem:[%s13] sm:$0xff]
        %v1514 = vld [vmem:[%s13 + $0x8] sm:$0xff]
        %1516 = vset.pattern.permute.xlu0 0
        %1517 = vperm.xlu0 %1516, %v1513
        %v1518 = vpop.permute.xlu0 %1517
        %1521 = vset.pattern.permute.xlu0 0
        %1522 = vperm.xlu0 %1521, %v1514
        %v1523 = vpop.permute.xlu0 %1522
        %v1525 = vadd.f32 %v1511, %v1518
        %v1526 = vadd.f32 %v1512, %v1523
        %v1527 = vmax.f32 %v1525, 0.0
        %v1528 = vmax.f32 %v1526, 0.0
        %v1529 = vld [vmem:[%s15] sm:$0x1]
        %v1530 = vld [vmem:[#allocation2] sm:$0xff]
        %v1531 = vld [vmem:[#allocation2 + $0x8] sm:$0xff]
        %v1532 = vld [vmem:[#allocation2 + $0x10] sm:$0xff]
        %v1533 = vld [vmem:[#allocation2 + $0x18] sm:$0xff]
        %v1534 = vld [vmem:[#allocation2 + $0x20] sm:$0xff]
        %v1535 = vld [vmem:[#allocation2 + $0x28] sm:$0xff]
        %v1536 = vld [vmem:[#allocation2 + $0x30] sm:$0xff]
        %v1537 = vld [vmem:[#allocation2 + $0x38] sm:$0xff]
        %v1538 = vld [vmem:[#allocation2 + $0x40] sm:$0xff]
        %v1539 = vld [vmem:[#allocation2 + $0x48] sm:$0xff]
        %v1540 = vld [vmem:[#allocation2 + $0x50] sm:$0xff]
        %v1541 = vld [vmem:[#allocation2 + $0x58] sm:$0xff]
        %v1542 = vld [vmem:[#allocation2 + $0x60] sm:$0xff]
        %v1543 = vld [vmem:[#allocation2 + $0x68] sm:$0xff]
        %v1544 = vld [vmem:[#allocation2 + $0x70] sm:$0xff]
        %v1545 = vld [vmem:[#allocation2 + $0x78] sm:$0xff]
        %1546 = vmatprep.subr.mxu0 0.0
        %1547 = vmatpush1.msra.mxu0 %v1530
        %1548 = vmatprep.subr.mxu0 0.0
        %1549 = vmatpush1.msra.mxu0 %v1531
        %1550 = vmatprep.subr.mxu0 0.0
        %1551 = vmatpush1.msra.mxu0 %v1532
        %1552 = vmatprep.subr.mxu0 0.0
        %1553 = vmatpush1.msra.mxu0 %v1533
        %1554 = vmatprep.subr.mxu0 0.0
        %1555 = vmatpush1.msra.mxu0 %v1534
        %1556 = vmatprep.subr.mxu0 0.0
        %1557 = vmatpush1.msra.mxu0 %v1535
        %1558 = vmatprep.subr.mxu0 0.0
        %1559 = vmatpush1.msra.mxu0 %v1536
        %1560 = vmatprep.subr.mxu0 0.0
        %1561 = vmatpush1.msra.mxu0 %v1537
        %1562 = vmatprep.subr.mxu0 0.0
        %1563 = vmatpush1.msra.mxu0 %v1538
        %1564 = vmatprep.subr.mxu0 0.0
        %1565 = vmatpush1.msra.mxu0 %v1539
        %1566 = vmatprep.subr.mxu0 0.0
        %1567 = vmatpush1.msra.mxu0 %v1540
        %1568 = vmatprep.subr.mxu0 0.0
        %1569 = vmatpush1.msra.mxu0 %v1541
        %1570 = vmatprep.subr.mxu0 0.0
        %1571 = vmatpush1.msra.mxu0 %v1542
        %1572 = vmatprep.subr.mxu0 0.0
        %1573 = vmatpush1.msra.mxu0 %v1543
        %1574 = vmatprep.subr.mxu0 0.0
        %1575 = vmatpush1.msra.mxu0 %v1544
        %1576 = vmatprep.subr.mxu0 0.0
        %1577 = vmatpush1.msra.mxu0 %v1545
        %1578 = vmatprep.subr.mxu0 0.0
        %1579 = vmatpush1.msra.mxu0 0.0
        %1580 = vmatprep.subr.mxu0 0.0
        %1581 = vmatpush1.msra.mxu0 0.0
        %1582 = vmatprep.subr.mxu0 0.0
        %1583 = vmatpush1.msra.mxu0 0.0
        %1584 = vmatprep.subr.mxu0 0.0
        %1585 = vmatpush1.msra.mxu0 0.0
        %1586 = vmatprep.subr.mxu0 0.0
        %1587 = vmatpush1.msra.mxu0 0.0
        %1588 = vmatprep.subr.mxu0 0.0
        %1589 = vmatpush1.msra.mxu0 0.0
        %1590 = vmatprep.subr.mxu0 0.0
        %1591 = vmatpush1.msra.mxu0 0.0
        %1592 = vmatprep.subr.mxu0 0.0
        %1593 = vmatpush1.msra.mxu0 0.0
        %1594 = vmatprep.subr.mxu0 0.0
        %1595 = vmatpush1.msra.mxu0 0.0
        %1596 = vmatprep.subr.mxu0 0.0
        %1597 = vmatpush1.msra.mxu0 0.0
        %1598 = vmatprep.subr.mxu0 0.0
        %1599 = vmatpush1.msra.mxu0 0.0
        %1600 = vmatprep.subr.mxu0 0.0
        %1601 = vmatpush1.msra.mxu0 0.0
        %1602 = vmatprep.subr.mxu0 0.0
        %1603 = vmatpush1.msra.mxu0 0.0
        %1604 = vmatprep.subr.mxu0 0.0
        %1605 = vmatpush1.msra.mxu0 0.0
        %1606 = vmatprep.subr.mxu0 0.0
        %1607 = vmatpush1.msra.mxu0 0.0
        %1608 = vmatprep.subr.mxu0 0.0
        %1609 = vmatpush1.msra.mxu0 0.0
        %1610 = vmatprep.mubr.f32.mxu0 0.0
        %1611 = vmatmul.mubr.f32.gmra.mrb[0].mxu0 %v1527
        %v1612 = vpop.f32.mrb[0].mxu0
        %v1613 = vadd.f32 0.0, %v1612
        %v1614 = vpop.f32.mrb[0].mxu0
        %1615 = vdwg.mxu0
        %v1616 = vadd.f32 %v1529, %v1613
        %s1617 = scalar_lea.vmem [#allocation2], 128
        %v1618 = vld [vmem:[%s1617] sm:$0xff]
        %v1619 = vld [vmem:[%s1617 + $0x8] sm:$0xff]
        %v1620 = vld [vmem:[%s1617 + $0x10] sm:$0xff]
        %v1621 = vld [vmem:[%s1617 + $0x18] sm:$0xff]
        %v1622 = vld [vmem:[%s1617 + $0x20] sm:$0xff]
        %v1623 = vld [vmem:[%s1617 + $0x28] sm:$0xff]
        %v1624 = vld [vmem:[%s1617 + $0x30] sm:$0xff]
        %v1625 = vld [vmem:[%s1617 + $0x38] sm:$0xff]
        %v1626 = vld [vmem:[%s1617 + $0x40] sm:$0xff]
        %v1627 = vld [vmem:[%s1617 + $0x48] sm:$0xff]
        %v1628 = vld [vmem:[%s1617 + $0x50] sm:$0xff]
        %v1629 = vld [vmem:[%s1617 + $0x58] sm:$0xff]
        %v1630 = vld [vmem:[%s1617 + $0x60] sm:$0xff]
        %v1631 = vld [vmem:[%s1617 + $0x68] sm:$0xff]
        %v1632 = vld [vmem:[%s1617 + $0x70] sm:$0xff]
        %v1633 = vld [vmem:[%s1617 + $0x78] sm:$0xff]
        %v1635 = vrot.slane %v1527, 1
        %1637 = vmatprep.subr.mxu0 0.0
        %1638 = vmatpush1.msra.mxu0 %v1618
        %1639 = vmatprep.subr.mxu0 0.0
        %1640 = vmatpush1.msra.mxu0 %v1619
        %1641 = vmatprep.subr.mxu0 0.0
        %1642 = vmatpush1.msra.mxu0 %v1620
        %1643 = vmatprep.subr.mxu0 0.0
        %1644 = vmatpush1.msra.mxu0 %v1621
        %1645 = vmatprep.subr.mxu0 0.0
        %1646 = vmatpush1.msra.mxu0 %v1622
        %1647 = vmatprep.subr.mxu0 0.0
        %1648 = vmatpush1.msra.mxu0 %v1623
        %1649 = vmatprep.subr.mxu0 0.0
        %1650 = vmatpush1.msra.mxu0 %v1624
        %1651 = vmatprep.subr.mxu0 0.0
        %1652 = vmatpush1.msra.mxu0 %v1625
        %1653 = vmatprep.subr.mxu0 0.0
        %1654 = vmatpush1.msra.mxu0 %v1626
        %1655 = vmatprep.subr.mxu0 0.0
        %1656 = vmatpush1.msra.mxu0 %v1627
        %1657 = vmatprep.subr.mxu0 0.0
        %1658 = vmatpush1.msra.mxu0 %v1628
        %1659 = vmatprep.subr.mxu0 0.0
        %1660 = vmatpush1.msra.mxu0 %v1629
        %1661 = vmatprep.subr.mxu0 0.0
        %1662 = vmatpush1.msra.mxu0 %v1630
        %1663 = vmatprep.subr.mxu0 0.0
        %1664 = vmatpush1.msra.mxu0 %v1631
        %1665 = vmatprep.subr.mxu0 0.0
        %1666 = vmatpush1.msra.mxu0 %v1632
        %1667 = vmatprep.subr.mxu0 0.0
        %1668 = vmatpush1.msra.mxu0 %v1633
        %1669 = vmatprep.subr.mxu0 0.0
        %1670 = vmatpush1.msra.mxu0 0.0
        %1671 = vmatprep.subr.mxu0 0.0
        %1672 = vmatpush1.msra.mxu0 0.0
        %1673 = vmatprep.subr.mxu0 0.0
        %1674 = vmatpush1.msra.mxu0 0.0
        %1675 = vmatprep.subr.mxu0 0.0
        %1676 = vmatpush1.msra.mxu0 0.0
        %1677 = vmatprep.subr.mxu0 0.0
        %1678 = vmatpush1.msra.mxu0 0.0
        %1679 = vmatprep.subr.mxu0 0.0
        %1680 = vmatpush1.msra.mxu0 0.0
        %1681 = vmatprep.subr.mxu0 0.0
        %1682 = vmatpush1.msra.mxu0 0.0
        %1683 = vmatprep.subr.mxu0 0.0
        %1684 = vmatpush1.msra.mxu0 0.0
        %1685 = vmatprep.subr.mxu0 0.0
        %1686 = vmatpush1.msra.mxu0 0.0
        %1687 = vmatprep.subr.mxu0 0.0
        %1688 = vmatpush1.msra.mxu0 0.0
        %1689 = vmatprep.subr.mxu0 0.0
        %1690 = vmatpush1.msra.mxu0 0.0
        %1691 = vmatprep.subr.mxu0 0.0
        %1692 = vmatpush1.msra.mxu0 0.0
        %1693 = vmatprep.subr.mxu0 0.0
        %1694 = vmatpush1.msra.mxu0 0.0
        %1695 = vmatprep.subr.mxu0 0.0
        %1696 = vmatpush1.msra.mxu0 0.0
        %1697 = vmatprep.subr.mxu0 0.0
        %1698 = vmatpush1.msra.mxu0 0.0
        %1699 = vmatprep.subr.mxu0 0.0
        %1700 = vmatpush1.msra.mxu0 0.0
        %1701 = vmatprep.mubr.f32.mxu0 0.0
        %1702 = vmatmul.mubr.f32.gmra.mrb[0].mxu0 %v1635
        %v1703 = vpop.f32.mrb[0].mxu0
        %v1704 = vadd.f32 0.0, %v1703
        %v1705 = vpop.f32.mrb[0].mxu0
        %1706 = vdwg.mxu0
        %v1707 = vadd.f32 %v1616, %v1704
        %s1708 = scalar_lea.vmem [#allocation2], 256
        %v1709 = vld [vmem:[%s1708] sm:$0xff]
        %v1710 = vld [vmem:[%s1708 + $0x8] sm:$0xff]
        %v1711 = vld [vmem:[%s1708 + $0x10] sm:$0xff]
        %v1712 = vld [vmem:[%s1708 + $0x18] sm:$0xff]
        %v1713 = vld [vmem:[%s1708 + $0x20] sm:$0xff]
        %v1714 = vld [vmem:[%s1708 + $0x28] sm:$0xff]
        %v1715 = vld [vmem:[%s1708 + $0x30] sm:$0xff]
        %v1716 = vld [vmem:[%s1708 + $0x38] sm:$0xff]
        %v1717 = vld [vmem:[%s1708 + $0x40] sm:$0xff]
        %v1718 = vld [vmem:[%s1708 + $0x48] sm:$0xff]
        %v1719 = vld [vmem:[%s1708 + $0x50] sm:$0xff]
        %v1720 = vld [vmem:[%s1708 + $0x58] sm:$0xff]
        %v1721 = vld [vmem:[%s1708 + $0x60] sm:$0xff]
        %v1722 = vld [vmem:[%s1708 + $0x68] sm:$0xff]
        %v1723 = vld [vmem:[%s1708 + $0x70] sm:$0xff]
        %v1724 = vld [vmem:[%s1708 + $0x78] sm:$0xff]
        %v1725 = vrot.slane %v1527, 2
        %1727 = vmatprep.subr.mxu0 0.0
        %1728 = vmatpush1.msra.mxu0 %v1709
        %1729 = vmatprep.subr.mxu0 0.0
        %1730 = vmatpush1.msra.mxu0 %v1710
        %1731 = vmatprep.subr.mxu0 0.0
        %1732 = vmatpush1.msra.mxu0 %v1711
        %1733 = vmatprep.subr.mxu0 0.0
        %1734 = vmatpush1.msra.mxu0 %v1712
        %1735 = vmatprep.subr.mxu0 0.0
        %1736 = vmatpush1.msra.mxu0 %v1713
        %1737 = vmatprep.subr.mxu0 0.0
        %1738 = vmatpush1.msra.mxu0 %v1714
        %1739 = vmatprep.subr.mxu0 0.0
        %1740 = vmatpush1.msra.mxu0 %v1715
        %1741 = vmatprep.subr.mxu0 0.0
        %1742 = vmatpush1.msra.mxu0 %v1716
        %1743 = vmatprep.subr.mxu0 0.0
        %1744 = vmatpush1.msra.mxu0 %v1717
        %1745 = vmatprep.subr.mxu0 0.0
        %1746 = vmatpush1.msra.mxu0 %v1718
        %1747 = vmatprep.subr.mxu0 0.0
        %1748 = vmatpush1.msra.mxu0 %v1719
        %1749 = vmatprep.subr.mxu0 0.0
        %1750 = vmatpush1.msra.mxu0 %v1720
        %1751 = vmatprep.subr.mxu0 0.0
        %1752 = vmatpush1.msra.mxu0 %v1721
        %1753 = vmatprep.subr.mxu0 0.0
        %1754 = vmatpush1.msra.mxu0 %v1722
        %1755 = vmatprep.subr.mxu0 0.0
        %1756 = vmatpush1.msra.mxu0 %v1723
        %1757 = vmatprep.subr.mxu0 0.0
        %1758 = vmatpush1.msra.mxu0 %v1724
        %1759 = vmatprep.subr.mxu0 0.0
        %1760 = vmatpush1.msra.mxu0 0.0
        %1761 = vmatprep.subr.mxu0 0.0
        %1762 = vmatpush1.msra.mxu0 0.0
        %1763 = vmatprep.subr.mxu0 0.0
        %1764 = vmatpush1.msra.mxu0 0.0
        %1765 = vmatprep.subr.mxu0 0.0
        %1766 = vmatpush1.msra.mxu0 0.0
        %1767 = vmatprep.subr.mxu0 0.0
        %1768 = vmatpush1.msra.mxu0 0.0
        %1769 = vmatprep.subr.mxu0 0.0
        %1770 = vmatpush1.msra.mxu0 0.0
        %1771 = vmatprep.subr.mxu0 0.0
        %1772 = vmatpush1.msra.mxu0 0.0
        %1773 = vmatprep.subr.mxu0 0.0
        %1774 = vmatpush1.msra.mxu0 0.0
        %1775 = vmatprep.subr.mxu0 0.0
        %1776 = vmatpush1.msra.mxu0 0.0
        %1777 = vmatprep.subr.mxu0 0.0
        %1778 = vmatpush1.msra.mxu0 0.0
        %1779 = vmatprep.subr.mxu0 0.0
        %1780 = vmatpush1.msra.mxu0 0.0
        %1781 = vmatprep.subr.mxu0 0.0
        %1782 = vmatpush1.msra.mxu0 0.0
        %1783 = vmatprep.subr.mxu0 0.0
        %1784 = vmatpush1.msra.mxu0 0.0
        %1785 = vmatprep.subr.mxu0 0.0
        %1786 = vmatpush1.msra.mxu0 0.0
        %1787 = vmatprep.subr.mxu0 0.0
        %1788 = vmatpush1.msra.mxu0 0.0
        %1789 = vmatprep.subr.mxu0 0.0
        %1790 = vmatpush1.msra.mxu0 0.0
        %1791 = vmatprep.mubr.f32.mxu0 0.0
        %1792 = vmatmul.mubr.f32.gmra.mrb[0].mxu0 %v1725
        %v1793 = vpop.f32.mrb[0].mxu0
        %v1794 = vadd.f32 0.0, %v1793
        %v1795 = vpop.f32.mrb[0].mxu0
        %1796 = vdwg.mxu0
        %v1797 = vadd.f32 %v1707, %v1794
        %s1798 = scalar_lea.vmem [#allocation2], 384
        %v1799 = vld [vmem:[%s1798] sm:$0xff]
        %v1800 = vld [vmem:[%s1798 + $0x8] sm:$0xff]
        %v1801 = vld [vmem:[%s1798 + $0x10] sm:$0xff]
        %v1802 = vld [vmem:[%s1798 + $0x18] sm:$0xff]
        %v1803 = vld [vmem:[%s1798 + $0x20] sm:$0xff]
        %v1804 = vld [vmem:[%s1798 + $0x28] sm:$0xff]
        %v1805 = vld [vmem:[%s1798 + $0x30] sm:$0xff]
        %v1806 = vld [vmem:[%s1798 + $0x38] sm:$0xff]
        %v1807 = vld [vmem:[%s1798 + $0x40] sm:$0xff]
        %v1808 = vld [vmem:[%s1798 + $0x48] sm:$0xff]
        %v1809 = vld [vmem:[%s1798 + $0x50] sm:$0xff]
        %v1810 = vld [vmem:[%s1798 + $0x58] sm:$0xff]
        %v1811 = vld [vmem:[%s1798 + $0x60] sm:$0xff]
        %v1812 = vld [vmem:[%s1798 + $0x68] sm:$0xff]
        %v1813 = vld [vmem:[%s1798 + $0x70] sm:$0xff]
        %v1814 = vld [vmem:[%s1798 + $0x78] sm:$0xff]
        %v1815 = vrot.slane %v1527, 3
        %1817 = vmatprep.subr.mxu0 0.0
        %1818 = vmatpush1.msra.mxu0 %v1799
        %1819 = vmatprep.subr.mxu0 0.0
        %1820 = vmatpush1.msra.mxu0 %v1800
        %1821 = vmatprep.subr.mxu0 0.0
        %1822 = vmatpush1.msra.mxu0 %v1801
        %1823 = vmatprep.subr.mxu0 0.0
        %1824 = vmatpush1.msra.mxu0 %v1802
        %1825 = vmatprep.subr.mxu0 0.0
        %1826 = vmatpush1.msra.mxu0 %v1803
        %1827 = vmatprep.subr.mxu0 0.0
        %1828 = vmatpush1.msra.mxu0 %v1804
        %1829 = vmatprep.subr.mxu0 0.0
        %1830 = vmatpush1.msra.mxu0 %v1805
        %1831 = vmatprep.subr.mxu0 0.0
        %1832 = vmatpush1.msra.mxu0 %v1806
        %1833 = vmatprep.subr.mxu0 0.0
        %1834 = vmatpush1.msra.mxu0 %v1807
        %1835 = vmatprep.subr.mxu0 0.0
        %1836 = vmatpush1.msra.mxu0 %v1808
        %1837 = vmatprep.subr.mxu0 0.0
        %1838 = vmatpush1.msra.mxu0 %v1809
        %1839 = vmatprep.subr.mxu0 0.0
        %1840 = vmatpush1.msra.mxu0 %v1810
        %1841 = vmatprep.subr.mxu0 0.0
        %1842 = vmatpush1.msra.mxu0 %v1811
        %1843 = vmatprep.subr.mxu0 0.0
        %1844 = vmatpush1.msra.mxu0 %v1812
        %1845 = vmatprep.subr.mxu0 0.0
        %1846 = vmatpush1.msra.mxu0 %v1813
        %1847 = vmatprep.subr.mxu0 0.0
        %1848 = vmatpush1.msra.mxu0 %v1814
        %1849 = vmatprep.subr.mxu0 0.0
        %1850 = vmatpush1.msra.mxu0 0.0
        %1851 = vmatprep.subr.mxu0 0.0
        %1852 = vmatpush1.msra.mxu0 0.0
        %1853 = vmatprep.subr.mxu0 0.0
        %1854 = vmatpush1.msra.mxu0 0.0
        %1855 = vmatprep.subr.mxu0 0.0
        %1856 = vmatpush1.msra.mxu0 0.0
        %1857 = vmatprep.subr.mxu0 0.0
        %1858 = vmatpush1.msra.mxu0 0.0
        %1859 = vmatprep.subr.mxu0 0.0
        %1860 = vmatpush1.msra.mxu0 0.0
        %1861 = vmatprep.subr.mxu0 0.0
        %1862 = vmatpush1.msra.mxu0 0.0
        %1863 = vmatprep.subr.mxu0 0.0
        %1864 = vmatpush1.msra.mxu0 0.0
        %1865 = vmatprep.subr.mxu0 0.0
        %1866 = vmatpush1.msra.mxu0 0.0
        %1867 = vmatprep.subr.mxu0 0.0
        %1868 = vmatpush1.msra.mxu0 0.0
        %1869 = vmatprep.subr.mxu0 0.0
        %1870 = vmatpush1.msra.mxu0 0.0
        %1871 = vmatprep.subr.mxu0 0.0
        %1872 = vmatpush1.msra.mxu0 0.0
        %1873 = vmatprep.subr.mxu0 0.0
        %1874 = vmatpush1.msra.mxu0 0.0
        %1875 = vmatprep.subr.mxu0 0.0
        %1876 = vmatpush1.msra.mxu0 0.0
        %1877 = vmatprep.subr.mxu0 0.0
        %1878 = vmatpush1.msra.mxu0 0.0
        %1879 = vmatprep.subr.mxu0 0.0
        %1880 = vmatpush1.msra.mxu0 0.0
        %1881 = vmatprep.mubr.f32.mxu0 0.0
        %1882 = vmatmul.mubr.f32.gmra.mrb[0].mxu0 %v1815
        %v1883 = vpop.f32.mrb[0].mxu0
        %v1884 = vadd.f32 0.0, %v1883
        %v1885 = vpop.f32.mrb[0].mxu0
        %1886 = vdwg.mxu0
        %v1887 = vadd.f32 %v1797, %v1884
        %s1888 = scalar_lea.vmem [#allocation2], 512
        %v1889 = vld [vmem:[%s1888] sm:$0xff]
        %v1890 = vld [vmem:[%s1888 + $0x8] sm:$0xff]
        %v1891 = vld [vmem:[%s1888 + $0x10] sm:$0xff]
        %v1892 = vld [vmem:[%s1888 + $0x18] sm:$0xff]
        %v1893 = vld [vmem:[%s1888 + $0x20] sm:$0xff]
        %v1894 = vld [vmem:[%s1888 + $0x28] sm:$0xff]
        %v1895 = vld [vmem:[%s1888 + $0x30] sm:$0xff]
        %v1896 = vld [vmem:[%s1888 + $0x38] sm:$0xff]
        %v1897 = vld [vmem:[%s1888 + $0x40] sm:$0xff]
        %v1898 = vld [vmem:[%s1888 + $0x48] sm:$0xff]
        %v1899 = vld [vmem:[%s1888 + $0x50] sm:$0xff]
        %v1900 = vld [vmem:[%s1888 + $0x58] sm:$0xff]
        %v1901 = vld [vmem:[%s1888 + $0x60] sm:$0xff]
        %v1902 = vld [vmem:[%s1888 + $0x68] sm:$0xff]
        %v1903 = vld [vmem:[%s1888 + $0x70] sm:$0xff]
        %v1904 = vld [vmem:[%s1888 + $0x78] sm:$0xff]
        %v1905 = vrot.slane %v1527, 4
        %1907 = vmatprep.subr.mxu0 0.0
        %1908 = vmatpush1.msra.mxu0 %v1889
        %1909 = vmatprep.subr.mxu0 0.0
        %1910 = vmatpush1.msra.mxu0 %v1890
        %1911 = vmatprep.subr.mxu0 0.0
        %1912 = vmatpush1.msra.mxu0 %v1891
        %1913 = vmatprep.subr.mxu0 0.0
        %1914 = vmatpush1.msra.mxu0 %v1892
        %1915 = vmatprep.subr.mxu0 0.0
        %1916 = vmatpush1.msra.mxu0 %v1893
        %1917 = vmatprep.subr.mxu0 0.0
        %1918 = vmatpush1.msra.mxu0 %v1894
        %1919 = vmatprep.subr.mxu0 0.0
        %1920 = vmatpush1.msra.mxu0 %v1895
        %1921 = vmatprep.subr.mxu0 0.0
        %1922 = vmatpush1.msra.mxu0 %v1896
        %1923 = vmatprep.subr.mxu0 0.0
        %1924 = vmatpush1.msra.mxu0 %v1897
        %1925 = vmatprep.subr.mxu0 0.0
        %1926 = vmatpush1.msra.mxu0 %v1898
        %1927 = vmatprep.subr.mxu0 0.0
        %1928 = vmatpush1.msra.mxu0 %v1899
        %1929 = vmatprep.subr.mxu0 0.0
        %1930 = vmatpush1.msra.mxu0 %v1900
        %1931 = vmatprep.subr.mxu0 0.0
        %1932 = vmatpush1.msra.mxu0 %v1901
        %1933 = vmatprep.subr.mxu0 0.0
        %1934 = vmatpush1.msra.mxu0 %v1902
        %1935 = vmatprep.subr.mxu0 0.0
        %1936 = vmatpush1.msra.mxu0 %v1903
        %1937 = vmatprep.subr.mxu0 0.0
        %1938 = vmatpush1.msra.mxu0 %v1904
        %1939 = vmatprep.subr.mxu0 0.0
        %1940 = vmatpush1.msra.mxu0 0.0
        %1941 = vmatprep.subr.mxu0 0.0
        %1942 = vmatpush1.msra.mxu0 0.0
        %1943 = vmatprep.subr.mxu0 0.0
        %1944 = vmatpush1.msra.mxu0 0.0
        %1945 = vmatprep.subr.mxu0 0.0
        %1946 = vmatpush1.msra.mxu0 0.0
        %1947 = vmatprep.subr.mxu0 0.0
        %1948 = vmatpush1.msra.mxu0 0.0
        %1949 = vmatprep.subr.mxu0 0.0
        %1950 = vmatpush1.msra.mxu0 0.0
        %1951 = vmatprep.subr.mxu0 0.0
        %1952 = vmatpush1.msra.mxu0 0.0
        %1953 = vmatprep.subr.mxu0 0.0
        %1954 = vmatpush1.msra.mxu0 0.0
        %1955 = vmatprep.subr.mxu0 0.0
        %1956 = vmatpush1.msra.mxu0 0.0
        %1957 = vmatprep.subr.mxu0 0.0
        %1958 = vmatpush1.msra.mxu0 0.0
        %1959 = vmatprep.subr.mxu0 0.0
        %1960 = vmatpush1.msra.mxu0 0.0
        %1961 = vmatprep.subr.mxu0 0.0
        %1962 = vmatpush1.msra.mxu0 0.0
        %1963 = vmatprep.subr.mxu0 0.0
        %1964 = vmatpush1.msra.mxu0 0.0
        %1965 = vmatprep.subr.mxu0 0.0
        %1966 = vmatpush1.msra.mxu0 0.0
        %1967 = vmatprep.subr.mxu0 0.0
        %1968 = vmatpush1.msra.mxu0 0.0
        %1969 = vmatprep.subr.mxu0 0.0
        %1970 = vmatpush1.msra.mxu0 0.0
        %1971 = vmatprep.mubr.f32.mxu0 0.0
        %1972 = vmatmul.mubr.f32.gmra.mrb[0].mxu0 %v1905
        %v1973 = vpop.f32.mrb[0].mxu0
        %v1974 = vadd.f32 0.0, %v1973
        %v1975 = vpop.f32.mrb[0].mxu0
        %1976 = vdwg.mxu0
        %v1977 = vadd.f32 %v1887, %v1974
        %s1978 = scalar_lea.vmem [#allocation2], 640
        %v1979 = vld [vmem:[%s1978] sm:$0xff]
        %v1980 = vld [vmem:[%s1978 + $0x8] sm:$0xff]
        %v1981 = vld [vmem:[%s1978 + $0x10] sm:$0xff]
        %v1982 = vld [vmem:[%s1978 + $0x18] sm:$0xff]
        %v1983 = vld [vmem:[%s1978 + $0x20] sm:$0xff]
        %v1984 = vld [vmem:[%s1978 + $0x28] sm:$0xff]
        %v1985 = vld [vmem:[%s1978 + $0x30] sm:$0xff]
        %v1986 = vld [vmem:[%s1978 + $0x38] sm:$0xff]
        %v1987 = vld [vmem:[%s1978 + $0x40] sm:$0xff]
        %v1988 = vld [vmem:[%s1978 + $0x48] sm:$0xff]
        %v1989 = vld [vmem:[%s1978 + $0x50] sm:$0xff]
        %v1990 = vld [vmem:[%s1978 + $0x58] sm:$0xff]
        %v1991 = vld [vmem:[%s1978 + $0x60] sm:$0xff]
        %v1992 = vld [vmem:[%s1978 + $0x68] sm:$0xff]
        %v1993 = vld [vmem:[%s1978 + $0x70] sm:$0xff]
        %v1994 = vld [vmem:[%s1978 + $0x78] sm:$0xff]
        %v1995 = vrot.slane %v1527, 5
        %1997 = vmatprep.subr.mxu0 0.0
        %1998 = vmatpush1.msra.mxu0 %v1979
        %1999 = vmatprep.subr.mxu0 0.0
        %2000 = vmatpush1.msra.mxu0 %v1980
        %2001 = vmatprep.subr.mxu0 0.0
        %2002 = vmatpush1.msra.mxu0 %v1981
        %2003 = vmatprep.subr.mxu0 0.0
        %2004 = vmatpush1.msra.mxu0 %v1982
        %2005 = vmatprep.subr.mxu0 0.0
        %2006 = vmatpush1.msra.mxu0 %v1983
        %2007 = vmatprep.subr.mxu0 0.0
        %2008 = vmatpush1.msra.mxu0 %v1984
        %2009 = vmatprep.subr.mxu0 0.0
        %2010 = vmatpush1.msra.mxu0 %v1985
        %2011 = vmatprep.subr.mxu0 0.0
        %2012 = vmatpush1.msra.mxu0 %v1986
        %2013 = vmatprep.subr.mxu0 0.0
        %2014 = vmatpush1.msra.mxu0 %v1987
        %2015 = vmatprep.subr.mxu0 0.0
        %2016 = vmatpush1.msra.mxu0 %v1988
        %2017 = vmatprep.subr.mxu0 0.0
        %2018 = vmatpush1.msra.mxu0 %v1989
        %2019 = vmatprep.subr.mxu0 0.0
        %2020 = vmatpush1.msra.mxu0 %v1990
        %2021 = vmatprep.subr.mxu0 0.0
        %2022 = vmatpush1.msra.mxu0 %v1991
        %2023 = vmatprep.subr.mxu0 0.0
        %2024 = vmatpush1.msra.mxu0 %v1992
        %2025 = vmatprep.subr.mxu0 0.0
        %2026 = vmatpush1.msra.mxu0 %v1993
        %2027 = vmatprep.subr.mxu0 0.0
        %2028 = vmatpush1.msra.mxu0 %v1994
        %2029 = vmatprep.subr.mxu0 0.0
        %2030 = vmatpush1.msra.mxu0 0.0
        %2031 = vmatprep.subr.mxu0 0.0
        %2032 = vmatpush1.msra.mxu0 0.0
        %2033 = vmatprep.subr.mxu0 0.0
        %2034 = vmatpush1.msra.mxu0 0.0
        %2035 = vmatprep.subr.mxu0 0.0
        %2036 = vmatpush1.msra.mxu0 0.0
        %2037 = vmatprep.subr.mxu0 0.0
        %2038 = vmatpush1.msra.mxu0 0.0
        %2039 = vmatprep.subr.mxu0 0.0
        %2040 = vmatpush1.msra.mxu0 0.0
        %2041 = vmatprep.subr.mxu0 0.0
        %2042 = vmatpush1.msra.mxu0 0.0
        %2043 = vmatprep.subr.mxu0 0.0
        %2044 = vmatpush1.msra.mxu0 0.0
        %2045 = vmatprep.subr.mxu0 0.0
        %2046 = vmatpush1.msra.mxu0 0.0
        %2047 = vmatprep.subr.mxu0 0.0
        %2048 = vmatpush1.msra.mxu0 0.0
        %2049 = vmatprep.subr.mxu0 0.0
        %2050 = vmatpush1.msra.mxu0 0.0
        %2051 = vmatprep.subr.mxu0 0.0
        %2052 = vmatpush1.msra.mxu0 0.0
        %2053 = vmatprep.subr.mxu0 0.0
        %2054 = vmatpush1.msra.mxu0 0.0
        %2055 = vmatprep.subr.mxu0 0.0
        %2056 = vmatpush1.msra.mxu0 0.0
        %2057 = vmatprep.subr.mxu0 0.0
        %2058 = vmatpush1.msra.mxu0 0.0
        %2059 = vmatprep.subr.mxu0 0.0
        %2060 = vmatpush1.msra.mxu0 0.0
        %2061 = vmatprep.mubr.f32.mxu0 0.0
        %2062 = vmatmul.mubr.f32.gmra.mrb[0].mxu0 %v1995
        %v2063 = vpop.f32.mrb[0].mxu0
        %v2064 = vadd.f32 0.0, %v2063
        %v2065 = vpop.f32.mrb[0].mxu0
        %2066 = vdwg.mxu0
        %v2067 = vadd.f32 %v1977, %v2064
        %s2068 = scalar_lea.vmem [#allocation2], 768
        %v2069 = vld [vmem:[%s2068] sm:$0xff]
        %v2070 = vld [vmem:[%s2068 + $0x8] sm:$0xff]
        %v2071 = vld [vmem:[%s2068 + $0x10] sm:$0xff]
        %v2072 = vld [vmem:[%s2068 + $0x18] sm:$0xff]
        %v2073 = vld [vmem:[%s2068 + $0x20] sm:$0xff]
        %v2074 = vld [vmem:[%s2068 + $0x28] sm:$0xff]
        %v2075 = vld [vmem:[%s2068 + $0x30] sm:$0xff]
        %v2076 = vld [vmem:[%s2068 + $0x38] sm:$0xff]
        %v2077 = vld [vmem:[%s2068 + $0x40] sm:$0xff]
        %v2078 = vld [vmem:[%s2068 + $0x48] sm:$0xff]
        %v2079 = vld [vmem:[%s2068 + $0x50] sm:$0xff]
        %v2080 = vld [vmem:[%s2068 + $0x58] sm:$0xff]
        %v2081 = vld [vmem:[%s2068 + $0x60] sm:$0xff]
        %v2082 = vld [vmem:[%s2068 + $0x68] sm:$0xff]
        %v2083 = vld [vmem:[%s2068 + $0x70] sm:$0xff]
        %v2084 = vld [vmem:[%s2068 + $0x78] sm:$0xff]
        %v2085 = vrot.slane %v1527, 6
        %2087 = vmatprep.subr.mxu0 0.0
        %2088 = vmatpush1.msra.mxu0 %v2069
        %2089 = vmatprep.subr.mxu0 0.0
        %2090 = vmatpush1.msra.mxu0 %v2070
        %2091 = vmatprep.subr.mxu0 0.0
        %2092 = vmatpush1.msra.mxu0 %v2071
        %2093 = vmatprep.subr.mxu0 0.0
        %2094 = vmatpush1.msra.mxu0 %v2072
        %2095 = vmatprep.subr.mxu0 0.0
        %2096 = vmatpush1.msra.mxu0 %v2073
        %2097 = vmatprep.subr.mxu0 0.0
        %2098 = vmatpush1.msra.mxu0 %v2074
        %2099 = vmatprep.subr.mxu0 0.0
        %2100 = vmatpush1.msra.mxu0 %v2075
        %2101 = vmatprep.subr.mxu0 0.0
        %2102 = vmatpush1.msra.mxu0 %v2076
        %2103 = vmatprep.subr.mxu0 0.0
        %2104 = vmatpush1.msra.mxu0 %v2077
        %2105 = vmatprep.subr.mxu0 0.0
        %2106 = vmatpush1.msra.mxu0 %v2078
        %2107 = vmatprep.subr.mxu0 0.0
        %2108 = vmatpush1.msra.mxu0 %v2079
        %2109 = vmatprep.subr.mxu0 0.0
        %2110 = vmatpush1.msra.mxu0 %v2080
        %2111 = vmatprep.subr.mxu0 0.0
        %2112 = vmatpush1.msra.mxu0 %v2081
        %2113 = vmatprep.subr.mxu0 0.0
        %2114 = vmatpush1.msra.mxu0 %v2082
        %2115 = vmatprep.subr.mxu0 0.0
        %2116 = vmatpush1.msra.mxu0 %v2083
        %2117 = vmatprep.subr.mxu0 0.0
        %2118 = vmatpush1.msra.mxu0 %v2084
        %2119 = vmatprep.subr.mxu0 0.0
        %2120 = vmatpush1.msra.mxu0 0.0
        %2121 = vmatprep.subr.mxu0 0.0
        %2122 = vmatpush1.msra.mxu0 0.0
        %2123 = vmatprep.subr.mxu0 0.0
        %2124 = vmatpush1.msra.mxu0 0.0
        %2125 = vmatprep.subr.mxu0 0.0
        %2126 = vmatpush1.msra.mxu0 0.0
        %2127 = vmatprep.subr.mxu0 0.0
        %2128 = vmatpush1.msra.mxu0 0.0
        %2129 = vmatprep.subr.mxu0 0.0
        %2130 = vmatpush1.msra.mxu0 0.0
        %2131 = vmatprep.subr.mxu0 0.0
        %2132 = vmatpush1.msra.mxu0 0.0
        %2133 = vmatprep.subr.mxu0 0.0
        %2134 = vmatpush1.msra.mxu0 0.0
        %2135 = vmatprep.subr.mxu0 0.0
        %2136 = vmatpush1.msra.mxu0 0.0
        %2137 = vmatprep.subr.mxu0 0.0
        %2138 = vmatpush1.msra.mxu0 0.0
        %2139 = vmatprep.subr.mxu0 0.0
        %2140 = vmatpush1.msra.mxu0 0.0
        %2141 = vmatprep.subr.mxu0 0.0
        %2142 = vmatpush1.msra.mxu0 0.0
        %2143 = vmatprep.subr.mxu0 0.0
        %2144 = vmatpush1.msra.mxu0 0.0
        %2145 = vmatprep.subr.mxu0 0.0
        %2146 = vmatpush1.msra.mxu0 0.0
        %2147 = vmatprep.subr.mxu0 0.0
        %2148 = vmatpush1.msra.mxu0 0.0
        %2149 = vmatprep.subr.mxu0 0.0
        %2150 = vmatpush1.msra.mxu0 0.0
        %2151 = vmatprep.mubr.f32.mxu0 0.0
        %2152 = vmatmul.mubr.f32.gmra.mrb[0].mxu0 %v2085
        %v2153 = vpop.f32.mrb[0].mxu0
        %v2154 = vadd.f32 0.0, %v2153
        %v2155 = vpop.f32.mrb[0].mxu0
        %2156 = vdwg.mxu0
        %v2157 = vadd.f32 %v2067, %v2154
        %s2158 = scalar_lea.vmem [#allocation2], 896
        %v2159 = vld [vmem:[%s2158] sm:$0xff]
        %v2160 = vld [vmem:[%s2158 + $0x8] sm:$0xff]
        %v2161 = vld [vmem:[%s2158 + $0x10] sm:$0xff]
        %v2162 = vld [vmem:[%s2158 + $0x18] sm:$0xff]
        %v2163 = vld [vmem:[%s2158 + $0x20] sm:$0xff]
        %v2164 = vld [vmem:[%s2158 + $0x28] sm:$0xff]
        %v2165 = vld [vmem:[%s2158 + $0x30] sm:$0xff]
        %v2166 = vld [vmem:[%s2158 + $0x38] sm:$0xff]
        %v2167 = vld [vmem:[%s2158 + $0x40] sm:$0xff]
        %v2168 = vld [vmem:[%s2158 + $0x48] sm:$0xff]
        %v2169 = vld [vmem:[%s2158 + $0x50] sm:$0xff]
        %v2170 = vld [vmem:[%s2158 + $0x58] sm:$0xff]
        %v2171 = vld [vmem:[%s2158 + $0x60] sm:$0xff]
        %v2172 = vld [vmem:[%s2158 + $0x68] sm:$0xff]
        %v2173 = vld [vmem:[%s2158 + $0x70] sm:$0xff]
        %v2174 = vld [vmem:[%s2158 + $0x78] sm:$0xff]
        %v2175 = vrot.slane %v1527, 7
        %2177 = vmatprep.subr.mxu0 0.0
        %2178 = vmatpush1.msra.mxu0 %v2159
        %2179 = vmatprep.subr.mxu0 0.0
        %2180 = vmatpush1.msra.mxu0 %v2160
        %2181 = vmatprep.subr.mxu0 0.0
        %2182 = vmatpush1.msra.mxu0 %v2161
        %2183 = vmatprep.subr.mxu0 0.0
        %2184 = vmatpush1.msra.mxu0 %v2162
        %2185 = vmatprep.subr.mxu0 0.0
        %2186 = vmatpush1.msra.mxu0 %v2163
        %2187 = vmatprep.subr.mxu0 0.0
        %2188 = vmatpush1.msra.mxu0 %v2164
        %2189 = vmatprep.subr.mxu0 0.0
        %2190 = vmatpush1.msra.mxu0 %v2165
        %2191 = vmatprep.subr.mxu0 0.0
        %2192 = vmatpush1.msra.mxu0 %v2166
        %2193 = vmatprep.subr.mxu0 0.0
        %2194 = vmatpush1.msra.mxu0 %v2167
        %2195 = vmatprep.subr.mxu0 0.0
        %2196 = vmatpush1.msra.mxu0 %v2168
        %2197 = vmatprep.subr.mxu0 0.0
        %2198 = vmatpush1.msra.mxu0 %v2169
        %2199 = vmatprep.subr.mxu0 0.0
        %2200 = vmatpush1.msra.mxu0 %v2170
        %2201 = vmatprep.subr.mxu0 0.0
        %2202 = vmatpush1.msra.mxu0 %v2171
        %2203 = vmatprep.subr.mxu0 0.0
        %2204 = vmatpush1.msra.mxu0 %v2172
        %2205 = vmatprep.subr.mxu0 0.0
        %2206 = vmatpush1.msra.mxu0 %v2173
        %2207 = vmatprep.subr.mxu0 0.0
        %2208 = vmatpush1.msra.mxu0 %v2174
        %2209 = vmatprep.subr.mxu0 0.0
        %2210 = vmatpush1.msra.mxu0 0.0
        %2211 = vmatprep.subr.mxu0 0.0
        %2212 = vmatpush1.msra.mxu0 0.0
        %2213 = vmatprep.subr.mxu0 0.0
        %2214 = vmatpush1.msra.mxu0 0.0
        %2215 = vmatprep.subr.mxu0 0.0
        %2216 = vmatpush1.msra.mxu0 0.0
        %2217 = vmatprep.subr.mxu0 0.0
        %2218 = vmatpush1.msra.mxu0 0.0
        %2219 = vmatprep.subr.mxu0 0.0
        %2220 = vmatpush1.msra.mxu0 0.0
        %2221 = vmatprep.subr.mxu0 0.0
        %2222 = vmatpush1.msra.mxu0 0.0
        %2223 = vmatprep.subr.mxu0 0.0
        %2224 = vmatpush1.msra.mxu0 0.0
        %2225 = vmatprep.subr.mxu0 0.0
        %2226 = vmatpush1.msra.mxu0 0.0
        %2227 = vmatprep.subr.mxu0 0.0
        %2228 = vmatpush1.msra.mxu0 0.0
        %2229 = vmatprep.subr.mxu0 0.0
        %2230 = vmatpush1.msra.mxu0 0.0
        %2231 = vmatprep.subr.mxu0 0.0
        %2232 = vmatpush1.msra.mxu0 0.0
        %2233 = vmatprep.subr.mxu0 0.0
        %2234 = vmatpush1.msra.mxu0 0.0
        %2235 = vmatprep.subr.mxu0 0.0
        %2236 = vmatpush1.msra.mxu0 0.0
        %2237 = vmatprep.subr.mxu0 0.0
        %2238 = vmatpush1.msra.mxu0 0.0
        %2239 = vmatprep.subr.mxu0 0.0
        %2240 = vmatpush1.msra.mxu0 0.0
        %2241 = vmatprep.mubr.f32.mxu0 0.0
        %2242 = vmatmul.mubr.f32.gmra.mrb[0].mxu0 %v2175
        %v2243 = vpop.f32.mrb[0].mxu0
        %v2244 = vadd.f32 0.0, %v2243
        %v2245 = vpop.f32.mrb[0].mxu0
        %2246 = vdwg.mxu0
        %v2247 = vadd.f32 %v2157, %v2244
        %s2248 = scalar_lea.vmem [#allocation2], 1024
        %v2249 = vld [vmem:[%s2248] sm:$0xff]
        %v2250 = vld [vmem:[%s2248 + $0x8] sm:$0xff]
        %v2251 = vld [vmem:[%s2248 + $0x10] sm:$0xff]
        %v2252 = vld [vmem:[%s2248 + $0x18] sm:$0xff]
        %v2253 = vld [vmem:[%s2248 + $0x20] sm:$0xff]
        %v2254 = vld [vmem:[%s2248 + $0x28] sm:$0xff]
        %v2255 = vld [vmem:[%s2248 + $0x30] sm:$0xff]
        %v2256 = vld [vmem:[%s2248 + $0x38] sm:$0xff]
        %v2257 = vld [vmem:[%s2248 + $0x40] sm:$0xff]
        %v2258 = vld [vmem:[%s2248 + $0x48] sm:$0xff]
        %v2259 = vld [vmem:[%s2248 + $0x50] sm:$0xff]
        %v2260 = vld [vmem:[%s2248 + $0x58] sm:$0xff]
        %v2261 = vld [vmem:[%s2248 + $0x60] sm:$0xff]
        %v2262 = vld [vmem:[%s2248 + $0x68] sm:$0xff]
        %v2263 = vld [vmem:[%s2248 + $0x70] sm:$0xff]
        %v2264 = vld [vmem:[%s2248 + $0x78] sm:$0xff]
        %2265 = vmatprep.subr.mxu0 0.0
        %2266 = vmatpush1.msra.mxu0 %v2249
        %2267 = vmatprep.subr.mxu0 0.0
        %2268 = vmatpush1.msra.mxu0 %v2250
        %2269 = vmatprep.subr.mxu0 0.0
        %2270 = vmatpush1.msra.mxu0 %v2251
        %2271 = vmatprep.subr.mxu0 0.0
        %2272 = vmatpush1.msra.mxu0 %v2252
        %2273 = vmatprep.subr.mxu0 0.0
        %2274 = vmatpush1.msra.mxu0 %v2253
        %2275 = vmatprep.subr.mxu0 0.0
        %2276 = vmatpush1.msra.mxu0 %v2254
        %2277 = vmatprep.subr.mxu0 0.0
        %2278 = vmatpush1.msra.mxu0 %v2255
        %2279 = vmatprep.subr.mxu0 0.0
        %2280 = vmatpush1.msra.mxu0 %v2256
        %2281 = vmatprep.subr.mxu0 0.0
        %2282 = vmatpush1.msra.mxu0 %v2257
        %2283 = vmatprep.subr.mxu0 0.0
        %2284 = vmatpush1.msra.mxu0 %v2258
        %2285 = vmatprep.subr.mxu0 0.0
        %2286 = vmatpush1.msra.mxu0 %v2259
        %2287 = vmatprep.subr.mxu0 0.0
        %2288 = vmatpush1.msra.mxu0 %v2260
        %2289 = vmatprep.subr.mxu0 0.0
        %2290 = vmatpush1.msra.mxu0 %v2261
        %2291 = vmatprep.subr.mxu0 0.0
        %2292 = vmatpush1.msra.mxu0 %v2262
        %2293 = vmatprep.subr.mxu0 0.0
        %2294 = vmatpush1.msra.mxu0 %v2263
        %2295 = vmatprep.subr.mxu0 0.0
        %2296 = vmatpush1.msra.mxu0 %v2264
        %2297 = vmatprep.subr.mxu0 0.0
        %2298 = vmatpush1.msra.mxu0 0.0
        %2299 = vmatprep.subr.mxu0 0.0
        %2300 = vmatpush1.msra.mxu0 0.0
        %2301 = vmatprep.subr.mxu0 0.0
        %2302 = vmatpush1.msra.mxu0 0.0
        %2303 = vmatprep.subr.mxu0 0.0
        %2304 = vmatpush1.msra.mxu0 0.0
        %2305 = vmatprep.subr.mxu0 0.0
        %2306 = vmatpush1.msra.mxu0 0.0
        %2307 = vmatprep.subr.mxu0 0.0
        %2308 = vmatpush1.msra.mxu0 0.0
        %2309 = vmatprep.subr.mxu0 0.0
        %2310 = vmatpush1.msra.mxu0 0.0
        %2311 = vmatprep.subr.mxu0 0.0
        %2312 = vmatpush1.msra.mxu0 0.0
        %2313 = vmatprep.subr.mxu0 0.0
        %2314 = vmatpush1.msra.mxu0 0.0
        %2315 = vmatprep.subr.mxu0 0.0
        %2316 = vmatpush1.msra.mxu0 0.0
        %2317 = vmatprep.subr.mxu0 0.0
        %2318 = vmatpush1.msra.mxu0 0.0
        %2319 = vmatprep.subr.mxu0 0.0
        %2320 = vmatpush1.msra.mxu0 0.0
        %2321 = vmatprep.subr.mxu0 0.0
        %2322 = vmatpush1.msra.mxu0 0.0
        %2323 = vmatprep.subr.mxu0 0.0
        %2324 = vmatpush1.msra.mxu0 0.0
        %2325 = vmatprep.subr.mxu0 0.0
        %2326 = vmatpush1.msra.mxu0 0.0
        %2327 = vmatprep.subr.mxu0 0.0
        %2328 = vmatpush1.msra.mxu0 0.0
        %2329 = vmatprep.mubr.f32.mxu0 0.0
        %2330 = vmatmul.mubr.f32.gmra.mrb[0].mxu0 %v1528
        %v2331 = vpop.f32.mrb[0].mxu0
        %v2332 = vadd.f32 0.0, %v2331
        %v2333 = vpop.f32.mrb[0].mxu0
        %2334 = vdwg.mxu0
        %v2335 = vadd.f32 %v2247, %v2332
        %s2336 = scalar_lea.vmem [#allocation2], 1152
        %v2337 = vld [vmem:[%s2336] sm:$0xff]
        %v2338 = vld [vmem:[%s2336 + $0x8] sm:$0xff]
        %v2339 = vld [vmem:[%s2336 + $0x10] sm:$0xff]
        %v2340 = vld [vmem:[%s2336 + $0x18] sm:$0xff]
        %v2341 = vld [vmem:[%s2336 + $0x20] sm:$0xff]
        %v2342 = vld [vmem:[%s2336 + $0x28] sm:$0xff]
        %v2343 = vld [vmem:[%s2336 + $0x30] sm:$0xff]
        %v2344 = vld [vmem:[%s2336 + $0x38] sm:$0xff]
        %v2345 = vld [vmem:[%s2336 + $0x40] sm:$0xff]
        %v2346 = vld [vmem:[%s2336 + $0x48] sm:$0xff]
        %v2347 = vld [vmem:[%s2336 + $0x50] sm:$0xff]
        %v2348 = vld [vmem:[%s2336 + $0x58] sm:$0xff]
        %v2349 = vld [vmem:[%s2336 + $0x60] sm:$0xff]
        %v2350 = vld [vmem:[%s2336 + $0x68] sm:$0xff]
        %v2351 = vld [vmem:[%s2336 + $0x70] sm:$0xff]
        %v2352 = vld [vmem:[%s2336 + $0x78] sm:$0xff]
        %v2354 = vrot.slane %v1528, 1
        %2356 = vmatprep.subr.mxu0 0.0
        %2357 = vmatpush1.msra.mxu0 %v2337
        %2358 = vmatprep.subr.mxu0 0.0
        %2359 = vmatpush1.msra.mxu0 %v2338
        %2360 = vmatprep.subr.mxu0 0.0
        %2361 = vmatpush1.msra.mxu0 %v2339
        %2362 = vmatprep.subr.mxu0 0.0
        %2363 = vmatpush1.msra.mxu0 %v2340
        %2364 = vmatprep.subr.mxu0 0.0
        %2365 = vmatpush1.msra.mxu0 %v2341
        %2366 = vmatprep.subr.mxu0 0.0
        %2367 = vmatpush1.msra.mxu0 %v2342
        %2368 = vmatprep.subr.mxu0 0.0
        %2369 = vmatpush1.msra.mxu0 %v2343
        %2370 = vmatprep.subr.mxu0 0.0
        %2371 = vmatpush1.msra.mxu0 %v2344
        %2372 = vmatprep.subr.mxu0 0.0
        %2373 = vmatpush1.msra.mxu0 %v2345
        %2374 = vmatprep.subr.mxu0 0.0
        %2375 = vmatpush1.msra.mxu0 %v2346
        %2376 = vmatprep.subr.mxu0 0.0
        %2377 = vmatpush1.msra.mxu0 %v2347
        %2378 = vmatprep.subr.mxu0 0.0
        %2379 = vmatpush1.msra.mxu0 %v2348
        %2380 = vmatprep.subr.mxu0 0.0
        %2381 = vmatpush1.msra.mxu0 %v2349
        %2382 = vmatprep.subr.mxu0 0.0
        %2383 = vmatpush1.msra.mxu0 %v2350
        %2384 = vmatprep.subr.mxu0 0.0
        %2385 = vmatpush1.msra.mxu0 %v2351
        %2386 = vmatprep.subr.mxu0 0.0
        %2387 = vmatpush1.msra.mxu0 %v2352
        %2388 = vmatprep.subr.mxu0 0.0
        %2389 = vmatpush1.msra.mxu0 0.0
        %2390 = vmatprep.subr.mxu0 0.0
        %2391 = vmatpush1.msra.mxu0 0.0
        %2392 = vmatprep.subr.mxu0 0.0
        %2393 = vmatpush1.msra.mxu0 0.0
        %2394 = vmatprep.subr.mxu0 0.0
        %2395 = vmatpush1.msra.mxu0 0.0
        %2396 = vmatprep.subr.mxu0 0.0
        %2397 = vmatpush1.msra.mxu0 0.0
        %2398 = vmatprep.subr.mxu0 0.0
        %2399 = vmatpush1.msra.mxu0 0.0
        %2400 = vmatprep.subr.mxu0 0.0
        %2401 = vmatpush1.msra.mxu0 0.0
        %2402 = vmatprep.subr.mxu0 0.0
        %2403 = vmatpush1.msra.mxu0 0.0
        %2404 = vmatprep.subr.mxu0 0.0
        %2405 = vmatpush1.msra.mxu0 0.0
        %2406 = vmatprep.subr.mxu0 0.0
        %2407 = vmatpush1.msra.mxu0 0.0
        %2408 = vmatprep.subr.mxu0 0.0
        %2409 = vmatpush1.msra.mxu0 0.0
        %2410 = vmatprep.subr.mxu0 0.0
        %2411 = vmatpush1.msra.mxu0 0.0
        %2412 = vmatprep.subr.mxu0 0.0
        %2413 = vmatpush1.msra.mxu0 0.0
        %2414 = vmatprep.subr.mxu0 0.0
        %2415 = vmatpush1.msra.mxu0 0.0
        %2416 = vmatprep.subr.mxu0 0.0
        %2417 = vmatpush1.msra.mxu0 0.0
        %2418 = vmatprep.subr.mxu0 0.0
        %2419 = vmatpush1.msra.mxu0 0.0
        %2420 = vmatprep.mubr.f32.mxu0 0.0
        %2421 = vmatmul.mubr.f32.gmra.mrb[0].mxu0 %v2354
        %v2422 = vpop.f32.mrb[0].mxu0
        %v2423 = vadd.f32 0.0, %v2422
        %v2424 = vpop.f32.mrb[0].mxu0
        %2425 = vdwg.mxu0
        %v2426 = vadd.f32 %v2335, %v2423
        %s2427 = scalar_lea.vmem [#allocation2], 1280
        %v2428 = vld [vmem:[%s2427] sm:$0xff]
        %v2429 = vld [vmem:[%s2427 + $0x8] sm:$0xff]
        %v2430 = vld [vmem:[%s2427 + $0x10] sm:$0xff]
        %v2431 = vld [vmem:[%s2427 + $0x18] sm:$0xff]
        %v2432 = vld [vmem:[%s2427 + $0x20] sm:$0xff]
        %v2433 = vld [vmem:[%s2427 + $0x28] sm:$0xff]
        %v2434 = vld [vmem:[%s2427 + $0x30] sm:$0xff]
        %v2435 = vld [vmem:[%s2427 + $0x38] sm:$0xff]
        %v2436 = vld [vmem:[%s2427 + $0x40] sm:$0xff]
        %v2437 = vld [vmem:[%s2427 + $0x48] sm:$0xff]
        %v2438 = vld [vmem:[%s2427 + $0x50] sm:$0xff]
        %v2439 = vld [vmem:[%s2427 + $0x58] sm:$0xff]
        %v2440 = vld [vmem:[%s2427 + $0x60] sm:$0xff]
        %v2441 = vld [vmem:[%s2427 + $0x68] sm:$0xff]
        %v2442 = vld [vmem:[%s2427 + $0x70] sm:$0xff]
        %v2443 = vld [vmem:[%s2427 + $0x78] sm:$0xff]
        %v2444 = vrot.slane %v1528, 2
        %2446 = vmatprep.subr.mxu0 0.0
        %2447 = vmatpush1.msra.mxu0 %v2428
        %2448 = vmatprep.subr.mxu0 0.0
        %2449 = vmatpush1.msra.mxu0 %v2429
        %2450 = vmatprep.subr.mxu0 0.0
        %2451 = vmatpush1.msra.mxu0 %v2430
        %2452 = vmatprep.subr.mxu0 0.0
        %2453 = vmatpush1.msra.mxu0 %v2431
        %2454 = vmatprep.subr.mxu0 0.0
        %2455 = vmatpush1.msra.mxu0 %v2432
        %2456 = vmatprep.subr.mxu0 0.0
        %2457 = vmatpush1.msra.mxu0 %v2433
        %2458 = vmatprep.subr.mxu0 0.0
        %2459 = vmatpush1.msra.mxu0 %v2434
        %2460 = vmatprep.subr.mxu0 0.0
        %2461 = vmatpush1.msra.mxu0 %v2435
        %2462 = vmatprep.subr.mxu0 0.0
        %2463 = vmatpush1.msra.mxu0 %v2436
        %2464 = vmatprep.subr.mxu0 0.0
        %2465 = vmatpush1.msra.mxu0 %v2437
        %2466 = vmatprep.subr.mxu0 0.0
        %2467 = vmatpush1.msra.mxu0 %v2438
        %2468 = vmatprep.subr.mxu0 0.0
        %2469 = vmatpush1.msra.mxu0 %v2439
        %2470 = vmatprep.subr.mxu0 0.0
        %2471 = vmatpush1.msra.mxu0 %v2440
        %2472 = vmatprep.subr.mxu0 0.0
        %2473 = vmatpush1.msra.mxu0 %v2441
        %2474 = vmatprep.subr.mxu0 0.0
        %2475 = vmatpush1.msra.mxu0 %v2442
        %2476 = vmatprep.subr.mxu0 0.0
        %2477 = vmatpush1.msra.mxu0 %v2443
        %2478 = vmatprep.subr.mxu0 0.0
        %2479 = vmatpush1.msra.mxu0 0.0
        %2480 = vmatprep.subr.mxu0 0.0
        %2481 = vmatpush1.msra.mxu0 0.0
        %2482 = vmatprep.subr.mxu0 0.0
        %2483 = vmatpush1.msra.mxu0 0.0
        %2484 = vmatprep.subr.mxu0 0.0
        %2485 = vmatpush1.msra.mxu0 0.0
        %2486 = vmatprep.subr.mxu0 0.0
        %2487 = vmatpush1.msra.mxu0 0.0
        %2488 = vmatprep.subr.mxu0 0.0
        %2489 = vmatpush1.msra.mxu0 0.0
        %2490 = vmatprep.subr.mxu0 0.0
        %2491 = vmatpush1.msra.mxu0 0.0
        %2492 = vmatprep.subr.mxu0 0.0
        %2493 = vmatpush1.msra.mxu0 0.0
        %2494 = vmatprep.subr.mxu0 0.0
        %2495 = vmatpush1.msra.mxu0 0.0
        %2496 = vmatprep.subr.mxu0 0.0
        %2497 = vmatpush1.msra.mxu0 0.0
        %2498 = vmatprep.subr.mxu0 0.0
        %2499 = vmatpush1.msra.mxu0 0.0
        %2500 = vmatprep.subr.mxu0 0.0
        %2501 = vmatpush1.msra.mxu0 0.0
        %2502 = vmatprep.subr.mxu0 0.0
        %2503 = vmatpush1.msra.mxu0 0.0
        %2504 = vmatprep.subr.mxu0 0.0
        %2505 = vmatpush1.msra.mxu0 0.0
        %2506 = vmatprep.subr.mxu0 0.0
        %2507 = vmatpush1.msra.mxu0 0.0
        %2508 = vmatprep.subr.mxu0 0.0
        %2509 = vmatpush1.msra.mxu0 0.0
        %2510 = vmatprep.mubr.f32.mxu0 0.0
        %2511 = vmatmul.mubr.f32.gmra.mrb[0].mxu0 %v2444
        %v2512 = vpop.f32.mrb[0].mxu0
        %v2513 = vadd.f32 0.0, %v2512
        %v2514 = vpop.f32.mrb[0].mxu0
        %2515 = vdwg.mxu0
        %v2516 = vadd.f32 %v2426, %v2513
        %s2517 = scalar_lea.vmem [#allocation2], 1408
        %v2518 = vld [vmem:[%s2517] sm:$0xff]
        %v2519 = vld [vmem:[%s2517 + $0x8] sm:$0xff]
        %v2520 = vld [vmem:[%s2517 + $0x10] sm:$0xff]
        %v2521 = vld [vmem:[%s2517 + $0x18] sm:$0xff]
        %v2522 = vld [vmem:[%s2517 + $0x20] sm:$0xff]
        %v2523 = vld [vmem:[%s2517 + $0x28] sm:$0xff]
        %v2524 = vld [vmem:[%s2517 + $0x30] sm:$0xff]
        %v2525 = vld [vmem:[%s2517 + $0x38] sm:$0xff]
        %v2526 = vld [vmem:[%s2517 + $0x40] sm:$0xff]
        %v2527 = vld [vmem:[%s2517 + $0x48] sm:$0xff]
        %v2528 = vld [vmem:[%s2517 + $0x50] sm:$0xff]
        %v2529 = vld [vmem:[%s2517 + $0x58] sm:$0xff]
        %v2530 = vld [vmem:[%s2517 + $0x60] sm:$0xff]
        %v2531 = vld [vmem:[%s2517 + $0x68] sm:$0xff]
        %v2532 = vld [vmem:[%s2517 + $0x70] sm:$0xff]
        %v2533 = vld [vmem:[%s2517 + $0x78] sm:$0xff]
        %v2534 = vrot.slane %v1528, 3
        %2536 = vmatprep.subr.mxu0 0.0
        %2537 = vmatpush1.msra.mxu0 %v2518
        %2538 = vmatprep.subr.mxu0 0.0
        %2539 = vmatpush1.msra.mxu0 %v2519
        %2540 = vmatprep.subr.mxu0 0.0
        %2541 = vmatpush1.msra.mxu0 %v2520
        %2542 = vmatprep.subr.mxu0 0.0
        %2543 = vmatpush1.msra.mxu0 %v2521
        %2544 = vmatprep.subr.mxu0 0.0
        %2545 = vmatpush1.msra.mxu0 %v2522
        %2546 = vmatprep.subr.mxu0 0.0
        %2547 = vmatpush1.msra.mxu0 %v2523
        %2548 = vmatprep.subr.mxu0 0.0
        %2549 = vmatpush1.msra.mxu0 %v2524
        %2550 = vmatprep.subr.mxu0 0.0
        %2551 = vmatpush1.msra.mxu0 %v2525
        %2552 = vmatprep.subr.mxu0 0.0
        %2553 = vmatpush1.msra.mxu0 %v2526
        %2554 = vmatprep.subr.mxu0 0.0
        %2555 = vmatpush1.msra.mxu0 %v2527
        %2556 = vmatprep.subr.mxu0 0.0
        %2557 = vmatpush1.msra.mxu0 %v2528
        %2558 = vmatprep.subr.mxu0 0.0
        %2559 = vmatpush1.msra.mxu0 %v2529
        %2560 = vmatprep.subr.mxu0 0.0
        %2561 = vmatpush1.msra.mxu0 %v2530
        %2562 = vmatprep.subr.mxu0 0.0
        %2563 = vmatpush1.msra.mxu0 %v2531
        %2564 = vmatprep.subr.mxu0 0.0
        %2565 = vmatpush1.msra.mxu0 %v2532
        %2566 = vmatprep.subr.mxu0 0.0
        %2567 = vmatpush1.msra.mxu0 %v2533
        %2568 = vmatprep.subr.mxu0 0.0
        %2569 = vmatpush1.msra.mxu0 0.0
        %2570 = vmatprep.subr.mxu0 0.0
        %2571 = vmatpush1.msra.mxu0 0.0
        %2572 = vmatprep.subr.mxu0 0.0
        %2573 = vmatpush1.msra.mxu0 0.0
        %2574 = vmatprep.subr.mxu0 0.0
        %2575 = vmatpush1.msra.mxu0 0.0
        %2576 = vmatprep.subr.mxu0 0.0
        %2577 = vmatpush1.msra.mxu0 0.0
        %2578 = vmatprep.subr.mxu0 0.0
        %2579 = vmatpush1.msra.mxu0 0.0
        %2580 = vmatprep.subr.mxu0 0.0
        %2581 = vmatpush1.msra.mxu0 0.0
        %2582 = vmatprep.subr.mxu0 0.0
        %2583 = vmatpush1.msra.mxu0 0.0
        %2584 = vmatprep.subr.mxu0 0.0
        %2585 = vmatpush1.msra.mxu0 0.0
        %2586 = vmatprep.subr.mxu0 0.0
        %2587 = vmatpush1.msra.mxu0 0.0
        %2588 = vmatprep.subr.mxu0 0.0
        %2589 = vmatpush1.msra.mxu0 0.0
        %2590 = vmatprep.subr.mxu0 0.0
        %2591 = vmatpush1.msra.mxu0 0.0
        %2592 = vmatprep.subr.mxu0 0.0
        %2593 = vmatpush1.msra.mxu0 0.0
        %2594 = vmatprep.subr.mxu0 0.0
        %2595 = vmatpush1.msra.mxu0 0.0
        %2596 = vmatprep.subr.mxu0 0.0
        %2597 = vmatpush1.msra.mxu0 0.0
        %2598 = vmatprep.subr.mxu0 0.0
        %2599 = vmatpush1.msra.mxu0 0.0
        %2600 = vmatprep.mubr.f32.mxu0 0.0
        %2601 = vmatmul.mubr.f32.gmra.mrb[0].mxu0 %v2534
        %v2602 = vpop.f32.mrb[0].mxu0
        %v2603 = vadd.f32 0.0, %v2602
        %v2604 = vpop.f32.mrb[0].mxu0
        %2605 = vdwg.mxu0
        %v2606 = vadd.f32 %v2516, %v2603
        %s2607 = scalar_lea.vmem [#allocation2], 1536
        %v2608 = vld [vmem:[%s2607] sm:$0xff]
        %v2609 = vld [vmem:[%s2607 + $0x8] sm:$0xff]
        %v2610 = vld [vmem:[%s2607 + $0x10] sm:$0xff]
        %v2611 = vld [vmem:[%s2607 + $0x18] sm:$0xff]
        %v2612 = vld [vmem:[%s2607 + $0x20] sm:$0xff]
        %v2613 = vld [vmem:[%s2607 + $0x28] sm:$0xff]
        %v2614 = vld [vmem:[%s2607 + $0x30] sm:$0xff]
        %v2615 = vld [vmem:[%s2607 + $0x38] sm:$0xff]
        %v2616 = vld [vmem:[%s2607 + $0x40] sm:$0xff]
        %v2617 = vld [vmem:[%s2607 + $0x48] sm:$0xff]
        %v2618 = vld [vmem:[%s2607 + $0x50] sm:$0xff]
        %v2619 = vld [vmem:[%s2607 + $0x58] sm:$0xff]
        %v2620 = vld [vmem:[%s2607 + $0x60] sm:$0xff]
        %v2621 = vld [vmem:[%s2607 + $0x68] sm:$0xff]
        %v2622 = vld [vmem:[%s2607 + $0x70] sm:$0xff]
        %v2623 = vld [vmem:[%s2607 + $0x78] sm:$0xff]
        %v2624 = vrot.slane %v1528, 4
        %2626 = vmatprep.subr.mxu0 0.0
        %2627 = vmatpush1.msra.mxu0 %v2608
        %2628 = vmatprep.subr.mxu0 0.0
        %2629 = vmatpush1.msra.mxu0 %v2609
        %2630 = vmatprep.subr.mxu0 0.0
        %2631 = vmatpush1.msra.mxu0 %v2610
        %2632 = vmatprep.subr.mxu0 0.0
        %2633 = vmatpush1.msra.mxu0 %v2611
        %2634 = vmatprep.subr.mxu0 0.0
        %2635 = vmatpush1.msra.mxu0 %v2612
        %2636 = vmatprep.subr.mxu0 0.0
        %2637 = vmatpush1.msra.mxu0 %v2613
        %2638 = vmatprep.subr.mxu0 0.0
        %2639 = vmatpush1.msra.mxu0 %v2614
        %2640 = vmatprep.subr.mxu0 0.0
        %2641 = vmatpush1.msra.mxu0 %v2615
        %2642 = vmatprep.subr.mxu0 0.0
        %2643 = vmatpush1.msra.mxu0 %v2616
        %2644 = vmatprep.subr.mxu0 0.0
        %2645 = vmatpush1.msra.mxu0 %v2617
        %2646 = vmatprep.subr.mxu0 0.0
        %2647 = vmatpush1.msra.mxu0 %v2618
        %2648 = vmatprep.subr.mxu0 0.0
        %2649 = vmatpush1.msra.mxu0 %v2619
        %2650 = vmatprep.subr.mxu0 0.0
        %2651 = vmatpush1.msra.mxu0 %v2620
        %2652 = vmatprep.subr.mxu0 0.0
        %2653 = vmatpush1.msra.mxu0 %v2621
        %2654 = vmatprep.subr.mxu0 0.0
        %2655 = vmatpush1.msra.mxu0 %v2622
        %2656 = vmatprep.subr.mxu0 0.0
        %2657 = vmatpush1.msra.mxu0 %v2623
        %2658 = vmatprep.subr.mxu0 0.0
        %2659 = vmatpush1.msra.mxu0 0.0
        %2660 = vmatprep.subr.mxu0 0.0
        %2661 = vmatpush1.msra.mxu0 0.0
        %2662 = vmatprep.subr.mxu0 0.0
        %2663 = vmatpush1.msra.mxu0 0.0
        %2664 = vmatprep.subr.mxu0 0.0
        %2665 = vmatpush1.msra.mxu0 0.0
        %2666 = vmatprep.subr.mxu0 0.0
        %2667 = vmatpush1.msra.mxu0 0.0
        %2668 = vmatprep.subr.mxu0 0.0
        %2669 = vmatpush1.msra.mxu0 0.0
        %2670 = vmatprep.subr.mxu0 0.0
        %2671 = vmatpush1.msra.mxu0 0.0
        %2672 = vmatprep.subr.mxu0 0.0
        %2673 = vmatpush1.msra.mxu0 0.0
        %2674 = vmatprep.subr.mxu0 0.0
        %2675 = vmatpush1.msra.mxu0 0.0
        %2676 = vmatprep.subr.mxu0 0.0
        %2677 = vmatpush1.msra.mxu0 0.0
        %2678 = vmatprep.subr.mxu0 0.0
        %2679 = vmatpush1.msra.mxu0 0.0
        %2680 = vmatprep.subr.mxu0 0.0
        %2681 = vmatpush1.msra.mxu0 0.0
        %2682 = vmatprep.subr.mxu0 0.0
        %2683 = vmatpush1.msra.mxu0 0.0
        %2684 = vmatprep.subr.mxu0 0.0
        %2685 = vmatpush1.msra.mxu0 0.0
        %2686 = vmatprep.subr.mxu0 0.0
        %2687 = vmatpush1.msra.mxu0 0.0
        %2688 = vmatprep.subr.mxu0 0.0
        %2689 = vmatpush1.msra.mxu0 0.0
        %2690 = vmatprep.mubr.f32.mxu0 0.0
        %2691 = vmatmul.mubr.f32.gmra.mrb[0].mxu0 %v2624
        %v2692 = vpop.f32.mrb[0].mxu0
        %v2693 = vadd.f32 0.0, %v2692
        %v2694 = vpop.f32.mrb[0].mxu0
        %2695 = vdwg.mxu0
        %v2696 = vadd.f32 %v2606, %v2693
        %s2697 = scalar_lea.vmem [#allocation2], 1664
        %v2698 = vld [vmem:[%s2697] sm:$0xff]
        %v2699 = vld [vmem:[%s2697 + $0x8] sm:$0xff]
        %v2700 = vld [vmem:[%s2697 + $0x10] sm:$0xff]
        %v2701 = vld [vmem:[%s2697 + $0x18] sm:$0xff]
        %v2702 = vld [vmem:[%s2697 + $0x20] sm:$0xff]
        %v2703 = vld [vmem:[%s2697 + $0x28] sm:$0xff]
        %v2704 = vld [vmem:[%s2697 + $0x30] sm:$0xff]
        %v2705 = vld [vmem:[%s2697 + $0x38] sm:$0xff]
        %v2706 = vld [vmem:[%s2697 + $0x40] sm:$0xff]
        %v2707 = vld [vmem:[%s2697 + $0x48] sm:$0xff]
        %v2708 = vld [vmem:[%s2697 + $0x50] sm:$0xff]
        %v2709 = vld [vmem:[%s2697 + $0x58] sm:$0xff]
        %v2710 = vld [vmem:[%s2697 + $0x60] sm:$0xff]
        %v2711 = vld [vmem:[%s2697 + $0x68] sm:$0xff]
        %v2712 = vld [vmem:[%s2697 + $0x70] sm:$0xff]
        %v2713 = vld [vmem:[%s2697 + $0x78] sm:$0xff]
        %v2714 = vrot.slane %v1528, 5
        %2716 = vmatprep.subr.mxu0 0.0
        %2717 = vmatpush1.msra.mxu0 %v2698
        %2718 = vmatprep.subr.mxu0 0.0
        %2719 = vmatpush1.msra.mxu0 %v2699
        %2720 = vmatprep.subr.mxu0 0.0
        %2721 = vmatpush1.msra.mxu0 %v2700
        %2722 = vmatprep.subr.mxu0 0.0
        %2723 = vmatpush1.msra.mxu0 %v2701
        %2724 = vmatprep.subr.mxu0 0.0
        %2725 = vmatpush1.msra.mxu0 %v2702
        %2726 = vmatprep.subr.mxu0 0.0
        %2727 = vmatpush1.msra.mxu0 %v2703
        %2728 = vmatprep.subr.mxu0 0.0
        %2729 = vmatpush1.msra.mxu0 %v2704
        %2730 = vmatprep.subr.mxu0 0.0
        %2731 = vmatpush1.msra.mxu0 %v2705
        %2732 = vmatprep.subr.mxu0 0.0
        %2733 = vmatpush1.msra.mxu0 %v2706
        %2734 = vmatprep.subr.mxu0 0.0
        %2735 = vmatpush1.msra.mxu0 %v2707
        %2736 = vmatprep.subr.mxu0 0.0
        %2737 = vmatpush1.msra.mxu0 %v2708
        %2738 = vmatprep.subr.mxu0 0.0
        %2739 = vmatpush1.msra.mxu0 %v2709
        %2740 = vmatprep.subr.mxu0 0.0
        %2741 = vmatpush1.msra.mxu0 %v2710
        %2742 = vmatprep.subr.mxu0 0.0
        %2743 = vmatpush1.msra.mxu0 %v2711
        %2744 = vmatprep.subr.mxu0 0.0
        %2745 = vmatpush1.msra.mxu0 %v2712
        %2746 = vmatprep.subr.mxu0 0.0
        %2747 = vmatpush1.msra.mxu0 %v2713
        %2748 = vmatprep.subr.mxu0 0.0
        %2749 = vmatpush1.msra.mxu0 0.0
        %2750 = vmatprep.subr.mxu0 0.0
        %2751 = vmatpush1.msra.mxu0 0.0
        %2752 = vmatprep.subr.mxu0 0.0
        %2753 = vmatpush1.msra.mxu0 0.0
        %2754 = vmatprep.subr.mxu0 0.0
        %2755 = vmatpush1.msra.mxu0 0.0
        %2756 = vmatprep.subr.mxu0 0.0
        %2757 = vmatpush1.msra.mxu0 0.0
        %2758 = vmatprep.subr.mxu0 0.0
        %2759 = vmatpush1.msra.mxu0 0.0
        %2760 = vmatprep.subr.mxu0 0.0
        %2761 = vmatpush1.msra.mxu0 0.0
        %2762 = vmatprep.subr.mxu0 0.0
        %2763 = vmatpush1.msra.mxu0 0.0
        %2764 = vmatprep.subr.mxu0 0.0
        %2765 = vmatpush1.msra.mxu0 0.0
        %2766 = vmatprep.subr.mxu0 0.0
        %2767 = vmatpush1.msra.mxu0 0.0
        %2768 = vmatprep.subr.mxu0 0.0
        %2769 = vmatpush1.msra.mxu0 0.0
        %2770 = vmatprep.subr.mxu0 0.0
        %2771 = vmatpush1.msra.mxu0 0.0
        %2772 = vmatprep.subr.mxu0 0.0
        %2773 = vmatpush1.msra.mxu0 0.0
        %2774 = vmatprep.subr.mxu0 0.0
        %2775 = vmatpush1.msra.mxu0 0.0
        %2776 = vmatprep.subr.mxu0 0.0
        %2777 = vmatpush1.msra.mxu0 0.0
        %2778 = vmatprep.subr.mxu0 0.0
        %2779 = vmatpush1.msra.mxu0 0.0
        %2780 = vmatprep.mubr.f32.mxu0 0.0
        %2781 = vmatmul.mubr.f32.gmra.mrb[0].mxu0 %v2714
        %v2782 = vpop.f32.mrb[0].mxu0
        %v2783 = vadd.f32 0.0, %v2782
        %v2784 = vpop.f32.mrb[0].mxu0
        %2785 = vdwg.mxu0
        %v2786 = vadd.f32 %v2696, %v2783
        %s2787 = scalar_lea.vmem [#allocation2], 1792
        %v2788 = vld [vmem:[%s2787] sm:$0xff]
        %v2789 = vld [vmem:[%s2787 + $0x8] sm:$0xff]
        %v2790 = vld [vmem:[%s2787 + $0x10] sm:$0xff]
        %v2791 = vld [vmem:[%s2787 + $0x18] sm:$0xff]
        %v2792 = vld [vmem:[%s2787 + $0x20] sm:$0xff]
        %v2793 = vld [vmem:[%s2787 + $0x28] sm:$0xff]
        %v2794 = vld [vmem:[%s2787 + $0x30] sm:$0xff]
        %v2795 = vld [vmem:[%s2787 + $0x38] sm:$0xff]
        %v2796 = vld [vmem:[%s2787 + $0x40] sm:$0xff]
        %v2797 = vld [vmem:[%s2787 + $0x48] sm:$0xff]
        %v2798 = vld [vmem:[%s2787 + $0x50] sm:$0xff]
        %v2799 = vld [vmem:[%s2787 + $0x58] sm:$0xff]
        %v2800 = vld [vmem:[%s2787 + $0x60] sm:$0xff]
        %v2801 = vld [vmem:[%s2787 + $0x68] sm:$0xff]
        %v2802 = vld [vmem:[%s2787 + $0x70] sm:$0xff]
        %v2803 = vld [vmem:[%s2787 + $0x78] sm:$0xff]
        %v2804 = vrot.slane %v1528, 6
        %2806 = vmatprep.subr.mxu0 0.0
        %2807 = vmatpush1.msra.mxu0 %v2788
        %2808 = vmatprep.subr.mxu0 0.0
        %2809 = vmatpush1.msra.mxu0 %v2789
        %2810 = vmatprep.subr.mxu0 0.0
        %2811 = vmatpush1.msra.mxu0 %v2790
        %2812 = vmatprep.subr.mxu0 0.0
        %2813 = vmatpush1.msra.mxu0 %v2791
        %2814 = vmatprep.subr.mxu0 0.0
        %2815 = vmatpush1.msra.mxu0 %v2792
        %2816 = vmatprep.subr.mxu0 0.0
        %2817 = vmatpush1.msra.mxu0 %v2793
        %2818 = vmatprep.subr.mxu0 0.0
        %2819 = vmatpush1.msra.mxu0 %v2794
        %2820 = vmatprep.subr.mxu0 0.0
        %2821 = vmatpush1.msra.mxu0 %v2795
        %2822 = vmatprep.subr.mxu0 0.0
        %2823 = vmatpush1.msra.mxu0 %v2796
        %2824 = vmatprep.subr.mxu0 0.0
        %2825 = vmatpush1.msra.mxu0 %v2797
        %2826 = vmatprep.subr.mxu0 0.0
        %2827 = vmatpush1.msra.mxu0 %v2798
        %2828 = vmatprep.subr.mxu0 0.0
        %2829 = vmatpush1.msra.mxu0 %v2799
        %2830 = vmatprep.subr.mxu0 0.0
        %2831 = vmatpush1.msra.mxu0 %v2800
        %2832 = vmatprep.subr.mxu0 0.0
        %2833 = vmatpush1.msra.mxu0 %v2801
        %2834 = vmatprep.subr.mxu0 0.0
        %2835 = vmatpush1.msra.mxu0 %v2802
        %2836 = vmatprep.subr.mxu0 0.0
        %2837 = vmatpush1.msra.mxu0 %v2803
        %2838 = vmatprep.subr.mxu0 0.0
        %2839 = vmatpush1.msra.mxu0 0.0
        %2840 = vmatprep.subr.mxu0 0.0
        %2841 = vmatpush1.msra.mxu0 0.0
        %2842 = vmatprep.subr.mxu0 0.0
        %2843 = vmatpush1.msra.mxu0 0.0
        %2844 = vmatprep.subr.mxu0 0.0
        %2845 = vmatpush1.msra.mxu0 0.0
        %2846 = vmatprep.subr.mxu0 0.0
        %2847 = vmatpush1.msra.mxu0 0.0
        %2848 = vmatprep.subr.mxu0 0.0
        %2849 = vmatpush1.msra.mxu0 0.0
        %2850 = vmatprep.subr.mxu0 0.0
        %2851 = vmatpush1.msra.mxu0 0.0
        %2852 = vmatprep.subr.mxu0 0.0
        %2853 = vmatpush1.msra.mxu0 0.0
        %2854 = vmatprep.subr.mxu0 0.0
        %2855 = vmatpush1.msra.mxu0 0.0
        %2856 = vmatprep.subr.mxu0 0.0
        %2857 = vmatpush1.msra.mxu0 0.0
        %2858 = vmatprep.subr.mxu0 0.0
        %2859 = vmatpush1.msra.mxu0 0.0
        %2860 = vmatprep.subr.mxu0 0.0
        %2861 = vmatpush1.msra.mxu0 0.0
        %2862 = vmatprep.subr.mxu0 0.0
        %2863 = vmatpush1.msra.mxu0 0.0
        %2864 = vmatprep.subr.mxu0 0.0
        %2865 = vmatpush1.msra.mxu0 0.0
        %2866 = vmatprep.subr.mxu0 0.0
        %2867 = vmatpush1.msra.mxu0 0.0
        %2868 = vmatprep.subr.mxu0 0.0
        %2869 = vmatpush1.msra.mxu0 0.0
        %2870 = vmatprep.mubr.f32.mxu0 0.0
        %2871 = vmatmul.mubr.f32.gmra.mrb[0].mxu0 %v2804
        %v2872 = vpop.f32.mrb[0].mxu0
        %v2873 = vadd.f32 0.0, %v2872
        %v2874 = vpop.f32.mrb[0].mxu0
        %2875 = vdwg.mxu0
        %v2876 = vadd.f32 %v2786, %v2873
        %s2877 = scalar_lea.vmem [#allocation2], 1920
        %v2878 = vld [vmem:[%s2877] sm:$0xff]
        %v2879 = vld [vmem:[%s2877 + $0x8] sm:$0xff]
        %v2880 = vld [vmem:[%s2877 + $0x10] sm:$0xff]
        %v2881 = vld [vmem:[%s2877 + $0x18] sm:$0xff]
        %v2882 = vld [vmem:[%s2877 + $0x20] sm:$0xff]
        %v2883 = vld [vmem:[%s2877 + $0x28] sm:$0xff]
        %v2884 = vld [vmem:[%s2877 + $0x30] sm:$0xff]
        %v2885 = vld [vmem:[%s2877 + $0x38] sm:$0xff]
        %v2886 = vld [vmem:[%s2877 + $0x40] sm:$0xff]
        %v2887 = vld [vmem:[%s2877 + $0x48] sm:$0xff]
        %v2888 = vld [vmem:[%s2877 + $0x50] sm:$0xff]
        %v2889 = vld [vmem:[%s2877 + $0x58] sm:$0xff]
        %v2890 = vld [vmem:[%s2877 + $0x60] sm:$0xff]
        %v2891 = vld [vmem:[%s2877 + $0x68] sm:$0xff]
        %v2892 = vld [vmem:[%s2877 + $0x70] sm:$0xff]
        %v2893 = vld [vmem:[%s2877 + $0x78] sm:$0xff]
        %v2894 = vrot.slane %v1528, 7
        %2896 = vmatprep.subr.mxu0 0.0
        %2897 = vmatpush1.msra.mxu0 %v2878
        %2898 = vmatprep.subr.mxu0 0.0
        %2899 = vmatpush1.msra.mxu0 %v2879
        %2900 = vmatprep.subr.mxu0 0.0
        %2901 = vmatpush1.msra.mxu0 %v2880
        %2902 = vmatprep.subr.mxu0 0.0
        %2903 = vmatpush1.msra.mxu0 %v2881
        %2904 = vmatprep.subr.mxu0 0.0
        %2905 = vmatpush1.msra.mxu0 %v2882
        %2906 = vmatprep.subr.mxu0 0.0
        %2907 = vmatpush1.msra.mxu0 %v2883
        %2908 = vmatprep.subr.mxu0 0.0
        %2909 = vmatpush1.msra.mxu0 %v2884
        %2910 = vmatprep.subr.mxu0 0.0
        %2911 = vmatpush1.msra.mxu0 %v2885
        %2912 = vmatprep.subr.mxu0 0.0
        %2913 = vmatpush1.msra.mxu0 %v2886
        %2914 = vmatprep.subr.mxu0 0.0
        %2915 = vmatpush1.msra.mxu0 %v2887
        %2916 = vmatprep.subr.mxu0 0.0
        %2917 = vmatpush1.msra.mxu0 %v2888
        %2918 = vmatprep.subr.mxu0 0.0
        %2919 = vmatpush1.msra.mxu0 %v2889
        %2920 = vmatprep.subr.mxu0 0.0
        %2921 = vmatpush1.msra.mxu0 %v2890
        %2922 = vmatprep.subr.mxu0 0.0
        %2923 = vmatpush1.msra.mxu0 %v2891
        %2924 = vmatprep.subr.mxu0 0.0
        %2925 = vmatpush1.msra.mxu0 %v2892
        %2926 = vmatprep.subr.mxu0 0.0
        %2927 = vmatpush1.msra.mxu0 %v2893
        %2928 = vmatprep.subr.mxu0 0.0
        %2929 = vmatpush1.msra.mxu0 0.0
        %2930 = vmatprep.subr.mxu0 0.0
        %2931 = vmatpush1.msra.mxu0 0.0
        %2932 = vmatprep.subr.mxu0 0.0
        %2933 = vmatpush1.msra.mxu0 0.0
        %2934 = vmatprep.subr.mxu0 0.0
        %2935 = vmatpush1.msra.mxu0 0.0
        %2936 = vmatprep.subr.mxu0 0.0
        %2937 = vmatpush1.msra.mxu0 0.0
        %2938 = vmatprep.subr.mxu0 0.0
        %2939 = vmatpush1.msra.mxu0 0.0
        %2940 = vmatprep.subr.mxu0 0.0
        %2941 = vmatpush1.msra.mxu0 0.0
        %2942 = vmatprep.subr.mxu0 0.0
        %2943 = vmatpush1.msra.mxu0 0.0
        %2944 = vmatprep.subr.mxu0 0.0
        %2945 = vmatpush1.msra.mxu0 0.0
        %2946 = vmatprep.subr.mxu0 0.0
        %2947 = vmatpush1.msra.mxu0 0.0
        %2948 = vmatprep.subr.mxu0 0.0
        %2949 = vmatpush1.msra.mxu0 0.0
        %2950 = vmatprep.subr.mxu0 0.0
        %2951 = vmatpush1.msra.mxu0 0.0
        %2952 = vmatprep.subr.mxu0 0.0
        %2953 = vmatpush1.msra.mxu0 0.0
        %2954 = vmatprep.subr.mxu0 0.0
        %2955 = vmatpush1.msra.mxu0 0.0
        %2956 = vmatprep.subr.mxu0 0.0
        %2957 = vmatpush1.msra.mxu0 0.0
        %2958 = vmatprep.subr.mxu0 0.0
        %2959 = vmatpush1.msra.mxu0 0.0
        %2960 = vmatprep.mubr.f32.mxu0 0.0
        %2961 = vmatmul.mubr.f32.gmra.mrb[0].mxu0 %v2894
        %v2962 = vpop.f32.mrb[0].mxu0
        %v2963 = vadd.f32 0.0, %v2962
        %v2964 = vpop.f32.mrb[0].mxu0
        %2965 = vdwg.mxu0
        %v2966 = vadd.f32 %v2876, %v2963
        %v2967 = vmax.f32 %v2966, 0.0
        %v2968 = vld [vmem:[%s16] sm:$0xff]
        %v2969 = vld [vmem:[%s16 + $0x8] sm:$0xff]
        %v2970 = vld [vmem:[%s16 + $0x10] sm:$0xff]
        %v2971 = vld [vmem:[%s16 + $0x18] sm:$0xff]
        %v2972 = vld [vmem:[%s16 + $0x20] sm:$0xff]
        %v2973 = vld [vmem:[%s16 + $0x28] sm:$0xff]
        %v2974 = vld [vmem:[%s16 + $0x30] sm:$0xff]
        %v2975 = vld [vmem:[%s16 + $0x38] sm:$0xff]
        %v2976 = vld [vmem:[%s16 + $0x40] sm:$0xff]
        %v2977 = vld [vmem:[%s16 + $0x48] sm:$0xff]
        %v2978 = vld [vmem:[%s16 + $0x50] sm:$0xff]
        %v2979 = vld [vmem:[%s16 + $0x58] sm:$0xff]
        %v2980 = vld [vmem:[%s16 + $0x60] sm:$0xff]
        %v2981 = vld [vmem:[%s16 + $0x68] sm:$0xff]
        %v2982 = vld [vmem:[%s16 + $0x70] sm:$0xff]
        %v2983 = vld [vmem:[%s16 + $0x78] sm:$0xff]
        %v2984 = vld [vmem:[%s17] sm:$0x1]
        %2985 = vmatprep.subr.mxu0 0.0
        %2986 = vmatpush1.msra.mxu0 %v2968
        %2987 = vmatprep.subr.mxu0 0.0
        %2988 = vmatpush1.msra.mxu0 %v2969
        %2989 = vmatprep.subr.mxu0 0.0
        %2990 = vmatpush1.msra.mxu0 %v2970
        %2991 = vmatprep.subr.mxu0 0.0
        %2992 = vmatpush1.msra.mxu0 %v2971
        %2993 = vmatprep.subr.mxu0 0.0
        %2994 = vmatpush1.msra.mxu0 %v2972
        %2995 = vmatprep.subr.mxu0 0.0
        %2996 = vmatpush1.msra.mxu0 %v2973
        %2997 = vmatprep.subr.mxu0 0.0
        %2998 = vmatpush1.msra.mxu0 %v2974
        %2999 = vmatprep.subr.mxu0 0.0
        %3000 = vmatpush1.msra.mxu0 %v2975
        %3001 = vmatprep.subr.mxu0 0.0
        %3002 = vmatpush1.msra.mxu0 %v2976
        %3003 = vmatprep.subr.mxu0 0.0
        %3004 = vmatpush1.msra.mxu0 %v2977
        %3005 = vmatprep.subr.mxu0 0.0
        %3006 = vmatpush1.msra.mxu0 %v2978
        %3007 = vmatprep.subr.mxu0 0.0
        %3008 = vmatpush1.msra.mxu0 %v2979
        %3009 = vmatprep.subr.mxu0 0.0
        %3010 = vmatpush1.msra.mxu0 %v2980
        %3011 = vmatprep.subr.mxu0 0.0
        %3012 = vmatpush1.msra.mxu0 %v2981
        %3013 = vmatprep.subr.mxu0 0.0
        %3014 = vmatpush1.msra.mxu0 %v2982
        %3015 = vmatprep.subr.mxu0 0.0
        %3016 = vmatpush1.msra.mxu0 %v2983
        %3017 = vmatprep.subr.mxu0 0.0
        %3018 = vmatpush1.msra.mxu0 0.0
        %3019 = vmatprep.subr.mxu0 0.0
        %3020 = vmatpush1.msra.mxu0 0.0
        %3021 = vmatprep.subr.mxu0 0.0
        %3022 = vmatpush1.msra.mxu0 0.0
        %3023 = vmatprep.subr.mxu0 0.0
        %3024 = vmatpush1.msra.mxu0 0.0
        %3025 = vmatprep.subr.mxu0 0.0
        %3026 = vmatpush1.msra.mxu0 0.0
        %3027 = vmatprep.subr.mxu0 0.0
        %3028 = vmatpush1.msra.mxu0 0.0
        %3029 = vmatprep.subr.mxu0 0.0
        %3030 = vmatpush1.msra.mxu0 0.0
        %3031 = vmatprep.subr.mxu0 0.0
        %3032 = vmatpush1.msra.mxu0 0.0
        %3033 = vmatprep.subr.mxu0 0.0
        %3034 = vmatpush1.msra.mxu0 0.0
        %3035 = vmatprep.subr.mxu0 0.0
        %3036 = vmatpush1.msra.mxu0 0.0
        %3037 = vmatprep.subr.mxu0 0.0
        %3038 = vmatpush1.msra.mxu0 0.0
        %3039 = vmatprep.subr.mxu0 0.0
        %3040 = vmatpush1.msra.mxu0 0.0
        %3041 = vmatprep.subr.mxu0 0.0
        %3042 = vmatpush1.msra.mxu0 0.0
        %3043 = vmatprep.subr.mxu0 0.0
        %3044 = vmatpush1.msra.mxu0 0.0
        %3045 = vmatprep.subr.mxu0 0.0
        %3046 = vmatpush1.msra.mxu0 0.0
        %3047 = vmatprep.subr.mxu0 0.0
        %3048 = vmatpush1.msra.mxu0 0.0
        %3049 = vmatprep.mubr.f32.mxu0 0.0
        %3050 = vmatmul.mubr.f32.gmra.mrb[0].mxu0 %v2967
        %v3051 = vpop.f32.mrb[0].mxu0
        %v3052 = vadd.f32 %v2984, %v3051
        %v3053 = vpop.f32.mrb[0].mxu0
        %3054 = vdwg.mxu0
        %vm3055 = vcmask 73728
        %v3056 = vsel %vm3055, %v3052, -inf
        %3057 = vmax.xlane.f32.xlu0 %v3056
        %v3058 = vpop.xlane.xlu0 %3057
        %v3059 = vsub.f32 %v3052, %v3058
        %v3060 = vmul.f32 %v3059, 1.442695
        %v3061 = vpow.pop %v3060
        %v3062 = vsel %vm3055, %v3061, 0.0
        %3063 = vadd.xlane.f32.xlu0 %v3062
        %v3064 = vpop.xlane.xlu0 %3063
        %v3065 = vlog2.pop %v3064
        %v3066 = vmul.f32 %v3065, 0.6931472
        %v3067 = vsub.f32 %v3059, %v3066
        %3068 = vst.msk [vmem:[%s651] sm:$0x1] %vm3055, %v3067
        %s3069 = sand.u32 %s449, 1
        %s3070 = scalar_lea.sflag [#allocation4], %s3069
        %s3071 = sand.u32 %s449, 1
        %s3072 = scalar_lea.vmem [#allocation5], %s3071
        // Predicated region
        $region97: #{interaction_network_forward.1} parent=91 // pred_check
          %p3073 = pneg %p459
        $region98: #{interaction_network_forward.1} parent=91 // pred_check_branch
          %3075 = sbr.rel (%p3073) target = $region100
        $region99: #{interaction_network_forward.1} parent=91 // pred_region
          %s3077 = ssub.s32 16, 16
          %3078 = vsyncadd %s3070, %s3077
          %s3079 = smul.addr %s33, 16
          %s3080 = scalar_lea.hbm %s18, %s3079
          %s3082 = sshll.u32 %s3072, 4
          %s3083 = int_to_ptr.vmem [resolvable:$true] %s3082
          %3085 = dma.vmem_to_hbm [thread:$0]  %s3083, 16, %s3080, %s3070
        $region100: #{interaction_network_forward.1} parent=91 // pred_fallthru
          _
      $region92: #{interaction_network_forward.1} parent=5 // pred_fallthru
        _
      %p3086 = scmp.le.s32.totalorder 2, %s28
      // Predicated region
      $region101: #{interaction_network_forward.1} parent=5 // pred_check
        %p3087 = pneg %p3086
      $region102: #{interaction_network_forward.1} parent=5 // pred_check_branch
        %3089 = sbr.rel (%p3087) target = $region104
      $region103: #{interaction_network_forward.1} parent=5 // pred_region
        %s3090 = ssub.s32 %s28, 2
        // Predicated region
        $region105: #{interaction_network_forward.1} parent=103 // pred_check
          %p3091 = pneg %p465
        $region106: #{interaction_network_forward.1} parent=103 // pred_check_branch
          %3093 = sbr.rel (%p3091) target = $region108
        $region107: #{interaction_network_forward.1} parent=103 // pred_region
          %s3094 = sand.u32 %s450, 1
          %s3095 = scalar_lea.sflag [#allocation4], %s3094
          %s3096 = sand.u32 %s450, 1
          %s3097 = scalar_lea.vmem [#allocation5], %s3096
          %3098 = dma.done %s3095, 16
        $region108: #{interaction_network_forward.1} parent=103 // pred_fallthru
          _
      $region104: #{interaction_network_forward.1} parent=5 // pred_fallthru
        _
    $region6: #{interaction_network_forward.1} parent=1 // loop_footer
      %s32 = sadd.s32 1, %s28
    $region7: #{interaction_network_forward.1} parent=1 // loop_footer_branch
      %27 = sbr.rel target = $region3
    $region8: #{interaction_network_forward.1} parent=1 // loop_exit
      _
    %3099 = vsyncpa [#allocation3], 1
    %s3100 = scalar_lea.sflag [#allocation3], 1
    %3101 = vsyncpa %s3100, 1
    %3102 = vsyncpa [#allocation4], 1
    %s3103 = scalar_lea.sflag [#allocation4], 1
    %3104 = vsyncpa %s3103, 1

</llo_original>
